<compile_context>
chip_gen: v7x
topology: tpu7x:2x2x1
jax: 0.10.0
libtpu: 0.0.40
codegen_flags: <defaults>
</compile_context>

<pallas_src>
import functools

import jax
import jax.numpy as jnp
from jax.experimental import pallas as pl
from jax.experimental.pallas import tpu as pltpu


SPANS = (3, 6, 9)   # TDNN2 [-2, 1] -> 3, TDNN3 [-3, 3] -> 6, TDNN4 [-7, 2] -> 9

# weight-slab indices: all (hid, hid) bf16 matrices
(_W_FC1, _W_R1A, _W_R1B, _W_R2A, _W_R2B, _W_R3A, _W_R3B,
 _W_R4A, _W_R4B, _W_BNF, _W_WS1) = range(11)
# bias-slab rows: all (hid,) f32 vectors (ResBlock fc2-bias and residual bias pre-summed)
(_B_FC1, _B_R1A, _B_R1B, _B_T2, _B_R2A, _B_R2B, _B_T3, _B_R3A, _B_R3B,
 _B_T4, _B_R4A, _B_R4B, _B_BNF, _B_BNW) = range(14)


# ---------------------------- fused Pallas kernel ----------------------------

def _time_sync_fused_kernel(x_ref, w_ref, tw_ref, b_ref, ws2_ref, bnw_ref,
                            out_ref, a_ref, *, spans):
    f32 = jnp.float32
    bf16 = jnp.bfloat16

    bsz, slot, kpad = x_ref.shape
    heads, t_final = a_ref.shape[1], a_ref.shape[2]
    hid = w_ref.shape[2]
    rows = bsz * slot

    def bias(k):
        return b_ref[k:k + 1, :]                        # (1, hid) f32, static slice

    def mm(a_bf16, w):
        return jnp.dot(a_bf16, w, preferred_element_type=f32)

    def res_block(h, wk, bk):
        # relu(fc2(relu(fc1(h))) + h + bias); fc2 bias and ResBlock bias pre-summed.
        u = jnp.maximum(mm(h.astype(bf16), w_ref[wk]) + bias(bk), 0.0)
        o = mm(u.astype(bf16), w_ref[wk + 1]) + bias(bk + 1) + h
        # TODO(synk): nn.Dropout(p=0.5) treated as identity (eval-mode semantics).
        return jnp.maximum(o, 0.0)

    def tdnn_relu(h, tk, bk, span):
        # Both context taps fused along N: one (rows,hid)x(hid,2*hid) matmul, split at
        # lane hid (tile-aligned, free); the second tap's output is shifted by a
        # sublane roll on the XLU instead of a VMEM copy.  Rolled rows that wrap across
        # slot boundaries land only in each slot's invalid tail (valid prefix shrinks by
        # `span`), so contamination is never read by later stages.
        yz = mm(h.astype(bf16), tw_ref[tk])             # (rows, 2*hid) f32
        y = yz[:, :hid]
        z = yz[:, hid:]
        z_shift = pltpu.roll(z, shift=rows - span, axis=0)   # == roll by -span
        return jnp.maximum(y + z_shift + bias(bk), 0.0)

    # -------------------- trunk: flat (rows, hid) activations --------------------
    x = x_ref[...].reshape(rows, kpad)                  # bf16, layout-free collapse

    h = jnp.maximum(mm(x, w_ref[_W_FC1]) + bias(_B_FC1), 0.0)        # fc1 + relu
    h = res_block(h, _W_R1A, _B_R1A)
    h = tdnn_relu(h, 0, _B_T2, spans[0])
    h = res_block(h, _W_R2A, _B_R2A)
    h = tdnn_relu(h, 1, _B_T3, spans[1])
    h = res_block(h, _W_R3A, _B_R3A)
    h = tdnn_relu(h, 2, _B_T4, spans[2])
    h = res_block(h, _W_R4A, _B_R4A)

    hm = mm(h.astype(bf16), w_ref[_W_BNF]) + bias(_B_BNF)            # bn_frame, f32
    u = jnp.tanh(mm(hm.astype(bf16), w_ref[_W_WS1]))                 # (rows, hid) f32
    s = jnp.dot(u.astype(bf16), ws2_ref[...],
                preferred_element_type=f32)                          # (rows, heads)

    # ------------- attention + bn_window: fully batched epilogue -------------
    s3 = s.reshape(bsz, slot, heads)[:, :t_final, :]     # valid prefix per slot
    sT = jnp.swapaxes(s3, 1, 2)                          # (B, heads, t_final)
    sT = sT - jnp.max(sT, axis=-1, keepdims=True)
    e = jnp.exp(sT)
    attn = e / jnp.sum(e, axis=-1, keepdims=True)        # exact f32 softmax over time
    a_ref[...] = attn                                    # module output A

    hm3 = hm.reshape(bsz, slot, hid)[:, :t_final, :]     # (B, t_final, hid) f32
    o = jnp.einsum('bht,btd->bhd', attn, hm3,
                   preferred_element_type=f32)           # (B, heads, hid) f32
    # TODO(synk): dropout on the attention output treated as identity (eval-mode).

    # bn_window without materializing the (heads*hid) lane flatten: one matmul per head
    # with M = batch, accumulated in f32.
    o_bf = o.astype(bf16)
    acc = bias(_B_BNW)                                   # (1, out) -> broadcasts to (B, out)
    for hh in range(heads):
        acc = acc + jnp.dot(o_bf[:, hh, :], bnw_ref[hh], preferred_element_type=f32)
    out_ref[...] = jnp.maximum(acc, 0.0)


# ---------------------------- parameter packing ----------------------------

def _pack_params(p):
    """Pack params into 5 slabs: (11,H,H) bf16, (3,H,2H) bf16, (14,H) f32, ws2, bnw3."""
    bf16, f32 = jnp.bfloat16, jnp.float32
    din, hid = p['fc1_w'].shape

    fc1_pad = jnp.zeros((hid, hid), f32).at[:din, :].set(p['fc1_w'])   # pad K to hid
    w_slab = jnp.stack(
        [fc1_pad,
         p['res1'][0], p['res1'][2],
         p['res2'][0], p['res2'][2],
         p['res3'][0], p['res3'][2],
         p['res4'][0], p['res4'][2],
         p['bn_frame_w'], p['ws1']], axis=0).astype(bf16)

    # TDNN taps fused along N: [W0 | W1] -> (hid, 2*hid)
    t_slab = jnp.stack(
        [jnp.concatenate([p[k][0], p[k][1]], axis=1)
         for k in ('tdnn2', 'tdnn3', 'tdnn4')], axis=0).astype(bf16)

    def rb(r):                                           # (b1, b2 + resblock_bias)
        return [r[1], r[3] + r[4]]

    b_slab = jnp.stack(
        [p['fc1_b'],
         *rb(p['res1']), p['tdnn2'][2],
         *rb(p['res2']), p['tdnn3'][2],
         *rb(p['res3']), p['tdnn4'][2],
         *rb(p['res4']),
         p['bn_frame_b'], p['bn_window_b']], axis=0).astype(f32)

    ws2 = p['ws2'].astype(bf16)
    heads = ws2.shape[1]
    atten_in = p['bn_frame_w'].shape[1]
    out_dim = p['bn_window_w'].shape[1]
    # torch's x.view(B, -1) flatten of the (heads, atten_in) attention output is
    # heads-major, matching this reshape of the (heads*atten_in, out) weight.
    bnw3 = p['bn_window_w'].reshape(heads, atten_in, out_dim).astype(bf16)
    return w_slab, t_slab, b_slab, ws2, bnw3


# ---------------------------- model wrapper ----------------------------

def time_sync_forward(x, params):
    bsz, t, din = x.shape
    total_span = sum(SPANS)
    # Fixed-slot rolled-copy validity requires at least one valid row after all spans.
    assert t > total_span, "sequence too short for the TDNN context spans"
    t_final = t - total_span

    hid = params['fc1_w'].shape[1]
    atten_in = params['bn_frame_w'].shape[1]
    unit = params['ws1'].shape[1]
    heads = params['ws2'].shape[1]
    out_dim = params['bn_window_b'].shape[0]
    assert hid == atten_in == unit, "packed layout assumes hidden == atten_in == attention_unit"
    assert din <= hid

    w_slab, t_slab, b_slab, ws2, bnw3 = _pack_params(params)

    # bf16 input with K padded to hid: fc1 shares the weight slab, every matmul K is
    # MXU-aligned, and the input DMA is half the size of f32.
    x_bf = jnp.pad(x.astype(jnp.bfloat16), ((0, 0), (0, 0), (0, hid - din)))

    rows = bsz * t
    flops = 2 * rows * (17 * hid * hid + hid * heads)          # trunk matmuls
    flops += 2 * bsz * heads * t_final * hid                   # A @ H
    flops += 2 * bsz * heads * hid * out_dim                   # bn_window
    transcendentals = rows * hid + bsz * heads * t_final       # tanh + exp
    inputs = (x_bf, w_slab, t_slab, b_slab, ws2, bnw3)
    bytes_accessed = sum(int(a.size) * a.dtype.itemsize for a in inputs)
    bytes_accessed += bsz * out_dim * 4 + bsz * heads * t_final * 4

    vmem = pltpu.MemorySpace.VMEM
    kernel = functools.partial(_time_sync_fused_kernel, spans=SPANS)

    # Single fused, grid-less call: weights (~1.3 MB bf16) + activations (<1 MB) are all
    # VMEM-resident, far under the scoped limit on v5e/v6e/v7x.
    # TODO(synk): on v7x a batch-parallel grid/core_map could use the 2nd TensorCore; at
    # bsz=2 the kernel is overhead-bound so it stays a single call.
    out, a = pl.pallas_call(
        kernel,
        out_shape=(jax.ShapeDtypeStruct((bsz, out_dim), jnp.float32),
                   jax.ShapeDtypeStruct((bsz, heads, t_final), jnp.float32)),
        in_specs=[pl.BlockSpec(memory_space=vmem) for _ in inputs],
        out_specs=(pl.BlockSpec(memory_space=vmem), pl.BlockSpec(memory_space=vmem)),
        cost_estimate=pl.CostEstimate(flops=int(flops),
                                      transcendentals=int(transcendentals),
                                      bytes_accessed=int(bytes_accessed)),
    )(*inputs)
    return out, a


# ---------------------------- parameter init ----------------------------

def init_params(key, input_dim, hidden_dim, atten_in_dim, attention_unit, num_heads):
    # bn_window consumes the flattened (num_heads * atten_in_dim) attention output but is
    # sized with attention_unit (as in the PyTorch module) -> make the dependency explicit.
    assert atten_in_dim == attention_unit, "Time_sync requires atten_in_dim == attention_unit"

    keys = list(jax.random.split(key, 40))
    ki = iter(keys)

    def lin(din, dout):
        s = 1.0 / (din ** 0.5)
        w = jax.random.uniform(next(ki), (din, dout), jnp.float32, -s, s)
        b = jax.random.uniform(next(ki), (dout,), jnp.float32, -s, s)
        return w, b

    def resp(d):
        w1, b1 = lin(d, d)
        w2, b2 = lin(d, d)
        return (w1, b1, w2, b2, jnp.ones((d,), jnp.float32))

    def tdnnp(din, dout):
        s = 1.0 / (din ** 0.5)
        w0 = s * jax.random.normal(next(ki), (din, dout), jnp.float32)
        w1 = s * jax.random.normal(next(ki), (din, dout), jnp.float32)
        b = s * jax.random.normal(next(ki), (dout,), jnp.float32)
        return (w0, w1, b)

    params = {}
    params['fc1_w'], params['fc1_b'] = lin(input_dim, hidden_dim)
    params['res1'] = resp(hidden_dim)
    params['tdnn2'] = tdnnp(hidden_dim, hidden_dim)
    params['res2'] = resp(hidden_dim)
    params['tdnn3'] = tdnnp(hidden_dim, hidden_dim)
    params['res3'] = resp(hidden_dim)
    params['tdnn4'] = tdnnp(hidden_dim, hidden_dim)
    params['res4'] = resp(hidden_dim)
    params['bn_frame_w'], params['bn_frame_b'] = lin(hidden_dim, atten_in_dim)
    params['ws1'] = jax.random.uniform(next(ki), (atten_in_dim, attention_unit),
                                       jnp.float32, -0.1, 0.1)
    params['ws2'] = jax.random.uniform(next(ki), (attention_unit, num_heads),
                                       jnp.float32, -0.1, 0.1)
    params['bn_window_w'], params['bn_window_b'] = lin(attention_unit * num_heads, 128)
    return params


if __name__ == "__main__":
    B, T = 2, 32
    INPUT_DIM, HIDDEN_DIM = 64, 128
    ATTEN_IN, ATTEN_UNIT, HEADS = 128, 128, 5

    key = jax.random.PRNGKey(0)
    pkey, xkey = jax.random.split(key)
    params = init_params(pkey, INPUT_DIM, HIDDEN_DIM, ATTEN_IN, ATTEN_UNIT, HEADS)
    x = jax.random.normal(xkey, (B, T, INPUT_DIM), dtype=jnp.float32)

    fwd = jax.jit(time_sync_forward)
    out, A = fwd(x, params)
    jax.block_until_ready((out, A))

    t_final = T - sum(SPANS)   # 32 - (3 + 6 + 9) = 14
    assert out.shape == (B, 128), out.shape
    assert A.shape == (B, HEADS, t_final), A.shape
    assert bool(jnp.all(jnp.isfinite(out))) and bool(jnp.all(jnp.isfinite(A)))
    # each attention head distribution sums to ~1 over time (exact f32 softmax in-kernel)
    assert bool(jnp.allclose(jnp.sum(A, axis=-1), 1.0, atol=1e-3))
    print("KERNEL_OK")
</pallas_src>

<mosaic_0001>
module attributes {stable_mosaic.version = 11 : i64} {
  func.func @_time_sync_fused_kernel(%arg0: memref<2x32x128xbf16, #tpu.memory_space<vmem>>, %arg1: memref<11x128x128xbf16, #tpu.memory_space<vmem>>, %arg2: memref<3x128x256xbf16, #tpu.memory_space<vmem>>, %arg3: memref<14x128xf32, #tpu.memory_space<vmem>>, %arg4: memref<128x5xbf16, #tpu.memory_space<vmem>>, %arg5: memref<5x128x128xbf16, #tpu.memory_space<vmem>>, %arg6: memref<2x128xf32, #tpu.memory_space<vmem>>, %arg7: memref<2x5x14xf32, #tpu.memory_space<vmem>>) attributes {dimension_semantics = [], scalar_prefetch = 0 : i64, scratch_operands = 0 : i64, tpu.core_type = #tpu.core_type<tc>} {
    %c0 = arith.constant 0 : index
    %c0_0 = arith.constant 0 : index
    %c0_1 = arith.constant 0 : index
    %0 = vector.load %arg0[%c0, %c0_0, %c0_1] : memref<2x32x128xbf16, #tpu.memory_space<vmem>>, vector<2x32x128xbf16>
    %1 = vector.shape_cast %0 : vector<2x32x128xbf16> to vector<64x128xbf16>
    %c0_2 = arith.constant 0 : index
    %c0_3 = arith.constant 0 : index
    %c0_4 = arith.constant 0 : index
    %2 = vector.load %arg1[%c0_2, %c0_3, %c0_4] : memref<11x128x128xbf16, #tpu.memory_space<vmem>>, vector<1x128x128xbf16>
    %3 = vector.shape_cast %2 : vector<1x128x128xbf16> to vector<128x128xbf16>
    %cst = arith.constant dense<0.000000e+00> : vector<64x128xf32>
    %4 = tpu.matmul %1, %3, %cst {dimension_numbers = #tpu.dot_dimension_numbers<[1], [0], [0], [1], [0, 0, 1, 1], [], []>} : vector<64x128xbf16>, vector<128x128xbf16>, vector<64x128xf32> -> vector<64x128xf32>
    %c0_5 = arith.constant 0 : index
    %c0_6 = arith.constant 0 : index
    %5 = vector.load %arg3[%c0_5, %c0_6] : memref<14x128xf32, #tpu.memory_space<vmem>>, vector<1x128xf32>
    %6 = vector.broadcast %5 : vector<1x128xf32> to vector<64x128xf32>
    %7 = arith.addf %4, %6 : vector<64x128xf32>
    %cst_7 = arith.constant 0.000000e+00 : f32
    %8 = vector.broadcast %cst_7 : f32 to vector<64x128xf32>
    %9 = arith.maximumf %7, %8 : vector<64x128xf32>
    %10 = arith.truncf %9 : vector<64x128xf32> to vector<64x128xbf16>
    %c1 = arith.constant 1 : index
    %c0_8 = arith.constant 0 : index
    %c0_9 = arith.constant 0 : index
    %11 = vector.load %arg1[%c1, %c0_8, %c0_9] : memref<11x128x128xbf16, #tpu.memory_space<vmem>>, vector<1x128x128xbf16>
    %12 = vector.shape_cast %11 : vector<1x128x128xbf16> to vector<128x128xbf16>
    %cst_10 = arith.constant dense<0.000000e+00> : vector<64x128xf32>
    %13 = tpu.matmul %10, %12, %cst_10 {dimension_numbers = #tpu.dot_dimension_numbers<[1], [0], [0], [1], [0, 0, 1, 1], [], []>} : vector<64x128xbf16>, vector<128x128xbf16>, vector<64x128xf32> -> vector<64x128xf32>
    %c1_11 = arith.constant 1 : index
    %c0_12 = arith.constant 0 : index
    %14 = vector.load %arg3[%c1_11, %c0_12] : memref<14x128xf32, #tpu.memory_space<vmem>>, vector<1x128xf32>
    %15 = vector.broadcast %14 : vector<1x128xf32> to vector<64x128xf32>
    %16 = arith.addf %13, %15 : vector<64x128xf32>
    %cst_13 = arith.constant 0.000000e+00 : f32
    %17 = vector.broadcast %cst_13 : f32 to vector<64x128xf32>
    %18 = arith.maximumf %16, %17 : vector<64x128xf32>
    %19 = arith.truncf %18 : vector<64x128xf32> to vector<64x128xbf16>
    %c2 = arith.constant 2 : index
    %c0_14 = arith.constant 0 : index
    %c0_15 = arith.constant 0 : index
    %20 = vector.load %arg1[%c2, %c0_14, %c0_15] : memref<11x128x128xbf16, #tpu.memory_space<vmem>>, vector<1x128x128xbf16>
    %21 = vector.shape_cast %20 : vector<1x128x128xbf16> to vector<128x128xbf16>
    %cst_16 = arith.constant dense<0.000000e+00> : vector<64x128xf32>
    %22 = tpu.matmul %19, %21, %cst_16 {dimension_numbers = #tpu.dot_dimension_numbers<[1], [0], [0], [1], [0, 0, 1, 1], [], []>} : vector<64x128xbf16>, vector<128x128xbf16>, vector<64x128xf32> -> vector<64x128xf32>
    %c2_17 = arith.constant 2 : index
    %c0_18 = arith.constant 0 : index
    %23 = vector.load %arg3[%c2_17, %c0_18] : memref<14x128xf32, #tpu.memory_space<vmem>>, vector<1x128xf32>
    %24 = vector.broadcast %23 : vector<1x128xf32> to vector<64x128xf32>
    %25 = arith.addf %22, %24 : vector<64x128xf32>
    %26 = arith.addf %25, %9 : vector<64x128xf32>
    %cst_19 = arith.constant 0.000000e+00 : f32
    %27 = vector.broadcast %cst_19 : f32 to vector<64x128xf32>
    %28 = arith.maximumf %26, %27 : vector<64x128xf32>
    %29 = arith.truncf %28 : vector<64x128xf32> to vector<64x128xbf16>
    %c0_20 = arith.constant 0 : index
    %c0_21 = arith.constant 0 : index
    %c0_22 = arith.constant 0 : index
    %30 = vector.load %arg2[%c0_20, %c0_21, %c0_22] : memref<3x128x256xbf16, #tpu.memory_space<vmem>>, vector<1x128x256xbf16>
    %31 = vector.shape_cast %30 : vector<1x128x256xbf16> to vector<128x256xbf16>
    %cst_23 = arith.constant dense<0.000000e+00> : vector<64x256xf32>
    %32 = tpu.matmul %29, %31, %cst_23 {dimension_numbers = #tpu.dot_dimension_numbers<[1], [0], [0], [1], [0, 0, 1, 1], [], []>} : vector<64x128xbf16>, vector<128x256xbf16>, vector<64x256xf32> -> vector<64x256xf32>
    %33 = vector.extract_strided_slice %32 {offsets = [0, 0], sizes = [64, 128], strides = [1, 1]} : vector<64x256xf32> to vector<64x128xf32>
    %34 = vector.extract_strided_slice %32 {offsets = [0, 128], sizes = [64, 128], strides = [1, 1]} : vector<64x256xf32> to vector<64x128xf32>
    %c61_i32 = arith.constant 61 : i32
    %35 = tpu.dynamic_rotate %34 by %c61_i32 dim 0 : vector<64x128xf32>, i32 -> vector<64x128xf32>
    %36 = arith.addf %33, %35 : vector<64x128xf32>
    %c3 = arith.constant 3 : index
    %c0_24 = arith.constant 0 : index
    %37 = vector.load %arg3[%c3, %c0_24] : memref<14x128xf32, #tpu.memory_space<vmem>>, vector<1x128xf32>
    %38 = vector.broadcast %37 : vector<1x128xf32> to vector<64x128xf32>
    %39 = arith.addf %36, %38 : vector<64x128xf32>
    %cst_25 = arith.constant 0.000000e+00 : f32
    %40 = vector.broadcast %cst_25 : f32 to vector<64x128xf32>
    %41 = arith.maximumf %39, %40 : vector<64x128xf32>
    %42 = arith.truncf %41 : vector<64x128xf32> to vector<64x128xbf16>
    %c3_26 = arith.constant 3 : index
    %c0_27 = arith.constant 0 : index
    %c0_28 = arith.constant 0 : index
    %43 = vector.load %arg1[%c3_26, %c0_27, %c0_28] : memref<11x128x128xbf16, #tpu.memory_space<vmem>>, vector<1x128x128xbf16>
    %44 = vector.shape_cast %43 : vector<1x128x128xbf16> to vector<128x128xbf16>
    %cst_29 = arith.constant dense<0.000000e+00> : vector<64x128xf32>
    %45 = tpu.matmul %42, %44, %cst_29 {dimension_numbers = #tpu.dot_dimension_numbers<[1], [0], [0], [1], [0, 0, 1, 1], [], []>} : vector<64x128xbf16>, vector<128x128xbf16>, vector<64x128xf32> -> vector<64x128xf32>
    %c4 = arith.constant 4 : index
    %c0_30 = arith.constant 0 : index
    %46 = vector.load %arg3[%c4, %c0_30] : memref<14x128xf32, #tpu.memory_space<vmem>>, vector<1x128xf32>
    %47 = vector.broadcast %46 : vector<1x128xf32> to vector<64x128xf32>
    %48 = arith.addf %45, %47 : vector<64x128xf32>
    %cst_31 = arith.constant 0.000000e+00 : f32
    %49 = vector.broadcast %cst_31 : f32 to vector<64x128xf32>
    %50 = arith.maximumf %48, %49 : vector<64x128xf32>
    %51 = arith.truncf %50 : vector<64x128xf32> to vector<64x128xbf16>
    %c4_32 = arith.constant 4 : index
    %c0_33 = arith.constant 0 : index
    %c0_34 = arith.constant 0 : index
    %52 = vector.load %arg1[%c4_32, %c0_33, %c0_34] : memref<11x128x128xbf16, #tpu.memory_space<vmem>>, vector<1x128x128xbf16>
    %53 = vector.shape_cast %52 : vector<1x128x128xbf16> to vector<128x128xbf16>
    %cst_35 = arith.constant dense<0.000000e+00> : vector<64x128xf32>
    %54 = tpu.matmul %51, %53, %cst_35 {dimension_numbers = #tpu.dot_dimension_numbers<[1], [0], [0], [1], [0, 0, 1, 1], [], []>} : vector<64x128xbf16>, vector<128x128xbf16>, vector<64x128xf32> -> vector<64x128xf32>
    %c5 = arith.constant 5 : index
    %c0_36 = arith.constant 0 : index
    %55 = vector.load %arg3[%c5, %c0_36] : memref<14x128xf32, #tpu.memory_space<vmem>>, vector<1x128xf32>
    %56 = vector.broadcast %55 : vector<1x128xf32> to vector<64x128xf32>
    %57 = arith.addf %54, %56 : vector<64x128xf32>
    %58 = arith.addf %57, %41 : vector<64x128xf32>
    %cst_37 = arith.constant 0.000000e+00 : f32
    %59 = vector.broadcast %cst_37 : f32 to vector<64x128xf32>
    %60 = arith.maximumf %58, %59 : vector<64x128xf32>
    %61 = arith.truncf %60 : vector<64x128xf32> to vector<64x128xbf16>
    %c1_38 = arith.constant 1 : index
    %c0_39 = arith.constant 0 : index
    %c0_40 = arith.constant 0 : index
    %62 = vector.load %arg2[%c1_38, %c0_39, %c0_40] : memref<3x128x256xbf16, #tpu.memory_space<vmem>>, vector<1x128x256xbf16>
    %63 = vector.shape_cast %62 : vector<1x128x256xbf16> to vector<128x256xbf16>
    %cst_41 = arith.constant dense<0.000000e+00> : vector<64x256xf32>
    %64 = tpu.matmul %61, %63, %cst_41 {dimension_numbers = #tpu.dot_dimension_numbers<[1], [0], [0], [1], [0, 0, 1, 1], [], []>} : vector<64x128xbf16>, vector<128x256xbf16>, vector<64x256xf32> -> vector<64x256xf32>
    %65 = vector.extract_strided_slice %64 {offsets = [0, 0], sizes = [64, 128], strides = [1, 1]} : vector<64x256xf32> to vector<64x128xf32>
    %66 = vector.extract_strided_slice %64 {offsets = [0, 128], sizes = [64, 128], strides = [1, 1]} : vector<64x256xf32> to vector<64x128xf32>
    %c58_i32 = arith.constant 58 : i32
    %67 = tpu.dynamic_rotate %66 by %c58_i32 dim 0 : vector<64x128xf32>, i32 -> vector<64x128xf32>
    %68 = arith.addf %65, %67 : vector<64x128xf32>
    %c6 = arith.constant 6 : index
    %c0_42 = arith.constant 0 : index
    %69 = vector.load %arg3[%c6, %c0_42] : memref<14x128xf32, #tpu.memory_space<vmem>>, vector<1x128xf32>
    %70 = vector.broadcast %69 : vector<1x128xf32> to vector<64x128xf32>
    %71 = arith.addf %68, %70 : vector<64x128xf32>
    %cst_43 = arith.constant 0.000000e+00 : f32
    %72 = vector.broadcast %cst_43 : f32 to vector<64x128xf32>
    %73 = arith.maximumf %71, %72 : vector<64x128xf32>
    %74 = arith.truncf %73 : vector<64x128xf32> to vector<64x128xbf16>
    %c5_44 = arith.constant 5 : index
    %c0_45 = arith.constant 0 : index
    %c0_46 = arith.constant 0 : index
    %75 = vector.load %arg1[%c5_44, %c0_45, %c0_46] : memref<11x128x128xbf16, #tpu.memory_space<vmem>>, vector<1x128x128xbf16>
    %76 = vector.shape_cast %75 : vector<1x128x128xbf16> to vector<128x128xbf16>
    %cst_47 = arith.constant dense<0.000000e+00> : vector<64x128xf32>
    %77 = tpu.matmul %74, %76, %cst_47 {dimension_numbers = #tpu.dot_dimension_numbers<[1], [0], [0], [1], [0, 0, 1, 1], [], []>} : vector<64x128xbf16>, vector<128x128xbf16>, vector<64x128xf32> -> vector<64x128xf32>
    %c7 = arith.constant 7 : index
    %c0_48 = arith.constant 0 : index
    %78 = vector.load %arg3[%c7, %c0_48] : memref<14x128xf32, #tpu.memory_space<vmem>>, vector<1x128xf32>
    %79 = vector.broadcast %78 : vector<1x128xf32> to vector<64x128xf32>
    %80 = arith.addf %77, %79 : vector<64x128xf32>
    %cst_49 = arith.constant 0.000000e+00 : f32
    %81 = vector.broadcast %cst_49 : f32 to vector<64x128xf32>
    %82 = arith.maximumf %80, %81 : vector<64x128xf32>
    %83 = arith.truncf %82 : vector<64x128xf32> to vector<64x128xbf16>
    %c6_50 = arith.constant 6 : index
    %c0_51 = arith.constant 0 : index
    %c0_52 = arith.constant 0 : index
    %84 = vector.load %arg1[%c6_50, %c0_51, %c0_52] : memref<11x128x128xbf16, #tpu.memory_space<vmem>>, vector<1x128x128xbf16>
    %85 = vector.shape_cast %84 : vector<1x128x128xbf16> to vector<128x128xbf16>
    %cst_53 = arith.constant dense<0.000000e+00> : vector<64x128xf32>
    %86 = tpu.matmul %83, %85, %cst_53 {dimension_numbers = #tpu.dot_dimension_numbers<[1], [0], [0], [1], [0, 0, 1, 1], [], []>} : vector<64x128xbf16>, vector<128x128xbf16>, vector<64x128xf32> -> vector<64x128xf32>
    %c8 = arith.constant 8 : index
    %c0_54 = arith.constant 0 : index
    %87 = vector.load %arg3[%c8, %c0_54] : memref<14x128xf32, #tpu.memory_space<vmem>>, vector<1x128xf32>
    %88 = vector.broadcast %87 : vector<1x128xf32> to vector<64x128xf32>
    %89 = arith.addf %86, %88 : vector<64x128xf32>
    %90 = arith.addf %89, %73 : vector<64x128xf32>
    %cst_55 = arith.constant 0.000000e+00 : f32
    %91 = vector.broadcast %cst_55 : f32 to vector<64x128xf32>
    %92 = arith.maximumf %90, %91 : vector<64x128xf32>
    %93 = arith.truncf %92 : vector<64x128xf32> to vector<64x128xbf16>
    %c2_56 = arith.constant 2 : index
    %c0_57 = arith.constant 0 : index
    %c0_58 = arith.constant 0 : index
    %94 = vector.load %arg2[%c2_56, %c0_57, %c0_58] : memref<3x128x256xbf16, #tpu.memory_space<vmem>>, vector<1x128x256xbf16>
    %95 = vector.shape_cast %94 : vector<1x128x256xbf16> to vector<128x256xbf16>
    %cst_59 = arith.constant dense<0.000000e+00> : vector<64x256xf32>
    %96 = tpu.matmul %93, %95, %cst_59 {dimension_numbers = #tpu.dot_dimension_numbers<[1], [0], [0], [1], [0, 0, 1, 1], [], []>} : vector<64x128xbf16>, vector<128x256xbf16>, vector<64x256xf32> -> vector<64x256xf32>
    %97 = vector.extract_strided_slice %96 {offsets = [0, 0], sizes = [64, 128], strides = [1, 1]} : vector<64x256xf32> to vector<64x128xf32>
    %98 = vector.extract_strided_slice %96 {offsets = [0, 128], sizes = [64, 128], strides = [1, 1]} : vector<64x256xf32> to vector<64x128xf32>
    %c55_i32 = arith.constant 55 : i32
    %99 = tpu.dynamic_rotate %98 by %c55_i32 dim 0 : vector<64x128xf32>, i32 -> vector<64x128xf32>
    %100 = arith.addf %97, %99 : vector<64x128xf32>
    %c9 = arith.constant 9 : index
    %c0_60 = arith.constant 0 : index
    %101 = vector.load %arg3[%c9, %c0_60] : memref<14x128xf32, #tpu.memory_space<vmem>>, vector<1x128xf32>
    %102 = vector.broadcast %101 : vector<1x128xf32> to vector<64x128xf32>
    %103 = arith.addf %100, %102 : vector<64x128xf32>
    %cst_61 = arith.constant 0.000000e+00 : f32
    %104 = vector.broadcast %cst_61 : f32 to vector<64x128xf32>
    %105 = arith.maximumf %103, %104 : vector<64x128xf32>
    %106 = arith.truncf %105 : vector<64x128xf32> to vector<64x128xbf16>
    %c7_62 = arith.constant 7 : index
    %c0_63 = arith.constant 0 : index
    %c0_64 = arith.constant 0 : index
    %107 = vector.load %arg1[%c7_62, %c0_63, %c0_64] : memref<11x128x128xbf16, #tpu.memory_space<vmem>>, vector<1x128x128xbf16>
    %108 = vector.shape_cast %107 : vector<1x128x128xbf16> to vector<128x128xbf16>
    %cst_65 = arith.constant dense<0.000000e+00> : vector<64x128xf32>
    %109 = tpu.matmul %106, %108, %cst_65 {dimension_numbers = #tpu.dot_dimension_numbers<[1], [0], [0], [1], [0, 0, 1, 1], [], []>} : vector<64x128xbf16>, vector<128x128xbf16>, vector<64x128xf32> -> vector<64x128xf32>
    %c10 = arith.constant 10 : index
    %c0_66 = arith.constant 0 : index
    %110 = vector.load %arg3[%c10, %c0_66] : memref<14x128xf32, #tpu.memory_space<vmem>>, vector<1x128xf32>
    %111 = vector.broadcast %110 : vector<1x128xf32> to vector<64x128xf32>
    %112 = arith.addf %109, %111 : vector<64x128xf32>
    %cst_67 = arith.constant 0.000000e+00 : f32
    %113 = vector.broadcast %cst_67 : f32 to vector<64x128xf32>
    %114 = arith.maximumf %112, %113 : vector<64x128xf32>
    %115 = arith.truncf %114 : vector<64x128xf32> to vector<64x128xbf16>
    %c8_68 = arith.constant 8 : index
    %c0_69 = arith.constant 0 : index
    %c0_70 = arith.constant 0 : index
    %116 = vector.load %arg1[%c8_68, %c0_69, %c0_70] : memref<11x128x128xbf16, #tpu.memory_space<vmem>>, vector<1x128x128xbf16>
    %117 = vector.shape_cast %116 : vector<1x128x128xbf16> to vector<128x128xbf16>
    %cst_71 = arith.constant dense<0.000000e+00> : vector<64x128xf32>
    %118 = tpu.matmul %115, %117, %cst_71 {dimension_numbers = #tpu.dot_dimension_numbers<[1], [0], [0], [1], [0, 0, 1, 1], [], []>} : vector<64x128xbf16>, vector<128x128xbf16>, vector<64x128xf32> -> vector<64x128xf32>
    %c11 = arith.constant 11 : index
    %c0_72 = arith.constant 0 : index
    %119 = vector.load %arg3[%c11, %c0_72] : memref<14x128xf32, #tpu.memory_space<vmem>>, vector<1x128xf32>
    %120 = vector.broadcast %119 : vector<1x128xf32> to vector<64x128xf32>
    %121 = arith.addf %118, %120 : vector<64x128xf32>
    %122 = arith.addf %121, %105 : vector<64x128xf32>
    %cst_73 = arith.constant 0.000000e+00 : f32
    %123 = vector.broadcast %cst_73 : f32 to vector<64x128xf32>
    %124 = arith.maximumf %122, %123 : vector<64x128xf32>
    %125 = arith.truncf %124 : vector<64x128xf32> to vector<64x128xbf16>
    %c9_74 = arith.constant 9 : index
    %c0_75 = arith.constant 0 : index
    %c0_76 = arith.constant 0 : index
    %126 = vector.load %arg1[%c9_74, %c0_75, %c0_76] : memref<11x128x128xbf16, #tpu.memory_space<vmem>>, vector<1x128x128xbf16>
    %127 = vector.shape_cast %126 : vector<1x128x128xbf16> to vector<128x128xbf16>
    %cst_77 = arith.constant dense<0.000000e+00> : vector<64x128xf32>
    %128 = tpu.matmul %125, %127, %cst_77 {dimension_numbers = #tpu.dot_dimension_numbers<[1], [0], [0], [1], [0, 0, 1, 1], [], []>} : vector<64x128xbf16>, vector<128x128xbf16>, vector<64x128xf32> -> vector<64x128xf32>
    %c12 = arith.constant 12 : index
    %c0_78 = arith.constant 0 : index
    %129 = vector.load %arg3[%c12, %c0_78] : memref<14x128xf32, #tpu.memory_space<vmem>>, vector<1x128xf32>
    %130 = vector.broadcast %129 : vector<1x128xf32> to vector<64x128xf32>
    %131 = arith.addf %128, %130 : vector<64x128xf32>
    %132 = arith.truncf %131 : vector<64x128xf32> to vector<64x128xbf16>
    %c10_79 = arith.constant 10 : index
    %c0_80 = arith.constant 0 : index
    %c0_81 = arith.constant 0 : index
    %133 = vector.load %arg1[%c10_79, %c0_80, %c0_81] : memref<11x128x128xbf16, #tpu.memory_space<vmem>>, vector<1x128x128xbf16>
    %134 = vector.shape_cast %133 : vector<1x128x128xbf16> to vector<128x128xbf16>
    %cst_82 = arith.constant dense<0.000000e+00> : vector<64x128xf32>
    %135 = tpu.matmul %132, %134, %cst_82 {dimension_numbers = #tpu.dot_dimension_numbers<[1], [0], [0], [1], [0, 0, 1, 1], [], []>} : vector<64x128xbf16>, vector<128x128xbf16>, vector<64x128xf32> -> vector<64x128xf32>
    %136 = math.tanh %135 : vector<64x128xf32>
    %137 = arith.truncf %136 : vector<64x128xf32> to vector<64x128xbf16>
    %c0_83 = arith.constant 0 : index
    %c0_84 = arith.constant 0 : index
    %138 = vector.load %arg4[%c0_83, %c0_84] : memref<128x5xbf16, #tpu.memory_space<vmem>>, vector<128x5xbf16>
    %cst_85 = arith.constant dense<0.000000e+00> : vector<64x5xf32>
    %139 = tpu.matmul %137, %138, %cst_85 {dimension_numbers = #tpu.dot_dimension_numbers<[1], [0], [0], [1], [0, 0, 1, 1], [], []>} : vector<64x128xbf16>, vector<128x5xbf16>, vector<64x5xf32> -> vector<64x5xf32>
    %140 = vector.shape_cast %139 : vector<64x5xf32> to vector<2x32x5xf32>
    %141 = vector.extract_strided_slice %140 {offsets = [0, 0, 0], sizes = [2, 14, 5], strides = [1, 1, 1]} : vector<2x32x5xf32> to vector<2x14x5xf32>
    %142 = tpu.transpose %141, [0, 2, 1] : vector<2x14x5xf32> -> vector<2x5x14xf32>
    %cst_86 = arith.constant dense<0xFF800000> : vector<2x5xf32>
    %143 = vector.multi_reduction <maximumf>, %142, %cst_86 [2] : vector<2x5x14xf32> to vector<2x5xf32>
    %144 = vector.shape_cast %143 : vector<2x5xf32> to vector<2x5x1xf32>
    %145 = vector.broadcast %144 : vector<2x5x1xf32> to vector<2x5x14xf32>
    %146 = arith.subf %142, %145 : vector<2x5x14xf32>
    %147 = math.exp %146 : vector<2x5x14xf32>
    %cst_87 = arith.constant dense<0.000000e+00> : vector<2x5xf32>
    %148 = vector.multi_reduction <add>, %147, %cst_87 [2] : vector<2x5x14xf32> to vector<2x5xf32>
    %149 = vector.shape_cast %148 : vector<2x5xf32> to vector<2x5x1xf32>
    %150 = vector.broadcast %149 : vector<2x5x1xf32> to vector<2x5x14xf32>
    %151 = arith.divf %147, %150 : vector<2x5x14xf32>
    %c0_88 = arith.constant 0 : index
    %c0_89 = arith.constant 0 : index
    %c0_90 = arith.constant 0 : index
    %152 = vector.load %arg7[%c0_88, %c0_89, %c0_90] : memref<2x5x14xf32, #tpu.memory_space<vmem>>, vector<2x5x14xf32>
    tpu.vector_store %arg7[%c0_88, %c0_89, %c0_90], %151 {strides = array<i32>} : memref<2x5x14xf32, #tpu.memory_space<vmem>>, vector<2x5x14xf32>,
    %153 = vector.shape_cast %131 : vector<64x128xf32> to vector<2x32x128xf32>
    %154 = vector.extract_strided_slice %153 {offsets = [0, 0, 0], sizes = [2, 14, 128], strides = [1, 1, 1]} : vector<2x32x128xf32> to vector<2x14x128xf32>
    "tpu.trace_start"() <{level = 10 : i32, message = "bht,btd->bhd"}> : () -> ()
    %cst_91 = arith.constant dense<0.000000e+00> : vector<2x5x128xf32>
    %155 = tpu.matmul %151, %154, %cst_91 {dimension_numbers = #tpu.dot_dimension_numbers<[2], [1], [1], [2], [0, 0, 0, 1, 1, 2], [0], [0]>} : vector<2x5x14xf32>, vector<2x14x128xf32>, vector<2x5x128xf32> -> vector<2x5x128xf32>
    "tpu.trace_stop"() : () -> ()
    %156 = arith.truncf %155 : vector<2x5x128xf32> to vector<2x5x128xbf16>
    %c13 = arith.constant 13 : index
    %c0_92 = arith.constant 0 : index
    %157 = vector.load %arg3[%c13, %c0_92] : memref<14x128xf32, #tpu.memory_space<vmem>>, vector<1x128xf32>
    %158 = vector.extract_strided_slice %156 {offsets = [0, 0, 0], sizes = [2, 1, 128], strides = [1, 1, 1]} : vector<2x5x128xbf16> to vector<2x1x128xbf16>
    %159 = vector.shape_cast %158 : vector<2x1x128xbf16> to vector<2x128xbf16>
    %c0_93 = arith.constant 0 : index
    %c0_94 = arith.constant 0 : index
    %c0_95 = arith.constant 0 : index
    %160 = vector.load %arg5[%c0_93, %c0_94, %c0_95] : memref<5x128x128xbf16, #tpu.memory_space<vmem>>, vector<1x128x128xbf16>
    %161 = vector.shape_cast %160 : vector<1x128x128xbf16> to vector<128x128xbf16>
    %cst_96 = arith.constant dense<0.000000e+00> : vector<2x128xf32>
    %162 = tpu.matmul %159, %161, %cst_96 {dimension_numbers = #tpu.dot_dimension_numbers<[1], [0], [0], [1], [0, 0, 1, 1], [], []>} : vector<2x128xbf16>, vector<128x128xbf16>, vector<2x128xf32> -> vector<2x128xf32>
    %163 = vector.broadcast %157 : vector<1x128xf32> to vector<2x128xf32>
    %164 = arith.addf %163, %162 : vector<2x128xf32>
    %165 = vector.extract_strided_slice %156 {offsets = [0, 1, 0], sizes = [2, 1, 128], strides = [1, 1, 1]} : vector<2x5x128xbf16> to vector<2x1x128xbf16>
    %166 = vector.shape_cast %165 : vector<2x1x128xbf16> to vector<2x128xbf16>
    %c1_97 = arith.constant 1 : index
    %c0_98 = arith.constant 0 : index
    %c0_99 = arith.constant 0 : index
    %167 = vector.load %arg5[%c1_97, %c0_98, %c0_99] : memref<5x128x128xbf16, #tpu.memory_space<vmem>>, vector<1x128x128xbf16>
    %168 = vector.shape_cast %167 : vector<1x128x128xbf16> to vector<128x128xbf16>
    %cst_100 = arith.constant dense<0.000000e+00> : vector<2x128xf32>
    %169 = tpu.matmul %166, %168, %cst_100 {dimension_numbers = #tpu.dot_dimension_numbers<[1], [0], [0], [1], [0, 0, 1, 1], [], []>} : vector<2x128xbf16>, vector<128x128xbf16>, vector<2x128xf32> -> vector<2x128xf32>
    %170 = arith.addf %164, %169 : vector<2x128xf32>
    %171 = vector.extract_strided_slice %156 {offsets = [0, 2, 0], sizes = [2, 1, 128], strides = [1, 1, 1]} : vector<2x5x128xbf16> to vector<2x1x128xbf16>
    %172 = vector.shape_cast %171 : vector<2x1x128xbf16> to vector<2x128xbf16>
    %c2_101 = arith.constant 2 : index
    %c0_102 = arith.constant 0 : index
    %c0_103 = arith.constant 0 : index
    %173 = vector.load %arg5[%c2_101, %c0_102, %c0_103] : memref<5x128x128xbf16, #tpu.memory_space<vmem>>, vector<1x128x128xbf16>
    %174 = vector.shape_cast %173 : vector<1x128x128xbf16> to vector<128x128xbf16>
    %cst_104 = arith.constant dense<0.000000e+00> : vector<2x128xf32>
    %175 = tpu.matmul %172, %174, %cst_104 {dimension_numbers = #tpu.dot_dimension_numbers<[1], [0], [0], [1], [0, 0, 1, 1], [], []>} : vector<2x128xbf16>, vector<128x128xbf16>, vector<2x128xf32> -> vector<2x128xf32>
    %176 = arith.addf %170, %175 : vector<2x128xf32>
    %177 = vector.extract_strided_slice %156 {offsets = [0, 3, 0], sizes = [2, 1, 128], strides = [1, 1, 1]} : vector<2x5x128xbf16> to vector<2x1x128xbf16>
    %178 = vector.shape_cast %177 : vector<2x1x128xbf16> to vector<2x128xbf16>
    %c3_105 = arith.constant 3 : index
    %c0_106 = arith.constant 0 : index
    %c0_107 = arith.constant 0 : index
    %179 = vector.load %arg5[%c3_105, %c0_106, %c0_107] : memref<5x128x128xbf16, #tpu.memory_space<vmem>>, vector<1x128x128xbf16>
    %180 = vector.shape_cast %179 : vector<1x128x128xbf16> to vector<128x128xbf16>
    %cst_108 = arith.constant dense<0.000000e+00> : vector<2x128xf32>
    %181 = tpu.matmul %178, %180, %cst_108 {dimension_numbers = #tpu.dot_dimension_numbers<[1], [0], [0], [1], [0, 0, 1, 1], [], []>} : vector<2x128xbf16>, vector<128x128xbf16>, vector<2x128xf32> -> vector<2x128xf32>
    %182 = arith.addf %176, %181 : vector<2x128xf32>
    %183 = vector.extract_strided_slice %156 {offsets = [0, 4, 0], sizes = [2, 1, 128], strides = [1, 1, 1]} : vector<2x5x128xbf16> to vector<2x1x128xbf16>
    %184 = vector.shape_cast %183 : vector<2x1x128xbf16> to vector<2x128xbf16>
    %c4_109 = arith.constant 4 : index
    %c0_110 = arith.constant 0 : index
    %c0_111 = arith.constant 0 : index
    %185 = vector.load %arg5[%c4_109, %c0_110, %c0_111] : memref<5x128x128xbf16, #tpu.memory_space<vmem>>, vector<1x128x128xbf16>
    %186 = vector.shape_cast %185 : vector<1x128x128xbf16> to vector<128x128xbf16>
    %cst_112 = arith.constant dense<0.000000e+00> : vector<2x128xf32>
    %187 = tpu.matmul %184, %186, %cst_112 {dimension_numbers = #tpu.dot_dimension_numbers<[1], [0], [0], [1], [0, 0, 1, 1], [], []>} : vector<2x128xbf16>, vector<128x128xbf16>, vector<2x128xf32> -> vector<2x128xf32>
    %188 = arith.addf %182, %187 : vector<2x128xf32>
    %cst_113 = arith.constant 0.000000e+00 : f32
    %189 = vector.broadcast %cst_113 : f32 to vector<2x128xf32>
    %190 = arith.maximumf %188, %189 : vector<2x128xf32>
    %c0_114 = arith.constant 0 : index
    %c0_115 = arith.constant 0 : index
    %191 = vector.load %arg6[%c0_114, %c0_115] : memref<2x128xf32, #tpu.memory_space<vmem>>, vector<2x128xf32>
    tpu.vector_store %arg6[%c0_114, %c0_115], %190 {strides = array<i32>} : memref<2x128xf32, #tpu.memory_space<vmem>>, vector<2x128xf32>,
    return
  }
}

</mosaic_0001>

<llo_original>
// kernel: time_sync_forward.1
$region0: #{time_sync_forward.1}
  #allocation0 [shape = 'u32[]', space=smem, size = 0x4, offset = 0x4, fixed_abs, tag = 'smem constant byte address 0x4 - core index']
  #allocation1 [shape = 'u32[144,128]{1,0:T(1,128)}', space=vmem, size = 0x12000, scoped, tag = 'internal scratch']
  %s0 = inlined_call_operand.vmem [shape: bf16[2,32,128], index: 0, kind: input, shape index: {}]
  %s1 = inlined_call_operand.vmem [shape: bf16[11,128,128], index: 1, kind: input, shape index: {}]
  %s2 = inlined_call_operand.vmem [shape: bf16[3,128,256], index: 2, kind: input, shape index: {}]
  %s3 = inlined_call_operand.vmem [shape: f32[14,128], index: 3, kind: input, shape index: {}]
  %s4 = inlined_call_operand.vmem [shape: bf16[128,5], index: 4, kind: input, shape index: {}]
  %s5 = inlined_call_operand.vmem [shape: bf16[5,128,128], index: 5, kind: input, shape index: {}]
  %s6 = inlined_call_operand.hbm [shape: f32[2,128], index: 6, kind: output, shape index: {0}]
  %s7 = inlined_call_operand.vmem [shape: f32[2,5,14], index: 7, kind: output, shape index: {1}]
  %8 = xla_tuple %s6, %s7
  %s9 = sld [smem:[#allocation0]]
  $region42: #{time_sync_forward.1} parent=0
    _
  %s11 = ssub.s32 1, %s9
  %s12 = scalar_select 0, %s11, %s9
  $region1: #{time_sync_forward.1} parent=0
    #allocation2 [shape = 'u8[1024]{0}', space=vmem, size = 0x400, scoped, tag = 'output window, operand 0, single buffered']
    #allocation3 [shape = 's32[1]{0}', space=sflag, size = 0x4, scoped, tag = 'scoped memory for time_sync_forward.1']
    %13 = vsyncpa [#allocation3], 0
    // Predicated region
    $region2: #{time_sync_forward.1} parent=1 // pred_check
      _
    $region3: #{time_sync_forward.1} parent=1 // pred_check_branch
      %15 = sbr.rel (0) target = $region5
    $region4: #{time_sync_forward.1} parent=1 // pred_region
      _
    $region5: #{time_sync_forward.1} parent=1 // pred_fallthru
      _
    // Predicated region
    $region6: #{time_sync_forward.1} parent=1 // pred_check
      _
    $region7: #{time_sync_forward.1} parent=1 // pred_check_branch
      %17 = sbr.rel (0) target = $region9
    $region8: #{time_sync_forward.1} parent=1 // pred_region
      _
    $region9: #{time_sync_forward.1} parent=1 // pred_fallthru
      _
    // Predicated region
    $region10: #{time_sync_forward.1} parent=1 // pred_check
      _
    $region11: #{time_sync_forward.1} parent=1 // pred_check_branch
      %19 = sbr.rel (0) target = $region13
    $region12: #{time_sync_forward.1} parent=1 // pred_region
      _
    $region13: #{time_sync_forward.1} parent=1 // pred_fallthru
      _
    // Predicated region
    $region14: #{time_sync_forward.1} parent=1 // pred_check
      _
    $region15: #{time_sync_forward.1} parent=1 // pred_check_branch
      %21 = sbr.rel (0) target = $region17
    $region16: #{time_sync_forward.1} parent=1 // pred_region
      _
    $region17: #{time_sync_forward.1} parent=1 // pred_fallthru
      _
    // Predicated region
    $region18: #{time_sync_forward.1} parent=1 // pred_check
      _
    $region19: #{time_sync_forward.1} parent=1 // pred_check_branch
      %23 = sbr.rel (0) target = $region21
    $region20: #{time_sync_forward.1} parent=1 // pred_region
      _
    $region21: #{time_sync_forward.1} parent=1 // pred_fallthru
      _
    // Predicated region
    $region22: #{time_sync_forward.1} parent=1 // pred_check
      _
    $region23: #{time_sync_forward.1} parent=1 // pred_check_branch
      %25 = sbr.rel (0) target = $region25
    $region24: #{time_sync_forward.1} parent=1 // pred_region
      _
    $region25: #{time_sync_forward.1} parent=1 // pred_fallthru
      _
    %v27 = vld [vmem:[%s0] sm:$0xf]
    %v28 = vld [vmem:[%s0 + $0x4] sm:$0xf]
    %v29 = vld [vmem:[%s0 + $0x8] sm:$0xf]
    %v30 = vld [vmem:[%s0 + $0xc] sm:$0xf]
    %v31 = vld [vmem:[%s0 + $0x10] sm:$0xf]
    %v32 = vld [vmem:[%s0 + $0x14] sm:$0xf]
    %v33 = vld [vmem:[%s0 + $0x18] sm:$0xf]
    %v34 = vld [vmem:[%s0 + $0x1c] sm:$0xf]
    %v35 = vld [vmem:[%s1] sm:$0xf]
    %v36 = vld [vmem:[%s1 + $0x4] sm:$0xf]
    %v37 = vld [vmem:[%s1 + $0x8] sm:$0xf]
    %v38 = vld [vmem:[%s1 + $0xc] sm:$0xf]
    %v39 = vld [vmem:[%s1 + $0x10] sm:$0xf]
    %v40 = vld [vmem:[%s1 + $0x14] sm:$0xf]
    %v41 = vld [vmem:[%s1 + $0x18] sm:$0xf]
    %v42 = vld [vmem:[%s1 + $0x1c] sm:$0xf]
    %v43 = vld [vmem:[%s1 + $0x20] sm:$0xf]
    %v44 = vld [vmem:[%s1 + $0x24] sm:$0xf]
    %v45 = vld [vmem:[%s1 + $0x28] sm:$0xf]
    %v46 = vld [vmem:[%s1 + $0x2c] sm:$0xf]
    %v47 = vld [vmem:[%s1 + $0x30] sm:$0xf]
    %v48 = vld [vmem:[%s1 + $0x34] sm:$0xf]
    %v49 = vld [vmem:[%s1 + $0x38] sm:$0xf]
    %v50 = vld [vmem:[%s1 + $0x3c] sm:$0xf]
    %v51 = vld [vmem:[%s3] sm:$0x1]
    %v52 = vlaneseq
    %v53 = vshrl.u32 %v52, 7
    %v54 = vsub.s32 0, %v53
    %v55 = vrot.slane %v51, %v54
    %v64 = vunpack.c.l.b16 %v27
    %v65 = vunpack.c.l.b16 %v28
    %v66 = vunpack.c.l.b16 %v29
    %v67 = vunpack.c.l.b16 %v30
    %v68 = vunpack.c.l.b16 %v31
    %v69 = vunpack.c.l.b16 %v32
    %v70 = vunpack.c.l.b16 %v33
    %v71 = vunpack.c.l.b16 %v34
    %v72 = vpack.c.b16 %v65, %v64
    %v73 = vpack.c.b16 %v67, %v66
    %v74 = vpack.c.b16 %v69, %v68
    %v75 = vpack.c.b16 %v71, %v70
    %v96 = vunpack.c.l.b16 %v35
    %v97 = vunpack.c.l.b16 %v36
    %v98 = vunpack.c.l.b16 %v37
    %v99 = vunpack.c.l.b16 %v38
    %v100 = vunpack.c.l.b16 %v39
    %v101 = vunpack.c.l.b16 %v40
    %v102 = vunpack.c.l.b16 %v41
    %v103 = vunpack.c.l.b16 %v42
    %v104 = vunpack.c.l.b16 %v43
    %v105 = vunpack.c.l.b16 %v44
    %v106 = vunpack.c.l.b16 %v45
    %v107 = vunpack.c.l.b16 %v46
    %v108 = vunpack.c.l.b16 %v47
    %v109 = vunpack.c.l.b16 %v48
    %v110 = vunpack.c.l.b16 %v49
    %v111 = vunpack.c.l.b16 %v50
    %v112 = vpack.c.b16 %v97, %v96
    %v113 = vpack.c.b16 %v99, %v98
    %v114 = vpack.c.b16 %v101, %v100
    %v115 = vpack.c.b16 %v103, %v102
    %v116 = vpack.c.b16 %v105, %v104
    %v117 = vpack.c.b16 %v107, %v106
    %v118 = vpack.c.b16 %v109, %v108
    %v119 = vpack.c.b16 %v111, %v110
    %128 = vmatprep.subr.bf16.mxu0 0
    %129 = vmatpush1.bf16.msra.mxu0 %v112
    %130 = vmatprep.subr.bf16.mxu0 0
    %131 = vmatpush1.bf16.msra.mxu0 %v113
    %132 = vmatprep.subr.bf16.mxu0 0
    %133 = vmatpush1.bf16.msra.mxu0 %v114
    %134 = vmatprep.subr.bf16.mxu0 0
    %135 = vmatpush1.bf16.msra.mxu0 %v115
    %136 = vmatprep.subr.bf16.mxu0 0
    %137 = vmatpush1.bf16.msra.mxu0 %v116
    %138 = vmatprep.subr.bf16.mxu0 0
    %139 = vmatpush1.bf16.msra.mxu0 %v117
    %140 = vmatprep.subr.bf16.mxu0 0
    %141 = vmatpush1.bf16.msra.mxu0 %v118
    %142 = vmatprep.subr.bf16.mxu0 0
    %143 = vmatpush1.bf16.msra.mxu0 %v119
    %144 = vmatprep.subr.bf16.mxu0 0
    %145 = vmatpush1.bf16.msra.mxu0 0
    %146 = vmatprep.subr.bf16.mxu0 0
    %147 = vmatpush1.bf16.msra.mxu0 0
    %148 = vmatprep.subr.bf16.mxu0 0
    %149 = vmatpush1.bf16.msra.mxu0 0
    %150 = vmatprep.subr.bf16.mxu0 0
    %151 = vmatpush1.bf16.msra.mxu0 0
    %152 = vmatprep.subr.bf16.mxu0 0
    %153 = vmatpush1.bf16.msra.mxu0 0
    %154 = vmatprep.subr.bf16.mxu0 0
    %155 = vmatpush1.bf16.msra.mxu0 0
    %156 = vmatprep.subr.bf16.mxu0 0
    %157 = vmatpush1.bf16.msra.mxu0 0
    %158 = vmatprep.subr.bf16.mxu0 0
    %159 = vmatpush1.bf16.msra.mxu0 0
    %160 = vmatprep.mubr.bf16.mxu0 0
    %161 = vmatmul.mubr.bf16.gmra.mrb[0].mxu0 %v72
    %v162 = vpop.f32.mrb[0].mxu0
    %v163 = vadd.f32 %v55, %v162
    %v164 = vpop.f32.mrb[0].mxu0
    %v165 = vpop.f32.mrb[0].mxu0
    %v166 = vadd.f32 %v55, %v165
    %v167 = vpop.f32.mrb[0].mxu0
    %168 = vmatprep.mubr.bf16.mxu0 0
    %169 = vmatmul.mubr.bf16.gmra.mrb[0].mxu0 %v73
    %v170 = vpop.f32.mrb[0].mxu0
    %v171 = vadd.f32 %v55, %v170
    %v172 = vpop.f32.mrb[0].mxu0
    %v173 = vpop.f32.mrb[0].mxu0
    %v174 = vadd.f32 %v55, %v173
    %v175 = vpop.f32.mrb[0].mxu0
    %176 = vmatprep.mubr.bf16.mxu0 0
    %177 = vmatmul.mubr.bf16.gmra.mrb[0].mxu0 %v74
    %v178 = vpop.f32.mrb[0].mxu0
    %v179 = vadd.f32 %v55, %v178
    %v180 = vpop.f32.mrb[0].mxu0
    %v181 = vpop.f32.mrb[0].mxu0
    %v182 = vadd.f32 %v55, %v181
    %v183 = vpop.f32.mrb[0].mxu0
    %184 = vmatprep.mubr.bf16.mxu0 0
    %185 = vmatmul.mubr.bf16.gmra.mrb[0].mxu0 %v75
    %v186 = vpop.f32.mrb[0].mxu0
    %v187 = vadd.f32 %v55, %v186
    %v188 = vpop.f32.mrb[0].mxu0
    %v189 = vpop.f32.mrb[0].mxu0
    %v190 = vadd.f32 %v55, %v189
    %v191 = vpop.f32.mrb[0].mxu0
    %192 = vdwg.mxu0
    %v193 = vmax.f32 %v163, 0.0
    %v194 = vmax.f32 %v166, 0.0
    %v195 = vmax.f32 %v171, 0.0
    %v196 = vmax.f32 %v174, 0.0
    %v197 = vmax.f32 %v179, 0.0
    %v198 = vmax.f32 %v182, 0.0
    %v199 = vmax.f32 %v187, 0.0
    %v200 = vmax.f32 %v190, 0.0
    %v201 = vpack.c.bf16 %v194, %v193
    %v202 = vpack.c.bf16 %v196, %v195
    %v203 = vpack.c.bf16 %v198, %v197
    %v204 = vpack.c.bf16 %v200, %v199
    %s205 = scalar_lea.vmem %s1, 64
    %v206 = vld [vmem:[%s205] sm:$0xf]
    %v207 = vld [vmem:[%s205 + $0x4] sm:$0xf]
    %v208 = vld [vmem:[%s205 + $0x8] sm:$0xf]
    %v209 = vld [vmem:[%s205 + $0xc] sm:$0xf]
    %v210 = vld [vmem:[%s205 + $0x10] sm:$0xf]
    %v211 = vld [vmem:[%s205 + $0x14] sm:$0xf]
    %v212 = vld [vmem:[%s205 + $0x18] sm:$0xf]
    %v213 = vld [vmem:[%s205 + $0x1c] sm:$0xf]
    %v214 = vld [vmem:[%s205 + $0x20] sm:$0xf]
    %v215 = vld [vmem:[%s205 + $0x24] sm:$0xf]
    %v216 = vld [vmem:[%s205 + $0x28] sm:$0xf]
    %v217 = vld [vmem:[%s205 + $0x2c] sm:$0xf]
    %v218 = vld [vmem:[%s205 + $0x30] sm:$0xf]
    %v219 = vld [vmem:[%s205 + $0x34] sm:$0xf]
    %v220 = vld [vmem:[%s205 + $0x38] sm:$0xf]
    %v221 = vld [vmem:[%s205 + $0x3c] sm:$0xf]
    %v222 = vld [vmem:[%s3 + $0x1] sm:$0x1]
    %v223 = vlaneseq
    %v224 = vshrl.u32 %v223, 7
    %v225 = vsub.s32 0, %v224
    %v226 = vrot.slane %v222, %v225
    %v243 = vunpack.c.l.b16 %v206
    %v244 = vunpack.c.l.b16 %v207
    %v245 = vunpack.c.l.b16 %v208
    %v246 = vunpack.c.l.b16 %v209
    %v247 = vunpack.c.l.b16 %v210
    %v248 = vunpack.c.l.b16 %v211
    %v249 = vunpack.c.l.b16 %v212
    %v250 = vunpack.c.l.b16 %v213
    %v251 = vunpack.c.l.b16 %v214
    %v252 = vunpack.c.l.b16 %v215
    %v253 = vunpack.c.l.b16 %v216
    %v254 = vunpack.c.l.b16 %v217
    %v255 = vunpack.c.l.b16 %v218
    %v256 = vunpack.c.l.b16 %v219
    %v257 = vunpack.c.l.b16 %v220
    %v258 = vunpack.c.l.b16 %v221
    %v259 = vpack.c.b16 %v244, %v243
    %v260 = vpack.c.b16 %v246, %v245
    %v261 = vpack.c.b16 %v248, %v247
    %v262 = vpack.c.b16 %v250, %v249
    %v263 = vpack.c.b16 %v252, %v251
    %v264 = vpack.c.b16 %v254, %v253
    %v265 = vpack.c.b16 %v256, %v255
    %v266 = vpack.c.b16 %v258, %v257
    %275 = vmatprep.subr.bf16.mxu0 0
    %276 = vmatpush1.bf16.msra.mxu0 %v259
    %277 = vmatprep.subr.bf16.mxu0 0
    %278 = vmatpush1.bf16.msra.mxu0 %v260
    %279 = vmatprep.subr.bf16.mxu0 0
    %280 = vmatpush1.bf16.msra.mxu0 %v261
    %281 = vmatprep.subr.bf16.mxu0 0
    %282 = vmatpush1.bf16.msra.mxu0 %v262
    %283 = vmatprep.subr.bf16.mxu0 0
    %284 = vmatpush1.bf16.msra.mxu0 %v263
    %285 = vmatprep.subr.bf16.mxu0 0
    %286 = vmatpush1.bf16.msra.mxu0 %v264
    %287 = vmatprep.subr.bf16.mxu0 0
    %288 = vmatpush1.bf16.msra.mxu0 %v265
    %289 = vmatprep.subr.bf16.mxu0 0
    %290 = vmatpush1.bf16.msra.mxu0 %v266
    %291 = vmatprep.subr.bf16.mxu0 0
    %292 = vmatpush1.bf16.msra.mxu0 0
    %293 = vmatprep.subr.bf16.mxu0 0
    %294 = vmatpush1.bf16.msra.mxu0 0
    %295 = vmatprep.subr.bf16.mxu0 0
    %296 = vmatpush1.bf16.msra.mxu0 0
    %297 = vmatprep.subr.bf16.mxu0 0
    %298 = vmatpush1.bf16.msra.mxu0 0
    %299 = vmatprep.subr.bf16.mxu0 0
    %300 = vmatpush1.bf16.msra.mxu0 0
    %301 = vmatprep.subr.bf16.mxu0 0
    %302 = vmatpush1.bf16.msra.mxu0 0
    %303 = vmatprep.subr.bf16.mxu0 0
    %304 = vmatpush1.bf16.msra.mxu0 0
    %305 = vmatprep.subr.bf16.mxu0 0
    %306 = vmatpush1.bf16.msra.mxu0 0
    %307 = vmatprep.mubr.bf16.mxu0 0
    %308 = vmatmul.mubr.bf16.gmra.mrb[0].mxu0 %v201
    %v309 = vpop.f32.mrb[0].mxu0
    %v310 = vadd.f32 %v226, %v309
    %v311 = vpop.f32.mrb[0].mxu0
    %v312 = vpop.f32.mrb[0].mxu0
    %v313 = vadd.f32 %v226, %v312
    %v314 = vpop.f32.mrb[0].mxu0
    %315 = vmatprep.mubr.bf16.mxu0 0
    %316 = vmatmul.mubr.bf16.gmra.mrb[0].mxu0 %v202
    %v317 = vpop.f32.mrb[0].mxu0
    %v318 = vadd.f32 %v226, %v317
    %v319 = vpop.f32.mrb[0].mxu0
    %v320 = vpop.f32.mrb[0].mxu0
    %v321 = vadd.f32 %v226, %v320
    %v322 = vpop.f32.mrb[0].mxu0
    %323 = vmatprep.mubr.bf16.mxu0 0
    %324 = vmatmul.mubr.bf16.gmra.mrb[0].mxu0 %v203
    %v325 = vpop.f32.mrb[0].mxu0
    %v326 = vadd.f32 %v226, %v325
    %v327 = vpop.f32.mrb[0].mxu0
    %v328 = vpop.f32.mrb[0].mxu0
    %v329 = vadd.f32 %v226, %v328
    %v330 = vpop.f32.mrb[0].mxu0
    %331 = vmatprep.mubr.bf16.mxu0 0
    %332 = vmatmul.mubr.bf16.gmra.mrb[0].mxu0 %v204
    %v333 = vpop.f32.mrb[0].mxu0
    %v334 = vadd.f32 %v226, %v333
    %v335 = vpop.f32.mrb[0].mxu0
    %v336 = vpop.f32.mrb[0].mxu0
    %v337 = vadd.f32 %v226, %v336
    %v338 = vpop.f32.mrb[0].mxu0
    %339 = vdwg.mxu0
    %v340 = vmax.f32 %v310, 0.0
    %v341 = vmax.f32 %v313, 0.0
    %v342 = vmax.f32 %v318, 0.0
    %v343 = vmax.f32 %v321, 0.0
    %v344 = vmax.f32 %v326, 0.0
    %v345 = vmax.f32 %v329, 0.0
    %v346 = vmax.f32 %v334, 0.0
    %v347 = vmax.f32 %v337, 0.0
    %v348 = vpack.c.bf16 %v341, %v340
    %v349 = vpack.c.bf16 %v343, %v342
    %v350 = vpack.c.bf16 %v345, %v344
    %v351 = vpack.c.bf16 %v347, %v346
    %s352 = scalar_lea.vmem %s1, 128
    %v353 = vld [vmem:[%s352] sm:$0xf]
    %v354 = vld [vmem:[%s352 + $0x4] sm:$0xf]
    %v355 = vld [vmem:[%s352 + $0x8] sm:$0xf]
    %v356 = vld [vmem:[%s352 + $0xc] sm:$0xf]
    %v357 = vld [vmem:[%s352 + $0x10] sm:$0xf]
    %v358 = vld [vmem:[%s352 + $0x14] sm:$0xf]
    %v359 = vld [vmem:[%s352 + $0x18] sm:$0xf]
    %v360 = vld [vmem:[%s352 + $0x1c] sm:$0xf]
    %v361 = vld [vmem:[%s352 + $0x20] sm:$0xf]
    %v362 = vld [vmem:[%s352 + $0x24] sm:$0xf]
    %v363 = vld [vmem:[%s352 + $0x28] sm:$0xf]
    %v364 = vld [vmem:[%s352 + $0x2c] sm:$0xf]
    %v365 = vld [vmem:[%s352 + $0x30] sm:$0xf]
    %v366 = vld [vmem:[%s352 + $0x34] sm:$0xf]
    %v367 = vld [vmem:[%s352 + $0x38] sm:$0xf]
    %v368 = vld [vmem:[%s352 + $0x3c] sm:$0xf]
    %v369 = vld [vmem:[%s3 + $0x2] sm:$0x1]
    %v370 = vlaneseq
    %v371 = vshrl.u32 %v370, 7
    %v372 = vsub.s32 0, %v371
    %v373 = vrot.slane %v369, %v372
    %v390 = vunpack.c.l.b16 %v353
    %v391 = vunpack.c.l.b16 %v354
    %v392 = vunpack.c.l.b16 %v355
    %v393 = vunpack.c.l.b16 %v356
    %v394 = vunpack.c.l.b16 %v357
    %v395 = vunpack.c.l.b16 %v358
    %v396 = vunpack.c.l.b16 %v359
    %v397 = vunpack.c.l.b16 %v360
    %v398 = vunpack.c.l.b16 %v361
    %v399 = vunpack.c.l.b16 %v362
    %v400 = vunpack.c.l.b16 %v363
    %v401 = vunpack.c.l.b16 %v364
    %v402 = vunpack.c.l.b16 %v365
    %v403 = vunpack.c.l.b16 %v366
    %v404 = vunpack.c.l.b16 %v367
    %v405 = vunpack.c.l.b16 %v368
    %v406 = vpack.c.b16 %v391, %v390
    %v407 = vpack.c.b16 %v393, %v392
    %v408 = vpack.c.b16 %v395, %v394
    %v409 = vpack.c.b16 %v397, %v396
    %v410 = vpack.c.b16 %v399, %v398
    %v411 = vpack.c.b16 %v401, %v400
    %v412 = vpack.c.b16 %v403, %v402
    %v413 = vpack.c.b16 %v405, %v404
    %422 = vmatprep.subr.bf16.mxu0 0
    %423 = vmatpush1.bf16.msra.mxu0 %v406
    %424 = vmatprep.subr.bf16.mxu0 0
    %425 = vmatpush1.bf16.msra.mxu0 %v407
    %426 = vmatprep.subr.bf16.mxu0 0
    %427 = vmatpush1.bf16.msra.mxu0 %v408
    %428 = vmatprep.subr.bf16.mxu0 0
    %429 = vmatpush1.bf16.msra.mxu0 %v409
    %430 = vmatprep.subr.bf16.mxu0 0
    %431 = vmatpush1.bf16.msra.mxu0 %v410
    %432 = vmatprep.subr.bf16.mxu0 0
    %433 = vmatpush1.bf16.msra.mxu0 %v411
    %434 = vmatprep.subr.bf16.mxu0 0
    %435 = vmatpush1.bf16.msra.mxu0 %v412
    %436 = vmatprep.subr.bf16.mxu0 0
    %437 = vmatpush1.bf16.msra.mxu0 %v413
    %438 = vmatprep.subr.bf16.mxu0 0
    %439 = vmatpush1.bf16.msra.mxu0 0
    %440 = vmatprep.subr.bf16.mxu0 0
    %441 = vmatpush1.bf16.msra.mxu0 0
    %442 = vmatprep.subr.bf16.mxu0 0
    %443 = vmatpush1.bf16.msra.mxu0 0
    %444 = vmatprep.subr.bf16.mxu0 0
    %445 = vmatpush1.bf16.msra.mxu0 0
    %446 = vmatprep.subr.bf16.mxu0 0
    %447 = vmatpush1.bf16.msra.mxu0 0
    %448 = vmatprep.subr.bf16.mxu0 0
    %449 = vmatpush1.bf16.msra.mxu0 0
    %450 = vmatprep.subr.bf16.mxu0 0
    %451 = vmatpush1.bf16.msra.mxu0 0
    %452 = vmatprep.subr.bf16.mxu0 0
    %453 = vmatpush1.bf16.msra.mxu0 0
    %454 = vmatprep.mubr.bf16.mxu0 0
    %455 = vmatmul.mubr.bf16.gmra.mrb[0].mxu0 %v348
    %v456 = vpop.f32.mrb[0].mxu0
    %v457 = vadd.f32 %v373, %v456
    %v458 = vpop.f32.mrb[0].mxu0
    %v459 = vpop.f32.mrb[0].mxu0
    %v460 = vadd.f32 %v373, %v459
    %v461 = vpop.f32.mrb[0].mxu0
    %462 = vmatprep.mubr.bf16.mxu0 0
    %463 = vmatmul.mubr.bf16.gmra.mrb[0].mxu0 %v349
    %v464 = vpop.f32.mrb[0].mxu0
    %v465 = vadd.f32 %v373, %v464
    %v466 = vpop.f32.mrb[0].mxu0
    %v467 = vpop.f32.mrb[0].mxu0
    %v468 = vadd.f32 %v373, %v467
    %v469 = vpop.f32.mrb[0].mxu0
    %470 = vmatprep.mubr.bf16.mxu0 0
    %471 = vmatmul.mubr.bf16.gmra.mrb[0].mxu0 %v350
    %v472 = vpop.f32.mrb[0].mxu0
    %v473 = vadd.f32 %v373, %v472
    %v474 = vpop.f32.mrb[0].mxu0
    %v475 = vpop.f32.mrb[0].mxu0
    %v476 = vadd.f32 %v373, %v475
    %v477 = vpop.f32.mrb[0].mxu0
    %478 = vmatprep.mubr.bf16.mxu0 0
    %479 = vmatmul.mubr.bf16.gmra.mrb[0].mxu0 %v351
    %v480 = vpop.f32.mrb[0].mxu0
    %v481 = vadd.f32 %v373, %v480
    %v482 = vpop.f32.mrb[0].mxu0
    %v483 = vpop.f32.mrb[0].mxu0
    %v484 = vadd.f32 %v373, %v483
    %v485 = vpop.f32.mrb[0].mxu0
    %486 = vdwg.mxu0
    %v487 = vadd.f32 %v457, %v193
    %v488 = vadd.f32 %v460, %v194
    %v489 = vadd.f32 %v465, %v195
    %v490 = vadd.f32 %v468, %v196
    %v491 = vadd.f32 %v473, %v197
    %v492 = vadd.f32 %v476, %v198
    %v493 = vadd.f32 %v481, %v199
    %v494 = vadd.f32 %v484, %v200
    %v495 = vmax.f32 %v487, 0.0
    %v496 = vmax.f32 %v488, 0.0
    %v497 = vmax.f32 %v489, 0.0
    %v498 = vmax.f32 %v490, 0.0
    %v499 = vmax.f32 %v491, 0.0
    %v500 = vmax.f32 %v492, 0.0
    %v501 = vmax.f32 %v493, 0.0
    %v502 = vmax.f32 %v494, 0.0
    %v503 = vpack.c.bf16 %v496, %v495
    %v504 = vpack.c.bf16 %v498, %v497
    %v505 = vpack.c.bf16 %v500, %v499
    %v506 = vpack.c.bf16 %v502, %v501
    %v507 = vld [vmem:[%s2] sm:$0xff]
    %v508 = vld [vmem:[%s2 + $0x8] sm:$0xff]
    %v509 = vld [vmem:[%s2 + $0x10] sm:$0xff]
    %v510 = vld [vmem:[%s2 + $0x18] sm:$0xff]
    %v511 = vld [vmem:[%s2 + $0x20] sm:$0xff]
    %v512 = vld [vmem:[%s2 + $0x28] sm:$0xff]
    %v513 = vld [vmem:[%s2 + $0x30] sm:$0xff]
    %v514 = vld [vmem:[%s2 + $0x38] sm:$0xff]
    %v515 = vld [vmem:[%s2 + $0x40] sm:$0xff]
    %v516 = vld [vmem:[%s2 + $0x48] sm:$0xff]
    %v517 = vld [vmem:[%s2 + $0x50] sm:$0xff]
    %v518 = vld [vmem:[%s2 + $0x58] sm:$0xff]
    %v519 = vld [vmem:[%s2 + $0x60] sm:$0xff]
    %v520 = vld [vmem:[%s2 + $0x68] sm:$0xff]
    %v521 = vld [vmem:[%s2 + $0x70] sm:$0xff]
    %v522 = vld [vmem:[%s2 + $0x78] sm:$0xff]
    %v539 = vunpack.c.l.b16 %v507
    %v540 = vunpack.c.h.b16 %v507
    %v541 = vunpack.c.l.b16 %v508
    %v542 = vunpack.c.h.b16 %v508
    %v543 = vunpack.c.l.b16 %v509
    %v544 = vunpack.c.h.b16 %v509
    %v545 = vunpack.c.l.b16 %v510
    %v546 = vunpack.c.h.b16 %v510
    %v547 = vunpack.c.l.b16 %v511
    %v548 = vunpack.c.h.b16 %v511
    %v549 = vunpack.c.l.b16 %v512
    %v550 = vunpack.c.h.b16 %v512
    %v551 = vunpack.c.l.b16 %v513
    %v552 = vunpack.c.h.b16 %v513
    %v553 = vunpack.c.l.b16 %v514
    %v554 = vunpack.c.h.b16 %v514
    %v555 = vunpack.c.l.b16 %v515
    %v556 = vunpack.c.h.b16 %v515
    %v557 = vunpack.c.l.b16 %v516
    %v558 = vunpack.c.h.b16 %v516
    %v559 = vunpack.c.l.b16 %v517
    %v560 = vunpack.c.h.b16 %v517
    %v561 = vunpack.c.l.b16 %v518
    %v562 = vunpack.c.h.b16 %v518
    %v563 = vunpack.c.l.b16 %v519
    %v564 = vunpack.c.h.b16 %v519
    %v565 = vunpack.c.l.b16 %v520
    %v566 = vunpack.c.h.b16 %v520
    %v567 = vunpack.c.l.b16 %v521
    %v568 = vunpack.c.h.b16 %v521
    %v569 = vunpack.c.l.b16 %v522
    %v570 = vunpack.c.h.b16 %v522
    %v571 = vpack.c.b16 %v541, %v539
    %v572 = vpack.c.b16 %v542, %v540
    %v573 = vpack.c.b16 %v545, %v543
    %v574 = vpack.c.b16 %v546, %v544
    %v575 = vpack.c.b16 %v549, %v547
    %v576 = vpack.c.b16 %v550, %v548
    %v577 = vpack.c.b16 %v553, %v551
    %v578 = vpack.c.b16 %v554, %v552
    %v579 = vpack.c.b16 %v557, %v555
    %v580 = vpack.c.b16 %v558, %v556
    %v581 = vpack.c.b16 %v561, %v559
    %v582 = vpack.c.b16 %v562, %v560
    %v583 = vpack.c.b16 %v565, %v563
    %v584 = vpack.c.b16 %v566, %v564
    %v585 = vpack.c.b16 %v569, %v567
    %v586 = vpack.c.b16 %v570, %v568
    %603 = vmatprep.subr.bf16.mxu0 %v572
    %604 = vmatpush1.bf16.msra.mxu0 %v571
    %605 = vmatprep.subr.bf16.mxu0 %v574
    %606 = vmatpush1.bf16.msra.mxu0 %v573
    %607 = vmatprep.subr.bf16.mxu0 %v576
    %608 = vmatpush1.bf16.msra.mxu0 %v575
    %609 = vmatprep.subr.bf16.mxu0 %v578
    %610 = vmatpush1.bf16.msra.mxu0 %v577
    %611 = vmatprep.subr.bf16.mxu0 %v580
    %612 = vmatpush1.bf16.msra.mxu0 %v579
    %613 = vmatprep.subr.bf16.mxu0 %v582
    %614 = vmatpush1.bf16.msra.mxu0 %v581
    %615 = vmatprep.subr.bf16.mxu0 %v584
    %616 = vmatpush1.bf16.msra.mxu0 %v583
    %617 = vmatprep.subr.bf16.mxu0 %v586
    %618 = vmatpush1.bf16.msra.mxu0 %v585
    %619 = vmatprep.subr.bf16.mxu0 0
    %620 = vmatpush1.bf16.msra.mxu0 0
    %621 = vmatprep.subr.bf16.mxu0 0
    %622 = vmatpush1.bf16.msra.mxu0 0
    %623 = vmatprep.subr.bf16.mxu0 0
    %624 = vmatpush1.bf16.msra.mxu0 0
    %625 = vmatprep.subr.bf16.mxu0 0
    %626 = vmatpush1.bf16.msra.mxu0 0
    %627 = vmatprep.subr.bf16.mxu0 0
    %628 = vmatpush1.bf16.msra.mxu0 0
    %629 = vmatprep.subr.bf16.mxu0 0
    %630 = vmatpush1.bf16.msra.mxu0 0
    %631 = vmatprep.subr.bf16.mxu0 0
    %632 = vmatpush1.bf16.msra.mxu0 0
    %633 = vmatprep.subr.bf16.mxu0 0
    %634 = vmatpush1.bf16.msra.mxu0 0
    %635 = vmatprep.mubr.bf16.mxu0 0
    %636 = vmatmul.mubr.bf16.gmra.mrb[0].mxu0 %v503
    %v637 = vpop.f32.mrb[0].mxu0
    %v638 = vadd.f32 0.0, %v637
    %v639 = vpop.f32.mrb[0].mxu0
    %v640 = vadd.f32 0.0, %v639
    %v641 = vpop.f32.mrb[0].mxu0
    %v642 = vadd.f32 0.0, %v641
    %v643 = vpop.f32.mrb[0].mxu0
    %v644 = vadd.f32 0.0, %v643
    %645 = vmatprep.mubr.bf16.mxu0 0
    %646 = vmatmul.mubr.bf16.gmra.mrb[0].mxu0 %v504
    %v647 = vpop.f32.mrb[0].mxu0
    %v648 = vadd.f32 0.0, %v647
    %v649 = vpop.f32.mrb[0].mxu0
    %v650 = vadd.f32 0.0, %v649
    %v651 = vpop.f32.mrb[0].mxu0
    %v652 = vadd.f32 0.0, %v651
    %v653 = vpop.f32.mrb[0].mxu0
    %v654 = vadd.f32 0.0, %v653
    %655 = vmatprep.mubr.bf16.mxu0 0
    %656 = vmatmul.mubr.bf16.gmra.mrb[0].mxu0 %v505
    %v657 = vpop.f32.mrb[0].mxu0
    %v658 = vadd.f32 0.0, %v657
    %v659 = vpop.f32.mrb[0].mxu0
    %v660 = vadd.f32 0.0, %v659
    %v661 = vpop.f32.mrb[0].mxu0
    %v662 = vadd.f32 0.0, %v661
    %v663 = vpop.f32.mrb[0].mxu0
    %v664 = vadd.f32 0.0, %v663
    %665 = vmatprep.mubr.bf16.mxu0 0
    %666 = vmatmul.mubr.bf16.gmra.mrb[0].mxu0 %v506
    %v667 = vpop.f32.mrb[0].mxu0
    %v668 = vadd.f32 0.0, %v667
    %v669 = vpop.f32.mrb[0].mxu0
    %v670 = vadd.f32 0.0, %v669
    %v671 = vpop.f32.mrb[0].mxu0
    %v672 = vadd.f32 0.0, %v671
    %v673 = vpop.f32.mrb[0].mxu0
    %v674 = vadd.f32 0.0, %v673
    %675 = vdwg.mxu0
    %v676 = vrot.slane %v640, 3
    %v677 = vrot.slane %v644, 3
    %v678 = vrot.slane %v650, 3
    %v679 = vrot.slane %v654, 3
    %v680 = vrot.slane %v660, 3
    %v681 = vrot.slane %v664, 3
    %v682 = vrot.slane %v670, 3
    %v683 = vrot.slane %v674, 3
    %v684 = vlaneseq
    %v685 = vshrl.u32 %v684, 7
    %vm686 = vcmp.lt.s32.totalorder %v685, 5
    %v687 = vsel %vm686, %v682, %v683
    %v688 = vsel %vm686, %v681, %v682
    %v689 = vsel %vm686, %v680, %v681
    %v690 = vsel %vm686, %v679, %v680
    %v691 = vsel %vm686, %v678, %v679
    %v692 = vsel %vm686, %v677, %v678
    %v693 = vsel %vm686, %v676, %v677
    %v694 = vsel %vm686, %v683, %v676
    %v695 = vadd.f32 %v638, %v693
    %v696 = vadd.f32 %v642, %v692
    %v697 = vadd.f32 %v648, %v691
    %v698 = vadd.f32 %v652, %v690
    %v699 = vadd.f32 %v658, %v689
    %v700 = vadd.f32 %v662, %v688
    %v701 = vadd.f32 %v668, %v687
    %v702 = vadd.f32 %v672, %v694
    %v703 = vld [vmem:[%s3 + $0x3] sm:$0x1]
    %v704 = vlaneseq
    %v705 = vshrl.u32 %v704, 7
    %v706 = vsub.s32 0, %v705
    %v707 = vrot.slane %v703, %v706
    %v708 = vadd.f32 %v695, %v707
    %v709 = vadd.f32 %v696, %v707
    %v710 = vadd.f32 %v697, %v707
    %v711 = vadd.f32 %v698, %v707
    %v712 = vadd.f32 %v699, %v707
    %v713 = vadd.f32 %v700, %v707
    %v714 = vadd.f32 %v701, %v707
    %v715 = vadd.f32 %v702, %v707
    %v716 = vmax.f32 %v708, 0.0
    %v717 = vmax.f32 %v709, 0.0
    %v718 = vmax.f32 %v710, 0.0
    %v719 = vmax.f32 %v711, 0.0
    %v720 = vmax.f32 %v712, 0.0
    %v721 = vmax.f32 %v713, 0.0
    %v722 = vmax.f32 %v714, 0.0
    %v723 = vmax.f32 %v715, 0.0
    %v724 = vpack.c.bf16 %v717, %v716
    %v725 = vpack.c.bf16 %v719, %v718
    %v726 = vpack.c.bf16 %v721, %v720
    %v727 = vpack.c.bf16 %v723, %v722
    %s728 = scalar_lea.vmem %s1, 192
    %v729 = vld [vmem:[%s728] sm:$0xf]
    %v730 = vld [vmem:[%s728 + $0x4] sm:$0xf]
    %v731 = vld [vmem:[%s728 + $0x8] sm:$0xf]
    %v732 = vld [vmem:[%s728 + $0xc] sm:$0xf]
    %v733 = vld [vmem:[%s728 + $0x10] sm:$0xf]
    %v734 = vld [vmem:[%s728 + $0x14] sm:$0xf]
    %v735 = vld [vmem:[%s728 + $0x18] sm:$0xf]
    %v736 = vld [vmem:[%s728 + $0x1c] sm:$0xf]
    %v737 = vld [vmem:[%s728 + $0x20] sm:$0xf]
    %v738 = vld [vmem:[%s728 + $0x24] sm:$0xf]
    %v739 = vld [vmem:[%s728 + $0x28] sm:$0xf]
    %v740 = vld [vmem:[%s728 + $0x2c] sm:$0xf]
    %v741 = vld [vmem:[%s728 + $0x30] sm:$0xf]
    %v742 = vld [vmem:[%s728 + $0x34] sm:$0xf]
    %v743 = vld [vmem:[%s728 + $0x38] sm:$0xf]
    %v744 = vld [vmem:[%s728 + $0x3c] sm:$0xf]
    %v745 = vld [vmem:[%s3 + $0x4] sm:$0x1]
    %v746 = vlaneseq
    %v747 = vshrl.u32 %v746, 7
    %v748 = vsub.s32 0, %v747
    %v749 = vrot.slane %v745, %v748
    %v766 = vunpack.c.l.b16 %v729
    %v767 = vunpack.c.l.b16 %v730
    %v768 = vunpack.c.l.b16 %v731
    %v769 = vunpack.c.l.b16 %v732
    %v770 = vunpack.c.l.b16 %v733
    %v771 = vunpack.c.l.b16 %v734
    %v772 = vunpack.c.l.b16 %v735
    %v773 = vunpack.c.l.b16 %v736
    %v774 = vunpack.c.l.b16 %v737
    %v775 = vunpack.c.l.b16 %v738
    %v776 = vunpack.c.l.b16 %v739
    %v777 = vunpack.c.l.b16 %v740
    %v778 = vunpack.c.l.b16 %v741
    %v779 = vunpack.c.l.b16 %v742
    %v780 = vunpack.c.l.b16 %v743
    %v781 = vunpack.c.l.b16 %v744
    %v782 = vpack.c.b16 %v767, %v766
    %v783 = vpack.c.b16 %v769, %v768
    %v784 = vpack.c.b16 %v771, %v770
    %v785 = vpack.c.b16 %v773, %v772
    %v786 = vpack.c.b16 %v775, %v774
    %v787 = vpack.c.b16 %v777, %v776
    %v788 = vpack.c.b16 %v779, %v778
    %v789 = vpack.c.b16 %v781, %v780
    %798 = vmatprep.subr.bf16.mxu0 0
    %799 = vmatpush1.bf16.msra.mxu0 %v782
    %800 = vmatprep.subr.bf16.mxu0 0
    %801 = vmatpush1.bf16.msra.mxu0 %v783
    %802 = vmatprep.subr.bf16.mxu0 0
    %803 = vmatpush1.bf16.msra.mxu0 %v784
    %804 = vmatprep.subr.bf16.mxu0 0
    %805 = vmatpush1.bf16.msra.mxu0 %v785
    %806 = vmatprep.subr.bf16.mxu0 0
    %807 = vmatpush1.bf16.msra.mxu0 %v786
    %808 = vmatprep.subr.bf16.mxu0 0
    %809 = vmatpush1.bf16.msra.mxu0 %v787
    %810 = vmatprep.subr.bf16.mxu0 0
    %811 = vmatpush1.bf16.msra.mxu0 %v788
    %812 = vmatprep.subr.bf16.mxu0 0
    %813 = vmatpush1.bf16.msra.mxu0 %v789
    %814 = vmatprep.subr.bf16.mxu0 0
    %815 = vmatpush1.bf16.msra.mxu0 0
    %816 = vmatprep.subr.bf16.mxu0 0
    %817 = vmatpush1.bf16.msra.mxu0 0
    %818 = vmatprep.subr.bf16.mxu0 0
    %819 = vmatpush1.bf16.msra.mxu0 0
    %820 = vmatprep.subr.bf16.mxu0 0
    %821 = vmatpush1.bf16.msra.mxu0 0
    %822 = vmatprep.subr.bf16.mxu0 0
    %823 = vmatpush1.bf16.msra.mxu0 0
    %824 = vmatprep.subr.bf16.mxu0 0
    %825 = vmatpush1.bf16.msra.mxu0 0
    %826 = vmatprep.subr.bf16.mxu0 0
    %827 = vmatpush1.bf16.msra.mxu0 0
    %828 = vmatprep.subr.bf16.mxu0 0
    %829 = vmatpush1.bf16.msra.mxu0 0
    %830 = vmatprep.mubr.bf16.mxu0 0
    %831 = vmatmul.mubr.bf16.gmra.mrb[0].mxu0 %v724
    %v832 = vpop.f32.mrb[0].mxu0
    %v833 = vadd.f32 %v749, %v832
    %v834 = vpop.f32.mrb[0].mxu0
    %v835 = vpop.f32.mrb[0].mxu0
    %v836 = vadd.f32 %v749, %v835
    %v837 = vpop.f32.mrb[0].mxu0
    %838 = vmatprep.mubr.bf16.mxu0 0
    %839 = vmatmul.mubr.bf16.gmra.mrb[0].mxu0 %v725
    %v840 = vpop.f32.mrb[0].mxu0
    %v841 = vadd.f32 %v749, %v840
    %v842 = vpop.f32.mrb[0].mxu0
    %v843 = vpop.f32.mrb[0].mxu0
    %v844 = vadd.f32 %v749, %v843
    %v845 = vpop.f32.mrb[0].mxu0
    %846 = vmatprep.mubr.bf16.mxu0 0
    %847 = vmatmul.mubr.bf16.gmra.mrb[0].mxu0 %v726
    %v848 = vpop.f32.mrb[0].mxu0
    %v849 = vadd.f32 %v749, %v848
    %v850 = vpop.f32.mrb[0].mxu0
    %v851 = vpop.f32.mrb[0].mxu0
    %v852 = vadd.f32 %v749, %v851
    %v853 = vpop.f32.mrb[0].mxu0
    %854 = vmatprep.mubr.bf16.mxu0 0
    %855 = vmatmul.mubr.bf16.gmra.mrb[0].mxu0 %v727
    %v856 = vpop.f32.mrb[0].mxu0
    %v857 = vadd.f32 %v749, %v856
    %v858 = vpop.f32.mrb[0].mxu0
    %v859 = vpop.f32.mrb[0].mxu0
    %v860 = vadd.f32 %v749, %v859
    %v861 = vpop.f32.mrb[0].mxu0
    %862 = vdwg.mxu0
    %v863 = vmax.f32 %v833, 0.0
    %v864 = vmax.f32 %v836, 0.0
    %v865 = vmax.f32 %v841, 0.0
    %v866 = vmax.f32 %v844, 0.0
    %v867 = vmax.f32 %v849, 0.0
    %v868 = vmax.f32 %v852, 0.0
    %v869 = vmax.f32 %v857, 0.0
    %v870 = vmax.f32 %v860, 0.0
    %v871 = vpack.c.bf16 %v864, %v863
    %v872 = vpack.c.bf16 %v866, %v865
    %v873 = vpack.c.bf16 %v868, %v867
    %v874 = vpack.c.bf16 %v870, %v869
    %s875 = scalar_lea.vmem %s1, 256
    %v876 = vld [vmem:[%s875] sm:$0xf]
    %v877 = vld [vmem:[%s875 + $0x4] sm:$0xf]
    %v878 = vld [vmem:[%s875 + $0x8] sm:$0xf]
    %v879 = vld [vmem:[%s875 + $0xc] sm:$0xf]
    %v880 = vld [vmem:[%s875 + $0x10] sm:$0xf]
    %v881 = vld [vmem:[%s875 + $0x14] sm:$0xf]
    %v882 = vld [vmem:[%s875 + $0x18] sm:$0xf]
    %v883 = vld [vmem:[%s875 + $0x1c] sm:$0xf]
    %v884 = vld [vmem:[%s875 + $0x20] sm:$0xf]
    %v885 = vld [vmem:[%s875 + $0x24] sm:$0xf]
    %v886 = vld [vmem:[%s875 + $0x28] sm:$0xf]
    %v887 = vld [vmem:[%s875 + $0x2c] sm:$0xf]
    %v888 = vld [vmem:[%s875 + $0x30] sm:$0xf]
    %v889 = vld [vmem:[%s875 + $0x34] sm:$0xf]
    %v890 = vld [vmem:[%s875 + $0x38] sm:$0xf]
    %v891 = vld [vmem:[%s875 + $0x3c] sm:$0xf]
    %v892 = vld [vmem:[%s3 + $0x5] sm:$0x1]
    %v893 = vlaneseq
    %v894 = vshrl.u32 %v893, 7
    %v895 = vsub.s32 0, %v894
    %v896 = vrot.slane %v892, %v895
    %v913 = vunpack.c.l.b16 %v876
    %v914 = vunpack.c.l.b16 %v877
    %v915 = vunpack.c.l.b16 %v878
    %v916 = vunpack.c.l.b16 %v879
    %v917 = vunpack.c.l.b16 %v880
    %v918 = vunpack.c.l.b16 %v881
    %v919 = vunpack.c.l.b16 %v882
    %v920 = vunpack.c.l.b16 %v883
    %v921 = vunpack.c.l.b16 %v884
    %v922 = vunpack.c.l.b16 %v885
    %v923 = vunpack.c.l.b16 %v886
    %v924 = vunpack.c.l.b16 %v887
    %v925 = vunpack.c.l.b16 %v888
    %v926 = vunpack.c.l.b16 %v889
    %v927 = vunpack.c.l.b16 %v890
    %v928 = vunpack.c.l.b16 %v891
    %v929 = vpack.c.b16 %v914, %v913
    %v930 = vpack.c.b16 %v916, %v915
    %v931 = vpack.c.b16 %v918, %v917
    %v932 = vpack.c.b16 %v920, %v919
    %v933 = vpack.c.b16 %v922, %v921
    %v934 = vpack.c.b16 %v924, %v923
    %v935 = vpack.c.b16 %v926, %v925
    %v936 = vpack.c.b16 %v928, %v927
    %945 = vmatprep.subr.bf16.mxu0 0
    %946 = vmatpush1.bf16.msra.mxu0 %v929
    %947 = vmatprep.subr.bf16.mxu0 0
    %948 = vmatpush1.bf16.msra.mxu0 %v930
    %949 = vmatprep.subr.bf16.mxu0 0
    %950 = vmatpush1.bf16.msra.mxu0 %v931
    %951 = vmatprep.subr.bf16.mxu0 0
    %952 = vmatpush1.bf16.msra.mxu0 %v932
    %953 = vmatprep.subr.bf16.mxu0 0
    %954 = vmatpush1.bf16.msra.mxu0 %v933
    %955 = vmatprep.subr.bf16.mxu0 0
    %956 = vmatpush1.bf16.msra.mxu0 %v934
    %957 = vmatprep.subr.bf16.mxu0 0
    %958 = vmatpush1.bf16.msra.mxu0 %v935
    %959 = vmatprep.subr.bf16.mxu0 0
    %960 = vmatpush1.bf16.msra.mxu0 %v936
    %961 = vmatprep.subr.bf16.mxu0 0
    %962 = vmatpush1.bf16.msra.mxu0 0
    %963 = vmatprep.subr.bf16.mxu0 0
    %964 = vmatpush1.bf16.msra.mxu0 0
    %965 = vmatprep.subr.bf16.mxu0 0
    %966 = vmatpush1.bf16.msra.mxu0 0
    %967 = vmatprep.subr.bf16.mxu0 0
    %968 = vmatpush1.bf16.msra.mxu0 0
    %969 = vmatprep.subr.bf16.mxu0 0
    %970 = vmatpush1.bf16.msra.mxu0 0
    %971 = vmatprep.subr.bf16.mxu0 0
    %972 = vmatpush1.bf16.msra.mxu0 0
    %973 = vmatprep.subr.bf16.mxu0 0
    %974 = vmatpush1.bf16.msra.mxu0 0
    %975 = vmatprep.subr.bf16.mxu0 0
    %976 = vmatpush1.bf16.msra.mxu0 0
    %977 = vmatprep.mubr.bf16.mxu0 0
    %978 = vmatmul.mubr.bf16.gmra.mrb[0].mxu0 %v871
    %v979 = vpop.f32.mrb[0].mxu0
    %v980 = vadd.f32 %v896, %v979
    %v981 = vpop.f32.mrb[0].mxu0
    %v982 = vpop.f32.mrb[0].mxu0
    %v983 = vadd.f32 %v896, %v982
    %v984 = vpop.f32.mrb[0].mxu0
    %985 = vmatprep.mubr.bf16.mxu0 0
    %986 = vmatmul.mubr.bf16.gmra.mrb[0].mxu0 %v872
    %v987 = vpop.f32.mrb[0].mxu0
    %v988 = vadd.f32 %v896, %v987
    %v989 = vpop.f32.mrb[0].mxu0
    %v990 = vpop.f32.mrb[0].mxu0
    %v991 = vadd.f32 %v896, %v990
    %v992 = vpop.f32.mrb[0].mxu0
    %993 = vmatprep.mubr.bf16.mxu0 0
    %994 = vmatmul.mubr.bf16.gmra.mrb[0].mxu0 %v873
    %v995 = vpop.f32.mrb[0].mxu0
    %v996 = vadd.f32 %v896, %v995
    %v997 = vpop.f32.mrb[0].mxu0
    %v998 = vpop.f32.mrb[0].mxu0
    %v999 = vadd.f32 %v896, %v998
    %v1000 = vpop.f32.mrb[0].mxu0
    %1001 = vmatprep.mubr.bf16.mxu0 0
    %1002 = vmatmul.mubr.bf16.gmra.mrb[0].mxu0 %v874
    %v1003 = vpop.f32.mrb[0].mxu0
    %v1004 = vadd.f32 %v896, %v1003
    %v1005 = vpop.f32.mrb[0].mxu0
    %v1006 = vpop.f32.mrb[0].mxu0
    %v1007 = vadd.f32 %v896, %v1006
    %v1008 = vpop.f32.mrb[0].mxu0
    %1009 = vdwg.mxu0
    %v1010 = vadd.f32 %v980, %v716
    %v1011 = vadd.f32 %v983, %v717
    %v1012 = vadd.f32 %v988, %v718
    %v1013 = vadd.f32 %v991, %v719
    %v1014 = vadd.f32 %v996, %v720
    %v1015 = vadd.f32 %v999, %v721
    %v1016 = vadd.f32 %v1004, %v722
    %v1017 = vadd.f32 %v1007, %v723
    %v1018 = vmax.f32 %v1010, 0.0
    %v1019 = vmax.f32 %v1011, 0.0
    %v1020 = vmax.f32 %v1012, 0.0
    %v1021 = vmax.f32 %v1013, 0.0
    %v1022 = vmax.f32 %v1014, 0.0
    %v1023 = vmax.f32 %v1015, 0.0
    %v1024 = vmax.f32 %v1016, 0.0
    %v1025 = vmax.f32 %v1017, 0.0
    %v1026 = vpack.c.bf16 %v1019, %v1018
    %v1027 = vpack.c.bf16 %v1021, %v1020
    %v1028 = vpack.c.bf16 %v1023, %v1022
    %v1029 = vpack.c.bf16 %v1025, %v1024
    %s1030 = scalar_lea.vmem %s2, 128
    %v1031 = vld [vmem:[%s1030] sm:$0xff]
    %v1032 = vld [vmem:[%s1030 + $0x8] sm:$0xff]
    %v1033 = vld [vmem:[%s1030 + $0x10] sm:$0xff]
    %v1034 = vld [vmem:[%s1030 + $0x18] sm:$0xff]
    %v1035 = vld [vmem:[%s1030 + $0x20] sm:$0xff]
    %v1036 = vld [vmem:[%s1030 + $0x28] sm:$0xff]
    %v1037 = vld [vmem:[%s1030 + $0x30] sm:$0xff]
    %v1038 = vld [vmem:[%s1030 + $0x38] sm:$0xff]
    %v1039 = vld [vmem:[%s1030 + $0x40] sm:$0xff]
    %v1040 = vld [vmem:[%s1030 + $0x48] sm:$0xff]
    %v1041 = vld [vmem:[%s1030 + $0x50] sm:$0xff]
    %v1042 = vld [vmem:[%s1030 + $0x58] sm:$0xff]
    %v1043 = vld [vmem:[%s1030 + $0x60] sm:$0xff]
    %v1044 = vld [vmem:[%s1030 + $0x68] sm:$0xff]
    %v1045 = vld [vmem:[%s1030 + $0x70] sm:$0xff]
    %v1046 = vld [vmem:[%s1030 + $0x78] sm:$0xff]
    %v1063 = vunpack.c.l.b16 %v1031
    %v1064 = vunpack.c.h.b16 %v1031
    %v1065 = vunpack.c.l.b16 %v1032
    %v1066 = vunpack.c.h.b16 %v1032
    %v1067 = vunpack.c.l.b16 %v1033
    %v1068 = vunpack.c.h.b16 %v1033
    %v1069 = vunpack.c.l.b16 %v1034
    %v1070 = vunpack.c.h.b16 %v1034
    %v1071 = vunpack.c.l.b16 %v1035
    %v1072 = vunpack.c.h.b16 %v1035
    %v1073 = vunpack.c.l.b16 %v1036
    %v1074 = vunpack.c.h.b16 %v1036
    %v1075 = vunpack.c.l.b16 %v1037
    %v1076 = vunpack.c.h.b16 %v1037
    %v1077 = vunpack.c.l.b16 %v1038
    %v1078 = vunpack.c.h.b16 %v1038
    %v1079 = vunpack.c.l.b16 %v1039
    %v1080 = vunpack.c.h.b16 %v1039
    %v1081 = vunpack.c.l.b16 %v1040
    %v1082 = vunpack.c.h.b16 %v1040
    %v1083 = vunpack.c.l.b16 %v1041
    %v1084 = vunpack.c.h.b16 %v1041
    %v1085 = vunpack.c.l.b16 %v1042
    %v1086 = vunpack.c.h.b16 %v1042
    %v1087 = vunpack.c.l.b16 %v1043
    %v1088 = vunpack.c.h.b16 %v1043
    %v1089 = vunpack.c.l.b16 %v1044
    %v1090 = vunpack.c.h.b16 %v1044
    %v1091 = vunpack.c.l.b16 %v1045
    %v1092 = vunpack.c.h.b16 %v1045
    %v1093 = vunpack.c.l.b16 %v1046
    %v1094 = vunpack.c.h.b16 %v1046
    %v1095 = vpack.c.b16 %v1065, %v1063
    %v1096 = vpack.c.b16 %v1066, %v1064
    %v1097 = vpack.c.b16 %v1069, %v1067
    %v1098 = vpack.c.b16 %v1070, %v1068
    %v1099 = vpack.c.b16 %v1073, %v1071
    %v1100 = vpack.c.b16 %v1074, %v1072
    %v1101 = vpack.c.b16 %v1077, %v1075
    %v1102 = vpack.c.b16 %v1078, %v1076
    %v1103 = vpack.c.b16 %v1081, %v1079
    %v1104 = vpack.c.b16 %v1082, %v1080
    %v1105 = vpack.c.b16 %v1085, %v1083
    %v1106 = vpack.c.b16 %v1086, %v1084
    %v1107 = vpack.c.b16 %v1089, %v1087
    %v1108 = vpack.c.b16 %v1090, %v1088
    %v1109 = vpack.c.b16 %v1093, %v1091
    %v1110 = vpack.c.b16 %v1094, %v1092
    %1127 = vmatprep.subr.bf16.mxu0 %v1096
    %1128 = vmatpush1.bf16.msra.mxu0 %v1095
    %1129 = vmatprep.subr.bf16.mxu0 %v1098
    %1130 = vmatpush1.bf16.msra.mxu0 %v1097
    %1131 = vmatprep.subr.bf16.mxu0 %v1100
    %1132 = vmatpush1.bf16.msra.mxu0 %v1099
    %1133 = vmatprep.subr.bf16.mxu0 %v1102
    %1134 = vmatpush1.bf16.msra.mxu0 %v1101
    %1135 = vmatprep.subr.bf16.mxu0 %v1104
    %1136 = vmatpush1.bf16.msra.mxu0 %v1103
    %1137 = vmatprep.subr.bf16.mxu0 %v1106
    %1138 = vmatpush1.bf16.msra.mxu0 %v1105
    %1139 = vmatprep.subr.bf16.mxu0 %v1108
    %1140 = vmatpush1.bf16.msra.mxu0 %v1107
    %1141 = vmatprep.subr.bf16.mxu0 %v1110
    %1142 = vmatpush1.bf16.msra.mxu0 %v1109
    %1143 = vmatprep.subr.bf16.mxu0 0
    %1144 = vmatpush1.bf16.msra.mxu0 0
    %1145 = vmatprep.subr.bf16.mxu0 0
    %1146 = vmatpush1.bf16.msra.mxu0 0
    %1147 = vmatprep.subr.bf16.mxu0 0
    %1148 = vmatpush1.bf16.msra.mxu0 0
    %1149 = vmatprep.subr.bf16.mxu0 0
    %1150 = vmatpush1.bf16.msra.mxu0 0
    %1151 = vmatprep.subr.bf16.mxu0 0
    %1152 = vmatpush1.bf16.msra.mxu0 0
    %1153 = vmatprep.subr.bf16.mxu0 0
    %1154 = vmatpush1.bf16.msra.mxu0 0
    %1155 = vmatprep.subr.bf16.mxu0 0
    %1156 = vmatpush1.bf16.msra.mxu0 0
    %1157 = vmatprep.subr.bf16.mxu0 0
    %1158 = vmatpush1.bf16.msra.mxu0 0
    %1159 = vmatprep.mubr.bf16.mxu0 0
    %1160 = vmatmul.mubr.bf16.gmra.mrb[0].mxu0 %v1026
    %v1161 = vpop.f32.mrb[0].mxu0
    %v1162 = vadd.f32 0.0, %v1161
    %v1163 = vpop.f32.mrb[0].mxu0
    %v1164 = vadd.f32 0.0, %v1163
    %v1165 = vpop.f32.mrb[0].mxu0
    %v1166 = vadd.f32 0.0, %v1165
    %v1167 = vpop.f32.mrb[0].mxu0
    %v1168 = vadd.f32 0.0, %v1167
    %1169 = vmatprep.mubr.bf16.mxu0 0
    %1170 = vmatmul.mubr.bf16.gmra.mrb[0].mxu0 %v1027
    %v1171 = vpop.f32.mrb[0].mxu0
    %v1172 = vadd.f32 0.0, %v1171
    %v1173 = vpop.f32.mrb[0].mxu0
    %v1174 = vadd.f32 0.0, %v1173
    %v1175 = vpop.f32.mrb[0].mxu0
    %v1176 = vadd.f32 0.0, %v1175
    %v1177 = vpop.f32.mrb[0].mxu0
    %v1178 = vadd.f32 0.0, %v1177
    %1179 = vmatprep.mubr.bf16.mxu0 0
    %1180 = vmatmul.mubr.bf16.gmra.mrb[0].mxu0 %v1028
    %v1181 = vpop.f32.mrb[0].mxu0
    %v1182 = vadd.f32 0.0, %v1181
    %v1183 = vpop.f32.mrb[0].mxu0
    %v1184 = vadd.f32 0.0, %v1183
    %v1185 = vpop.f32.mrb[0].mxu0
    %v1186 = vadd.f32 0.0, %v1185
    %v1187 = vpop.f32.mrb[0].mxu0
    %v1188 = vadd.f32 0.0, %v1187
    %1189 = vmatprep.mubr.bf16.mxu0 0
    %1190 = vmatmul.mubr.bf16.gmra.mrb[0].mxu0 %v1029
    %v1191 = vpop.f32.mrb[0].mxu0
    %v1192 = vadd.f32 0.0, %v1191
    %v1193 = vpop.f32.mrb[0].mxu0
    %v1194 = vadd.f32 0.0, %v1193
    %v1195 = vpop.f32.mrb[0].mxu0
    %v1196 = vadd.f32 0.0, %v1195
    %v1197 = vpop.f32.mrb[0].mxu0
    %v1198 = vadd.f32 0.0, %v1197
    %1199 = vdwg.mxu0
    %v1200 = vrot.slane %v1164, 6
    %v1201 = vrot.slane %v1168, 6
    %v1202 = vrot.slane %v1174, 6
    %v1203 = vrot.slane %v1178, 6
    %v1204 = vrot.slane %v1184, 6
    %v1205 = vrot.slane %v1188, 6
    %v1206 = vrot.slane %v1194, 6
    %v1207 = vrot.slane %v1198, 6
    %vm1208 = vcmp.lt.s32.totalorder %v685, 2
    %v1209 = vsel %vm1208, %v1206, %v1207
    %v1210 = vsel %vm1208, %v1205, %v1206
    %v1211 = vsel %vm1208, %v1204, %v1205
    %v1212 = vsel %vm1208, %v1203, %v1204
    %v1213 = vsel %vm1208, %v1202, %v1203
    %v1214 = vsel %vm1208, %v1201, %v1202
    %v1215 = vsel %vm1208, %v1200, %v1201
    %v1216 = vsel %vm1208, %v1207, %v1200
    %v1217 = vadd.f32 %v1162, %v1215
    %v1218 = vadd.f32 %v1166, %v1214
    %v1219 = vadd.f32 %v1172, %v1213
    %v1220 = vadd.f32 %v1176, %v1212
    %v1221 = vadd.f32 %v1182, %v1211
    %v1222 = vadd.f32 %v1186, %v1210
    %v1223 = vadd.f32 %v1192, %v1209
    %v1224 = vadd.f32 %v1196, %v1216
    %v1225 = vld [vmem:[%s3 + $0x6] sm:$0x1]
    %v1226 = vlaneseq
    %v1227 = vshrl.u32 %v1226, 7
    %v1228 = vsub.s32 0, %v1227
    %v1229 = vrot.slane %v1225, %v1228
    %v1230 = vadd.f32 %v1217, %v1229
    %v1231 = vadd.f32 %v1218, %v1229
    %v1232 = vadd.f32 %v1219, %v1229
    %v1233 = vadd.f32 %v1220, %v1229
    %v1234 = vadd.f32 %v1221, %v1229
    %v1235 = vadd.f32 %v1222, %v1229
    %v1236 = vadd.f32 %v1223, %v1229
    %v1237 = vadd.f32 %v1224, %v1229
    %v1238 = vmax.f32 %v1230, 0.0
    %v1239 = vmax.f32 %v1231, 0.0
    %v1240 = vmax.f32 %v1232, 0.0
    %v1241 = vmax.f32 %v1233, 0.0
    %v1242 = vmax.f32 %v1234, 0.0
    %v1243 = vmax.f32 %v1235, 0.0
    %v1244 = vmax.f32 %v1236, 0.0
    %v1245 = vmax.f32 %v1237, 0.0
    %v1246 = vpack.c.bf16 %v1239, %v1238
    %v1247 = vpack.c.bf16 %v1241, %v1240
    %v1248 = vpack.c.bf16 %v1243, %v1242
    %v1249 = vpack.c.bf16 %v1245, %v1244
    %s1250 = scalar_lea.vmem %s1, 320
    %v1251 = vld [vmem:[%s1250] sm:$0xf]
    %v1252 = vld [vmem:[%s1250 + $0x4] sm:$0xf]
    %v1253 = vld [vmem:[%s1250 + $0x8] sm:$0xf]
    %v1254 = vld [vmem:[%s1250 + $0xc] sm:$0xf]
    %v1255 = vld [vmem:[%s1250 + $0x10] sm:$0xf]
    %v1256 = vld [vmem:[%s1250 + $0x14] sm:$0xf]
    %v1257 = vld [vmem:[%s1250 + $0x18] sm:$0xf]
    %v1258 = vld [vmem:[%s1250 + $0x1c] sm:$0xf]
    %v1259 = vld [vmem:[%s1250 + $0x20] sm:$0xf]
    %v1260 = vld [vmem:[%s1250 + $0x24] sm:$0xf]
    %v1261 = vld [vmem:[%s1250 + $0x28] sm:$0xf]
    %v1262 = vld [vmem:[%s1250 + $0x2c] sm:$0xf]
    %v1263 = vld [vmem:[%s1250 + $0x30] sm:$0xf]
    %v1264 = vld [vmem:[%s1250 + $0x34] sm:$0xf]
    %v1265 = vld [vmem:[%s1250 + $0x38] sm:$0xf]
    %v1266 = vld [vmem:[%s1250 + $0x3c] sm:$0xf]
    %v1267 = vld [vmem:[%s3 + $0x7] sm:$0x1]
    %v1268 = vlaneseq
    %v1269 = vshrl.u32 %v1268, 7
    %v1270 = vsub.s32 0, %v1269
    %v1271 = vrot.slane %v1267, %v1270
    %v1288 = vunpack.c.l.b16 %v1251
    %v1289 = vunpack.c.l.b16 %v1252
    %v1290 = vunpack.c.l.b16 %v1253
    %v1291 = vunpack.c.l.b16 %v1254
    %v1292 = vunpack.c.l.b16 %v1255
    %v1293 = vunpack.c.l.b16 %v1256
    %v1294 = vunpack.c.l.b16 %v1257
    %v1295 = vunpack.c.l.b16 %v1258
    %v1296 = vunpack.c.l.b16 %v1259
    %v1297 = vunpack.c.l.b16 %v1260
    %v1298 = vunpack.c.l.b16 %v1261
    %v1299 = vunpack.c.l.b16 %v1262
    %v1300 = vunpack.c.l.b16 %v1263
    %v1301 = vunpack.c.l.b16 %v1264
    %v1302 = vunpack.c.l.b16 %v1265
    %v1303 = vunpack.c.l.b16 %v1266
    %v1304 = vpack.c.b16 %v1289, %v1288
    %v1305 = vpack.c.b16 %v1291, %v1290
    %v1306 = vpack.c.b16 %v1293, %v1292
    %v1307 = vpack.c.b16 %v1295, %v1294
    %v1308 = vpack.c.b16 %v1297, %v1296
    %v1309 = vpack.c.b16 %v1299, %v1298
    %v1310 = vpack.c.b16 %v1301, %v1300
    %v1311 = vpack.c.b16 %v1303, %v1302
    %1320 = vmatprep.subr.bf16.mxu0 0
    %1321 = vmatpush1.bf16.msra.mxu0 %v1304
    %1322 = vmatprep.subr.bf16.mxu0 0
    %1323 = vmatpush1.bf16.msra.mxu0 %v1305
    %1324 = vmatprep.subr.bf16.mxu0 0
    %1325 = vmatpush1.bf16.msra.mxu0 %v1306
    %1326 = vmatprep.subr.bf16.mxu0 0
    %1327 = vmatpush1.bf16.msra.mxu0 %v1307
    %1328 = vmatprep.subr.bf16.mxu0 0
    %1329 = vmatpush1.bf16.msra.mxu0 %v1308
    %1330 = vmatprep.subr.bf16.mxu0 0
    %1331 = vmatpush1.bf16.msra.mxu0 %v1309
    %1332 = vmatprep.subr.bf16.mxu0 0
    %1333 = vmatpush1.bf16.msra.mxu0 %v1310
    %1334 = vmatprep.subr.bf16.mxu0 0
    %1335 = vmatpush1.bf16.msra.mxu0 %v1311
    %1336 = vmatprep.subr.bf16.mxu0 0
    %1337 = vmatpush1.bf16.msra.mxu0 0
    %1338 = vmatprep.subr.bf16.mxu0 0
    %1339 = vmatpush1.bf16.msra.mxu0 0
    %1340 = vmatprep.subr.bf16.mxu0 0
    %1341 = vmatpush1.bf16.msra.mxu0 0
    %1342 = vmatprep.subr.bf16.mxu0 0
    %1343 = vmatpush1.bf16.msra.mxu0 0
    %1344 = vmatprep.subr.bf16.mxu0 0
    %1345 = vmatpush1.bf16.msra.mxu0 0
    %1346 = vmatprep.subr.bf16.mxu0 0
    %1347 = vmatpush1.bf16.msra.mxu0 0
    %1348 = vmatprep.subr.bf16.mxu0 0
    %1349 = vmatpush1.bf16.msra.mxu0 0
    %1350 = vmatprep.subr.bf16.mxu0 0
    %1351 = vmatpush1.bf16.msra.mxu0 0
    %1352 = vmatprep.mubr.bf16.mxu0 0
    %1353 = vmatmul.mubr.bf16.gmra.mrb[0].mxu0 %v1246
    %v1354 = vpop.f32.mrb[0].mxu0
    %v1355 = vadd.f32 %v1271, %v1354
    %v1356 = vpop.f32.mrb[0].mxu0
    %v1357 = vpop.f32.mrb[0].mxu0
    %v1358 = vadd.f32 %v1271, %v1357
    %v1359 = vpop.f32.mrb[0].mxu0
    %1360 = vmatprep.mubr.bf16.mxu0 0
    %1361 = vmatmul.mubr.bf16.gmra.mrb[0].mxu0 %v1247
    %v1362 = vpop.f32.mrb[0].mxu0
    %v1363 = vadd.f32 %v1271, %v1362
    %v1364 = vpop.f32.mrb[0].mxu0
    %v1365 = vpop.f32.mrb[0].mxu0
    %v1366 = vadd.f32 %v1271, %v1365
    %v1367 = vpop.f32.mrb[0].mxu0
    %1368 = vmatprep.mubr.bf16.mxu0 0
    %1369 = vmatmul.mubr.bf16.gmra.mrb[0].mxu0 %v1248
    %v1370 = vpop.f32.mrb[0].mxu0
    %v1371 = vadd.f32 %v1271, %v1370
    %v1372 = vpop.f32.mrb[0].mxu0
    %v1373 = vpop.f32.mrb[0].mxu0
    %v1374 = vadd.f32 %v1271, %v1373
    %v1375 = vpop.f32.mrb[0].mxu0
    %1376 = vmatprep.mubr.bf16.mxu0 0
    %1377 = vmatmul.mubr.bf16.gmra.mrb[0].mxu0 %v1249
    %v1378 = vpop.f32.mrb[0].mxu0
    %v1379 = vadd.f32 %v1271, %v1378
    %v1380 = vpop.f32.mrb[0].mxu0
    %v1381 = vpop.f32.mrb[0].mxu0
    %v1382 = vadd.f32 %v1271, %v1381
    %v1383 = vpop.f32.mrb[0].mxu0
    %1384 = vdwg.mxu0
    %v1385 = vmax.f32 %v1355, 0.0
    %v1386 = vmax.f32 %v1358, 0.0
    %v1387 = vmax.f32 %v1363, 0.0
    %v1388 = vmax.f32 %v1366, 0.0
    %v1389 = vmax.f32 %v1371, 0.0
    %v1390 = vmax.f32 %v1374, 0.0
    %v1391 = vmax.f32 %v1379, 0.0
    %v1392 = vmax.f32 %v1382, 0.0
    %v1393 = vpack.c.bf16 %v1386, %v1385
    %v1394 = vpack.c.bf16 %v1388, %v1387
    %v1395 = vpack.c.bf16 %v1390, %v1389
    %v1396 = vpack.c.bf16 %v1392, %v1391
    %s1397 = scalar_lea.vmem %s1, 384
    %v1398 = vld [vmem:[%s1397] sm:$0xf]
    %v1399 = vld [vmem:[%s1397 + $0x4] sm:$0xf]
    %v1400 = vld [vmem:[%s1397 + $0x8] sm:$0xf]
    %v1401 = vld [vmem:[%s1397 + $0xc] sm:$0xf]
    %v1402 = vld [vmem:[%s1397 + $0x10] sm:$0xf]
    %v1403 = vld [vmem:[%s1397 + $0x14] sm:$0xf]
    %v1404 = vld [vmem:[%s1397 + $0x18] sm:$0xf]
    %v1405 = vld [vmem:[%s1397 + $0x1c] sm:$0xf]
    %v1406 = vld [vmem:[%s1397 + $0x20] sm:$0xf]
    %v1407 = vld [vmem:[%s1397 + $0x24] sm:$0xf]
    %v1408 = vld [vmem:[%s1397 + $0x28] sm:$0xf]
    %v1409 = vld [vmem:[%s1397 + $0x2c] sm:$0xf]
    %v1410 = vld [vmem:[%s1397 + $0x30] sm:$0xf]
    %v1411 = vld [vmem:[%s1397 + $0x34] sm:$0xf]
    %v1412 = vld [vmem:[%s1397 + $0x38] sm:$0xf]
    %v1413 = vld [vmem:[%s1397 + $0x3c] sm:$0xf]
    %v1414 = vld [vmem:[%s3 + $0x8] sm:$0x1]
    %v1415 = vlaneseq
    %v1416 = vshrl.u32 %v1415, 7
    %v1417 = vsub.s32 0, %v1416
    %v1418 = vrot.slane %v1414, %v1417
    %v1435 = vunpack.c.l.b16 %v1398
    %v1436 = vunpack.c.l.b16 %v1399
    %v1437 = vunpack.c.l.b16 %v1400
    %v1438 = vunpack.c.l.b16 %v1401
    %v1439 = vunpack.c.l.b16 %v1402
    %v1440 = vunpack.c.l.b16 %v1403
    %v1441 = vunpack.c.l.b16 %v1404
    %v1442 = vunpack.c.l.b16 %v1405
    %v1443 = vunpack.c.l.b16 %v1406
    %v1444 = vunpack.c.l.b16 %v1407
    %v1445 = vunpack.c.l.b16 %v1408
    %v1446 = vunpack.c.l.b16 %v1409
    %v1447 = vunpack.c.l.b16 %v1410
    %v1448 = vunpack.c.l.b16 %v1411
    %v1449 = vunpack.c.l.b16 %v1412
    %v1450 = vunpack.c.l.b16 %v1413
    %v1451 = vpack.c.b16 %v1436, %v1435
    %v1452 = vpack.c.b16 %v1438, %v1437
    %v1453 = vpack.c.b16 %v1440, %v1439
    %v1454 = vpack.c.b16 %v1442, %v1441
    %v1455 = vpack.c.b16 %v1444, %v1443
    %v1456 = vpack.c.b16 %v1446, %v1445
    %v1457 = vpack.c.b16 %v1448, %v1447
    %v1458 = vpack.c.b16 %v1450, %v1449
    %1467 = vmatprep.subr.bf16.mxu0 0
    %1468 = vmatpush1.bf16.msra.mxu0 %v1451
    %1469 = vmatprep.subr.bf16.mxu0 0
    %1470 = vmatpush1.bf16.msra.mxu0 %v1452
    %1471 = vmatprep.subr.bf16.mxu0 0
    %1472 = vmatpush1.bf16.msra.mxu0 %v1453
    %1473 = vmatprep.subr.bf16.mxu0 0
    %1474 = vmatpush1.bf16.msra.mxu0 %v1454
    %1475 = vmatprep.subr.bf16.mxu0 0
    %1476 = vmatpush1.bf16.msra.mxu0 %v1455
    %1477 = vmatprep.subr.bf16.mxu0 0
    %1478 = vmatpush1.bf16.msra.mxu0 %v1456
    %1479 = vmatprep.subr.bf16.mxu0 0
    %1480 = vmatpush1.bf16.msra.mxu0 %v1457
    %1481 = vmatprep.subr.bf16.mxu0 0
    %1482 = vmatpush1.bf16.msra.mxu0 %v1458
    %1483 = vmatprep.subr.bf16.mxu0 0
    %1484 = vmatpush1.bf16.msra.mxu0 0
    %1485 = vmatprep.subr.bf16.mxu0 0
    %1486 = vmatpush1.bf16.msra.mxu0 0
    %1487 = vmatprep.subr.bf16.mxu0 0
    %1488 = vmatpush1.bf16.msra.mxu0 0
    %1489 = vmatprep.subr.bf16.mxu0 0
    %1490 = vmatpush1.bf16.msra.mxu0 0
    %1491 = vmatprep.subr.bf16.mxu0 0
    %1492 = vmatpush1.bf16.msra.mxu0 0
    %1493 = vmatprep.subr.bf16.mxu0 0
    %1494 = vmatpush1.bf16.msra.mxu0 0
    %1495 = vmatprep.subr.bf16.mxu0 0
    %1496 = vmatpush1.bf16.msra.mxu0 0
    %1497 = vmatprep.subr.bf16.mxu0 0
    %1498 = vmatpush1.bf16.msra.mxu0 0
    %1499 = vmatprep.mubr.bf16.mxu0 0
    %1500 = vmatmul.mubr.bf16.gmra.mrb[0].mxu0 %v1393
    %v1501 = vpop.f32.mrb[0].mxu0
    %v1502 = vadd.f32 %v1418, %v1501
    %v1503 = vpop.f32.mrb[0].mxu0
    %v1504 = vpop.f32.mrb[0].mxu0
    %v1505 = vadd.f32 %v1418, %v1504
    %v1506 = vpop.f32.mrb[0].mxu0
    %1507 = vmatprep.mubr.bf16.mxu0 0
    %1508 = vmatmul.mubr.bf16.gmra.mrb[0].mxu0 %v1394
    %v1509 = vpop.f32.mrb[0].mxu0
    %v1510 = vadd.f32 %v1418, %v1509
    %v1511 = vpop.f32.mrb[0].mxu0
    %v1512 = vpop.f32.mrb[0].mxu0
    %v1513 = vadd.f32 %v1418, %v1512
    %v1514 = vpop.f32.mrb[0].mxu0
    %1515 = vmatprep.mubr.bf16.mxu0 0
    %1516 = vmatmul.mubr.bf16.gmra.mrb[0].mxu0 %v1395
    %v1517 = vpop.f32.mrb[0].mxu0
    %v1518 = vadd.f32 %v1418, %v1517
    %v1519 = vpop.f32.mrb[0].mxu0
    %v1520 = vpop.f32.mrb[0].mxu0
    %v1521 = vadd.f32 %v1418, %v1520
    %v1522 = vpop.f32.mrb[0].mxu0
    %1523 = vmatprep.mubr.bf16.mxu0 0
    %1524 = vmatmul.mubr.bf16.gmra.mrb[0].mxu0 %v1396
    %v1525 = vpop.f32.mrb[0].mxu0
    %v1526 = vadd.f32 %v1418, %v1525
    %v1527 = vpop.f32.mrb[0].mxu0
    %v1528 = vpop.f32.mrb[0].mxu0
    %v1529 = vadd.f32 %v1418, %v1528
    %v1530 = vpop.f32.mrb[0].mxu0
    %1531 = vdwg.mxu0
    %v1532 = vadd.f32 %v1502, %v1238
    %v1533 = vadd.f32 %v1505, %v1239
    %v1534 = vadd.f32 %v1510, %v1240
    %v1535 = vadd.f32 %v1513, %v1241
    %v1536 = vadd.f32 %v1518, %v1242
    %v1537 = vadd.f32 %v1521, %v1243
    %v1538 = vadd.f32 %v1526, %v1244
    %v1539 = vadd.f32 %v1529, %v1245
    %v1540 = vmax.f32 %v1532, 0.0
    %v1541 = vmax.f32 %v1533, 0.0
    %v1542 = vmax.f32 %v1534, 0.0
    %v1543 = vmax.f32 %v1535, 0.0
    %v1544 = vmax.f32 %v1536, 0.0
    %v1545 = vmax.f32 %v1537, 0.0
    %v1546 = vmax.f32 %v1538, 0.0
    %v1547 = vmax.f32 %v1539, 0.0
    %v1548 = vpack.c.bf16 %v1541, %v1540
    %v1549 = vpack.c.bf16 %v1543, %v1542
    %v1550 = vpack.c.bf16 %v1545, %v1544
    %v1551 = vpack.c.bf16 %v1547, %v1546
    %s1552 = scalar_lea.vmem %s2, 256
    %v1553 = vld [vmem:[%s1552] sm:$0xff]
    %v1554 = vld [vmem:[%s1552 + $0x8] sm:$0xff]
    %v1555 = vld [vmem:[%s1552 + $0x10] sm:$0xff]
    %v1556 = vld [vmem:[%s1552 + $0x18] sm:$0xff]
    %v1557 = vld [vmem:[%s1552 + $0x20] sm:$0xff]
    %v1558 = vld [vmem:[%s1552 + $0x28] sm:$0xff]
    %v1559 = vld [vmem:[%s1552 + $0x30] sm:$0xff]
    %v1560 = vld [vmem:[%s1552 + $0x38] sm:$0xff]
    %v1561 = vld [vmem:[%s1552 + $0x40] sm:$0xff]
    %v1562 = vld [vmem:[%s1552 + $0x48] sm:$0xff]
    %v1563 = vld [vmem:[%s1552 + $0x50] sm:$0xff]
    %v1564 = vld [vmem:[%s1552 + $0x58] sm:$0xff]
    %v1565 = vld [vmem:[%s1552 + $0x60] sm:$0xff]
    %v1566 = vld [vmem:[%s1552 + $0x68] sm:$0xff]
    %v1567 = vld [vmem:[%s1552 + $0x70] sm:$0xff]
    %v1568 = vld [vmem:[%s1552 + $0x78] sm:$0xff]
    %v1585 = vunpack.c.l.b16 %v1553
    %v1586 = vunpack.c.h.b16 %v1553
    %v1587 = vunpack.c.l.b16 %v1554
    %v1588 = vunpack.c.h.b16 %v1554
    %v1589 = vunpack.c.l.b16 %v1555
    %v1590 = vunpack.c.h.b16 %v1555
    %v1591 = vunpack.c.l.b16 %v1556
    %v1592 = vunpack.c.h.b16 %v1556
    %v1593 = vunpack.c.l.b16 %v1557
    %v1594 = vunpack.c.h.b16 %v1557
    %v1595 = vunpack.c.l.b16 %v1558
    %v1596 = vunpack.c.h.b16 %v1558
    %v1597 = vunpack.c.l.b16 %v1559
    %v1598 = vunpack.c.h.b16 %v1559
    %v1599 = vunpack.c.l.b16 %v1560
    %v1600 = vunpack.c.h.b16 %v1560
    %v1601 = vunpack.c.l.b16 %v1561
    %v1602 = vunpack.c.h.b16 %v1561
    %v1603 = vunpack.c.l.b16 %v1562
    %v1604 = vunpack.c.h.b16 %v1562
    %v1605 = vunpack.c.l.b16 %v1563
    %v1606 = vunpack.c.h.b16 %v1563
    %v1607 = vunpack.c.l.b16 %v1564
    %v1608 = vunpack.c.h.b16 %v1564
    %v1609 = vunpack.c.l.b16 %v1565
    %v1610 = vunpack.c.h.b16 %v1565
    %v1611 = vunpack.c.l.b16 %v1566
    %v1612 = vunpack.c.h.b16 %v1566
    %v1613 = vunpack.c.l.b16 %v1567
    %v1614 = vunpack.c.h.b16 %v1567
    %v1615 = vunpack.c.l.b16 %v1568
    %v1616 = vunpack.c.h.b16 %v1568
    %v1617 = vpack.c.b16 %v1587, %v1585
    %v1618 = vpack.c.b16 %v1588, %v1586
    %v1619 = vpack.c.b16 %v1591, %v1589
    %v1620 = vpack.c.b16 %v1592, %v1590
    %v1621 = vpack.c.b16 %v1595, %v1593
    %v1622 = vpack.c.b16 %v1596, %v1594
    %v1623 = vpack.c.b16 %v1599, %v1597
    %v1624 = vpack.c.b16 %v1600, %v1598
    %v1625 = vpack.c.b16 %v1603, %v1601
    %v1626 = vpack.c.b16 %v1604, %v1602
    %v1627 = vpack.c.b16 %v1607, %v1605
    %v1628 = vpack.c.b16 %v1608, %v1606
    %v1629 = vpack.c.b16 %v1611, %v1609
    %v1630 = vpack.c.b16 %v1612, %v1610
    %v1631 = vpack.c.b16 %v1615, %v1613
    %v1632 = vpack.c.b16 %v1616, %v1614
    %1649 = vmatprep.subr.bf16.mxu0 %v1618
    %1650 = vmatpush1.bf16.msra.mxu0 %v1617
    %1651 = vmatprep.subr.bf16.mxu0 %v1620
    %1652 = vmatpush1.bf16.msra.mxu0 %v1619
    %1653 = vmatprep.subr.bf16.mxu0 %v1622
    %1654 = vmatpush1.bf16.msra.mxu0 %v1621
    %1655 = vmatprep.subr.bf16.mxu0 %v1624
    %1656 = vmatpush1.bf16.msra.mxu0 %v1623
    %1657 = vmatprep.subr.bf16.mxu0 %v1626
    %1658 = vmatpush1.bf16.msra.mxu0 %v1625
    %1659 = vmatprep.subr.bf16.mxu0 %v1628
    %1660 = vmatpush1.bf16.msra.mxu0 %v1627
    %1661 = vmatprep.subr.bf16.mxu0 %v1630
    %1662 = vmatpush1.bf16.msra.mxu0 %v1629
    %1663 = vmatprep.subr.bf16.mxu0 %v1632
    %1664 = vmatpush1.bf16.msra.mxu0 %v1631
    %1665 = vmatprep.subr.bf16.mxu0 0
    %1666 = vmatpush1.bf16.msra.mxu0 0
    %1667 = vmatprep.subr.bf16.mxu0 0
    %1668 = vmatpush1.bf16.msra.mxu0 0
    %1669 = vmatprep.subr.bf16.mxu0 0
    %1670 = vmatpush1.bf16.msra.mxu0 0
    %1671 = vmatprep.subr.bf16.mxu0 0
    %1672 = vmatpush1.bf16.msra.mxu0 0
    %1673 = vmatprep.subr.bf16.mxu0 0
    %1674 = vmatpush1.bf16.msra.mxu0 0
    %1675 = vmatprep.subr.bf16.mxu0 0
    %1676 = vmatpush1.bf16.msra.mxu0 0
    %1677 = vmatprep.subr.bf16.mxu0 0
    %1678 = vmatpush1.bf16.msra.mxu0 0
    %1679 = vmatprep.subr.bf16.mxu0 0
    %1680 = vmatpush1.bf16.msra.mxu0 0
    %1681 = vmatprep.mubr.bf16.mxu0 0
    %1682 = vmatmul.mubr.bf16.gmra.mrb[0].mxu0 %v1548
    %v1683 = vpop.f32.mrb[0].mxu0
    %v1684 = vadd.f32 0.0, %v1683
    %v1685 = vpop.f32.mrb[0].mxu0
    %v1686 = vadd.f32 0.0, %v1685
    %v1687 = vpop.f32.mrb[0].mxu0
    %v1688 = vadd.f32 0.0, %v1687
    %v1689 = vpop.f32.mrb[0].mxu0
    %v1690 = vadd.f32 0.0, %v1689
    %1691 = vmatprep.mubr.bf16.mxu0 0
    %1692 = vmatmul.mubr.bf16.gmra.mrb[0].mxu0 %v1549
    %v1693 = vpop.f32.mrb[0].mxu0
    %v1694 = vadd.f32 0.0, %v1693
    %v1695 = vpop.f32.mrb[0].mxu0
    %v1696 = vadd.f32 0.0, %v1695
    %v1697 = vpop.f32.mrb[0].mxu0
    %v1698 = vadd.f32 0.0, %v1697
    %v1699 = vpop.f32.mrb[0].mxu0
    %v1700 = vadd.f32 0.0, %v1699
    %1701 = vmatprep.mubr.bf16.mxu0 0
    %1702 = vmatmul.mubr.bf16.gmra.mrb[0].mxu0 %v1550
    %v1703 = vpop.f32.mrb[0].mxu0
    %v1704 = vadd.f32 0.0, %v1703
    %v1705 = vpop.f32.mrb[0].mxu0
    %v1706 = vadd.f32 0.0, %v1705
    %v1707 = vpop.f32.mrb[0].mxu0
    %v1708 = vadd.f32 0.0, %v1707
    %v1709 = vpop.f32.mrb[0].mxu0
    %v1710 = vadd.f32 0.0, %v1709
    %1711 = vmatprep.mubr.bf16.mxu0 0
    %1712 = vmatmul.mubr.bf16.gmra.mrb[0].mxu0 %v1551
    %v1713 = vpop.f32.mrb[0].mxu0
    %v1714 = vadd.f32 0.0, %v1713
    %v1715 = vpop.f32.mrb[0].mxu0
    %v1716 = vadd.f32 0.0, %v1715
    %v1717 = vpop.f32.mrb[0].mxu0
    %v1718 = vadd.f32 0.0, %v1717
    %v1719 = vpop.f32.mrb[0].mxu0
    %v1720 = vadd.f32 0.0, %v1719
    %1721 = vdwg.mxu0
    %v1722 = vrot.slane %v1686, 1
    %v1723 = vrot.slane %v1690, 1
    %v1724 = vrot.slane %v1696, 1
    %v1725 = vrot.slane %v1700, 1
    %v1726 = vrot.slane %v1706, 1
    %v1727 = vrot.slane %v1710, 1
    %v1728 = vrot.slane %v1716, 1
    %v1729 = vrot.slane %v1720, 1
    %vm1730 = vcmp.lt.s32.totalorder %v685, 7
    %v1731 = vsel %vm1730, %v1728, %v1729
    %v1732 = vsel %vm1730, %v1727, %v1728
    %v1733 = vsel %vm1730, %v1726, %v1727
    %v1734 = vsel %vm1730, %v1725, %v1726
    %v1735 = vsel %vm1730, %v1724, %v1725
    %v1736 = vsel %vm1730, %v1723, %v1724
    %v1737 = vsel %vm1730, %v1722, %v1723
    %v1738 = vsel %vm1730, %v1729, %v1722
    %v1739 = vadd.f32 %v1684, %v1736
    %v1740 = vadd.f32 %v1688, %v1735
    %v1741 = vadd.f32 %v1694, %v1734
    %v1742 = vadd.f32 %v1698, %v1733
    %v1743 = vadd.f32 %v1704, %v1732
    %v1744 = vadd.f32 %v1708, %v1731
    %v1745 = vadd.f32 %v1714, %v1738
    %v1746 = vadd.f32 %v1718, %v1737
    %v1747 = vld [vmem:[%s3 + $0x9] sm:$0x1]
    %v1748 = vlaneseq
    %v1749 = vshrl.u32 %v1748, 7
    %v1750 = vsub.s32 0, %v1749
    %v1751 = vrot.slane %v1747, %v1750
    %v1752 = vadd.f32 %v1739, %v1751
    %v1753 = vadd.f32 %v1740, %v1751
    %v1754 = vadd.f32 %v1741, %v1751
    %v1755 = vadd.f32 %v1742, %v1751
    %v1756 = vadd.f32 %v1743, %v1751
    %v1757 = vadd.f32 %v1744, %v1751
    %v1758 = vadd.f32 %v1745, %v1751
    %v1759 = vadd.f32 %v1746, %v1751
    %v1760 = vmax.f32 %v1752, 0.0
    %v1761 = vmax.f32 %v1753, 0.0
    %v1762 = vmax.f32 %v1754, 0.0
    %v1763 = vmax.f32 %v1755, 0.0
    %v1764 = vmax.f32 %v1756, 0.0
    %v1765 = vmax.f32 %v1757, 0.0
    %v1766 = vmax.f32 %v1758, 0.0
    %v1767 = vmax.f32 %v1759, 0.0
    %v1768 = vpack.c.bf16 %v1761, %v1760
    %v1769 = vpack.c.bf16 %v1763, %v1762
    %v1770 = vpack.c.bf16 %v1765, %v1764
    %v1771 = vpack.c.bf16 %v1767, %v1766
    %s1772 = scalar_lea.vmem %s1, 448
    %v1773 = vld [vmem:[%s1772] sm:$0xf]
    %v1774 = vld [vmem:[%s1772 + $0x4] sm:$0xf]
    %v1775 = vld [vmem:[%s1772 + $0x8] sm:$0xf]
    %v1776 = vld [vmem:[%s1772 + $0xc] sm:$0xf]
    %v1777 = vld [vmem:[%s1772 + $0x10] sm:$0xf]
    %v1778 = vld [vmem:[%s1772 + $0x14] sm:$0xf]
    %v1779 = vld [vmem:[%s1772 + $0x18] sm:$0xf]
    %v1780 = vld [vmem:[%s1772 + $0x1c] sm:$0xf]
    %v1781 = vld [vmem:[%s1772 + $0x20] sm:$0xf]
    %v1782 = vld [vmem:[%s1772 + $0x24] sm:$0xf]
    %v1783 = vld [vmem:[%s1772 + $0x28] sm:$0xf]
    %v1784 = vld [vmem:[%s1772 + $0x2c] sm:$0xf]
    %v1785 = vld [vmem:[%s1772 + $0x30] sm:$0xf]
    %v1786 = vld [vmem:[%s1772 + $0x34] sm:$0xf]
    %v1787 = vld [vmem:[%s1772 + $0x38] sm:$0xf]
    %v1788 = vld [vmem:[%s1772 + $0x3c] sm:$0xf]
    %v1789 = vld [vmem:[%s3 + $0xa] sm:$0x1]
    %v1790 = vlaneseq
    %v1791 = vshrl.u32 %v1790, 7
    %v1792 = vsub.s32 0, %v1791
    %v1793 = vrot.slane %v1789, %v1792
    %v1810 = vunpack.c.l.b16 %v1773
    %v1811 = vunpack.c.l.b16 %v1774
    %v1812 = vunpack.c.l.b16 %v1775
    %v1813 = vunpack.c.l.b16 %v1776
    %v1814 = vunpack.c.l.b16 %v1777
    %v1815 = vunpack.c.l.b16 %v1778
    %v1816 = vunpack.c.l.b16 %v1779
    %v1817 = vunpack.c.l.b16 %v1780
    %v1818 = vunpack.c.l.b16 %v1781
    %v1819 = vunpack.c.l.b16 %v1782
    %v1820 = vunpack.c.l.b16 %v1783
    %v1821 = vunpack.c.l.b16 %v1784
    %v1822 = vunpack.c.l.b16 %v1785
    %v1823 = vunpack.c.l.b16 %v1786
    %v1824 = vunpack.c.l.b16 %v1787
    %v1825 = vunpack.c.l.b16 %v1788
    %v1826 = vpack.c.b16 %v1811, %v1810
    %v1827 = vpack.c.b16 %v1813, %v1812
    %v1828 = vpack.c.b16 %v1815, %v1814
    %v1829 = vpack.c.b16 %v1817, %v1816
    %v1830 = vpack.c.b16 %v1819, %v1818
    %v1831 = vpack.c.b16 %v1821, %v1820
    %v1832 = vpack.c.b16 %v1823, %v1822
    %v1833 = vpack.c.b16 %v1825, %v1824
    %1842 = vmatprep.subr.bf16.mxu0 0
    %1843 = vmatpush1.bf16.msra.mxu0 %v1826
    %1844 = vmatprep.subr.bf16.mxu0 0
    %1845 = vmatpush1.bf16.msra.mxu0 %v1827
    %1846 = vmatprep.subr.bf16.mxu0 0
    %1847 = vmatpush1.bf16.msra.mxu0 %v1828
    %1848 = vmatprep.subr.bf16.mxu0 0
    %1849 = vmatpush1.bf16.msra.mxu0 %v1829
    %1850 = vmatprep.subr.bf16.mxu0 0
    %1851 = vmatpush1.bf16.msra.mxu0 %v1830
    %1852 = vmatprep.subr.bf16.mxu0 0
    %1853 = vmatpush1.bf16.msra.mxu0 %v1831
    %1854 = vmatprep.subr.bf16.mxu0 0
    %1855 = vmatpush1.bf16.msra.mxu0 %v1832
    %1856 = vmatprep.subr.bf16.mxu0 0
    %1857 = vmatpush1.bf16.msra.mxu0 %v1833
    %1858 = vmatprep.subr.bf16.mxu0 0
    %1859 = vmatpush1.bf16.msra.mxu0 0
    %1860 = vmatprep.subr.bf16.mxu0 0
    %1861 = vmatpush1.bf16.msra.mxu0 0
    %1862 = vmatprep.subr.bf16.mxu0 0
    %1863 = vmatpush1.bf16.msra.mxu0 0
    %1864 = vmatprep.subr.bf16.mxu0 0
    %1865 = vmatpush1.bf16.msra.mxu0 0
    %1866 = vmatprep.subr.bf16.mxu0 0
    %1867 = vmatpush1.bf16.msra.mxu0 0
    %1868 = vmatprep.subr.bf16.mxu0 0
    %1869 = vmatpush1.bf16.msra.mxu0 0
    %1870 = vmatprep.subr.bf16.mxu0 0
    %1871 = vmatpush1.bf16.msra.mxu0 0
    %1872 = vmatprep.subr.bf16.mxu0 0
    %1873 = vmatpush1.bf16.msra.mxu0 0
    %1874 = vmatprep.mubr.bf16.mxu0 0
    %1875 = vmatmul.mubr.bf16.gmra.mrb[0].mxu0 %v1768
    %v1876 = vpop.f32.mrb[0].mxu0
    %v1877 = vadd.f32 %v1793, %v1876
    %v1878 = vpop.f32.mrb[0].mxu0
    %v1879 = vpop.f32.mrb[0].mxu0
    %v1880 = vadd.f32 %v1793, %v1879
    %v1881 = vpop.f32.mrb[0].mxu0
    %1882 = vmatprep.mubr.bf16.mxu0 0
    %1883 = vmatmul.mubr.bf16.gmra.mrb[0].mxu0 %v1769
    %v1884 = vpop.f32.mrb[0].mxu0
    %v1885 = vadd.f32 %v1793, %v1884
    %v1886 = vpop.f32.mrb[0].mxu0
    %v1887 = vpop.f32.mrb[0].mxu0
    %v1888 = vadd.f32 %v1793, %v1887
    %v1889 = vpop.f32.mrb[0].mxu0
    %1890 = vmatprep.mubr.bf16.mxu0 0
    %1891 = vmatmul.mubr.bf16.gmra.mrb[0].mxu0 %v1770
    %v1892 = vpop.f32.mrb[0].mxu0
    %v1893 = vadd.f32 %v1793, %v1892
    %v1894 = vpop.f32.mrb[0].mxu0
    %v1895 = vpop.f32.mrb[0].mxu0
    %v1896 = vadd.f32 %v1793, %v1895
    %v1897 = vpop.f32.mrb[0].mxu0
    %1898 = vmatprep.mubr.bf16.mxu0 0
    %1899 = vmatmul.mubr.bf16.gmra.mrb[0].mxu0 %v1771
    %v1900 = vpop.f32.mrb[0].mxu0
    %v1901 = vadd.f32 %v1793, %v1900
    %v1902 = vpop.f32.mrb[0].mxu0
    %v1903 = vpop.f32.mrb[0].mxu0
    %v1904 = vadd.f32 %v1793, %v1903
    %v1905 = vpop.f32.mrb[0].mxu0
    %1906 = vdwg.mxu0
    %v1907 = vmax.f32 %v1877, 0.0
    %v1908 = vmax.f32 %v1880, 0.0
    %v1909 = vmax.f32 %v1885, 0.0
    %v1910 = vmax.f32 %v1888, 0.0
    %v1911 = vmax.f32 %v1893, 0.0
    %v1912 = vmax.f32 %v1896, 0.0
    %v1913 = vmax.f32 %v1901, 0.0
    %v1914 = vmax.f32 %v1904, 0.0
    %v1915 = vpack.c.bf16 %v1908, %v1907
    %v1916 = vpack.c.bf16 %v1910, %v1909
    %v1917 = vpack.c.bf16 %v1912, %v1911
    %v1918 = vpack.c.bf16 %v1914, %v1913
    %s1919 = scalar_lea.vmem %s1, 512
    %v1920 = vld [vmem:[%s1919] sm:$0xf]
    %v1921 = vld [vmem:[%s1919 + $0x4] sm:$0xf]
    %v1922 = vld [vmem:[%s1919 + $0x8] sm:$0xf]
    %v1923 = vld [vmem:[%s1919 + $0xc] sm:$0xf]
    %v1924 = vld [vmem:[%s1919 + $0x10] sm:$0xf]
    %v1925 = vld [vmem:[%s1919 + $0x14] sm:$0xf]
    %v1926 = vld [vmem:[%s1919 + $0x18] sm:$0xf]
    %v1927 = vld [vmem:[%s1919 + $0x1c] sm:$0xf]
    %v1928 = vld [vmem:[%s1919 + $0x20] sm:$0xf]
    %v1929 = vld [vmem:[%s1919 + $0x24] sm:$0xf]
    %v1930 = vld [vmem:[%s1919 + $0x28] sm:$0xf]
    %v1931 = vld [vmem:[%s1919 + $0x2c] sm:$0xf]
    %v1932 = vld [vmem:[%s1919 + $0x30] sm:$0xf]
    %v1933 = vld [vmem:[%s1919 + $0x34] sm:$0xf]
    %v1934 = vld [vmem:[%s1919 + $0x38] sm:$0xf]
    %v1935 = vld [vmem:[%s1919 + $0x3c] sm:$0xf]
    %v1936 = vld [vmem:[%s3 + $0xb] sm:$0x1]
    %v1937 = vlaneseq
    %v1938 = vshrl.u32 %v1937, 7
    %v1939 = vsub.s32 0, %v1938
    %v1940 = vrot.slane %v1936, %v1939
    %v1957 = vunpack.c.l.b16 %v1920
    %v1958 = vunpack.c.l.b16 %v1921
    %v1959 = vunpack.c.l.b16 %v1922
    %v1960 = vunpack.c.l.b16 %v1923
    %v1961 = vunpack.c.l.b16 %v1924
    %v1962 = vunpack.c.l.b16 %v1925
    %v1963 = vunpack.c.l.b16 %v1926
    %v1964 = vunpack.c.l.b16 %v1927
    %v1965 = vunpack.c.l.b16 %v1928
    %v1966 = vunpack.c.l.b16 %v1929
    %v1967 = vunpack.c.l.b16 %v1930
    %v1968 = vunpack.c.l.b16 %v1931
    %v1969 = vunpack.c.l.b16 %v1932
    %v1970 = vunpack.c.l.b16 %v1933
    %v1971 = vunpack.c.l.b16 %v1934
    %v1972 = vunpack.c.l.b16 %v1935
    %v1973 = vpack.c.b16 %v1958, %v1957
    %v1974 = vpack.c.b16 %v1960, %v1959
    %v1975 = vpack.c.b16 %v1962, %v1961
    %v1976 = vpack.c.b16 %v1964, %v1963
    %v1977 = vpack.c.b16 %v1966, %v1965
    %v1978 = vpack.c.b16 %v1968, %v1967
    %v1979 = vpack.c.b16 %v1970, %v1969
    %v1980 = vpack.c.b16 %v1972, %v1971
    %1989 = vmatprep.subr.bf16.mxu0 0
    %1990 = vmatpush1.bf16.msra.mxu0 %v1973
    %1991 = vmatprep.subr.bf16.mxu0 0
    %1992 = vmatpush1.bf16.msra.mxu0 %v1974
    %1993 = vmatprep.subr.bf16.mxu0 0
    %1994 = vmatpush1.bf16.msra.mxu0 %v1975
    %1995 = vmatprep.subr.bf16.mxu0 0
    %1996 = vmatpush1.bf16.msra.mxu0 %v1976
    %1997 = vmatprep.subr.bf16.mxu0 0
    %1998 = vmatpush1.bf16.msra.mxu0 %v1977
    %1999 = vmatprep.subr.bf16.mxu0 0
    %2000 = vmatpush1.bf16.msra.mxu0 %v1978
    %2001 = vmatprep.subr.bf16.mxu0 0
    %2002 = vmatpush1.bf16.msra.mxu0 %v1979
    %2003 = vmatprep.subr.bf16.mxu0 0
    %2004 = vmatpush1.bf16.msra.mxu0 %v1980
    %2005 = vmatprep.subr.bf16.mxu0 0
    %2006 = vmatpush1.bf16.msra.mxu0 0
    %2007 = vmatprep.subr.bf16.mxu0 0
    %2008 = vmatpush1.bf16.msra.mxu0 0
    %2009 = vmatprep.subr.bf16.mxu0 0
    %2010 = vmatpush1.bf16.msra.mxu0 0
    %2011 = vmatprep.subr.bf16.mxu0 0
    %2012 = vmatpush1.bf16.msra.mxu0 0
    %2013 = vmatprep.subr.bf16.mxu0 0
    %2014 = vmatpush1.bf16.msra.mxu0 0
    %2015 = vmatprep.subr.bf16.mxu0 0
    %2016 = vmatpush1.bf16.msra.mxu0 0
    %2017 = vmatprep.subr.bf16.mxu0 0
    %2018 = vmatpush1.bf16.msra.mxu0 0
    %2019 = vmatprep.subr.bf16.mxu0 0
    %2020 = vmatpush1.bf16.msra.mxu0 0
    %2021 = vmatprep.mubr.bf16.mxu0 0
    %2022 = vmatmul.mubr.bf16.gmra.mrb[0].mxu0 %v1915
    %v2023 = vpop.f32.mrb[0].mxu0
    %v2024 = vadd.f32 %v1940, %v2023
    %v2025 = vpop.f32.mrb[0].mxu0
    %v2026 = vpop.f32.mrb[0].mxu0
    %v2027 = vadd.f32 %v1940, %v2026
    %v2028 = vpop.f32.mrb[0].mxu0
    %2029 = vmatprep.mubr.bf16.mxu0 0
    %2030 = vmatmul.mubr.bf16.gmra.mrb[0].mxu0 %v1916
    %v2031 = vpop.f32.mrb[0].mxu0
    %v2032 = vadd.f32 %v1940, %v2031
    %v2033 = vpop.f32.mrb[0].mxu0
    %v2034 = vpop.f32.mrb[0].mxu0
    %v2035 = vadd.f32 %v1940, %v2034
    %v2036 = vpop.f32.mrb[0].mxu0
    %2037 = vmatprep.mubr.bf16.mxu0 0
    %2038 = vmatmul.mubr.bf16.gmra.mrb[0].mxu0 %v1917
    %v2039 = vpop.f32.mrb[0].mxu0
    %v2040 = vadd.f32 %v1940, %v2039
    %v2041 = vpop.f32.mrb[0].mxu0
    %v2042 = vpop.f32.mrb[0].mxu0
    %v2043 = vadd.f32 %v1940, %v2042
    %v2044 = vpop.f32.mrb[0].mxu0
    %2045 = vmatprep.mubr.bf16.mxu0 0
    %2046 = vmatmul.mubr.bf16.gmra.mrb[0].mxu0 %v1918
    %v2047 = vpop.f32.mrb[0].mxu0
    %v2048 = vadd.f32 %v1940, %v2047
    %v2049 = vpop.f32.mrb[0].mxu0
    %v2050 = vpop.f32.mrb[0].mxu0
    %v2051 = vadd.f32 %v1940, %v2050
    %v2052 = vpop.f32.mrb[0].mxu0
    %2053 = vdwg.mxu0
    %v2054 = vadd.f32 %v2024, %v1760
    %v2055 = vadd.f32 %v2027, %v1761
    %v2056 = vadd.f32 %v2032, %v1762
    %v2057 = vadd.f32 %v2035, %v1763
    %v2058 = vadd.f32 %v2040, %v1764
    %v2059 = vadd.f32 %v2043, %v1765
    %v2060 = vadd.f32 %v2048, %v1766
    %v2061 = vadd.f32 %v2051, %v1767
    %v2062 = vmax.f32 %v2054, 0.0
    %v2063 = vmax.f32 %v2055, 0.0
    %v2064 = vmax.f32 %v2056, 0.0
    %v2065 = vmax.f32 %v2057, 0.0
    %v2066 = vmax.f32 %v2058, 0.0
    %v2067 = vmax.f32 %v2059, 0.0
    %v2068 = vmax.f32 %v2060, 0.0
    %v2069 = vmax.f32 %v2061, 0.0
    %v2070 = vpack.c.bf16 %v2063, %v2062
    %v2071 = vpack.c.bf16 %v2065, %v2064
    %v2072 = vpack.c.bf16 %v2067, %v2066
    %v2073 = vpack.c.bf16 %v2069, %v2068
    %s2074 = scalar_lea.vmem %s1, 576
    %v2075 = vld [vmem:[%s2074] sm:$0xf]
    %v2076 = vld [vmem:[%s2074 + $0x4] sm:$0xf]
    %v2077 = vld [vmem:[%s2074 + $0x8] sm:$0xf]
    %v2078 = vld [vmem:[%s2074 + $0xc] sm:$0xf]
    %v2079 = vld [vmem:[%s2074 + $0x10] sm:$0xf]
    %v2080 = vld [vmem:[%s2074 + $0x14] sm:$0xf]
    %v2081 = vld [vmem:[%s2074 + $0x18] sm:$0xf]
    %v2082 = vld [vmem:[%s2074 + $0x1c] sm:$0xf]
    %v2083 = vld [vmem:[%s2074 + $0x20] sm:$0xf]
    %v2084 = vld [vmem:[%s2074 + $0x24] sm:$0xf]
    %v2085 = vld [vmem:[%s2074 + $0x28] sm:$0xf]
    %v2086 = vld [vmem:[%s2074 + $0x2c] sm:$0xf]
    %v2087 = vld [vmem:[%s2074 + $0x30] sm:$0xf]
    %v2088 = vld [vmem:[%s2074 + $0x34] sm:$0xf]
    %v2089 = vld [vmem:[%s2074 + $0x38] sm:$0xf]
    %v2090 = vld [vmem:[%s2074 + $0x3c] sm:$0xf]
    %v2091 = vld [vmem:[%s3 + $0xc] sm:$0x1]
    %v2092 = vlaneseq
    %v2093 = vshrl.u32 %v2092, 7
    %v2094 = vsub.s32 0, %v2093
    %v2095 = vrot.slane %v2091, %v2094
    %v2112 = vunpack.c.l.b16 %v2075
    %v2113 = vunpack.c.l.b16 %v2076
    %v2114 = vunpack.c.l.b16 %v2077
    %v2115 = vunpack.c.l.b16 %v2078
    %v2116 = vunpack.c.l.b16 %v2079
    %v2117 = vunpack.c.l.b16 %v2080
    %v2118 = vunpack.c.l.b16 %v2081
    %v2119 = vunpack.c.l.b16 %v2082
    %v2120 = vunpack.c.l.b16 %v2083
    %v2121 = vunpack.c.l.b16 %v2084
    %v2122 = vunpack.c.l.b16 %v2085
    %v2123 = vunpack.c.l.b16 %v2086
    %v2124 = vunpack.c.l.b16 %v2087
    %v2125 = vunpack.c.l.b16 %v2088
    %v2126 = vunpack.c.l.b16 %v2089
    %v2127 = vunpack.c.l.b16 %v2090
    %v2128 = vpack.c.b16 %v2113, %v2112
    %v2129 = vpack.c.b16 %v2115, %v2114
    %v2130 = vpack.c.b16 %v2117, %v2116
    %v2131 = vpack.c.b16 %v2119, %v2118
    %v2132 = vpack.c.b16 %v2121, %v2120
    %v2133 = vpack.c.b16 %v2123, %v2122
    %v2134 = vpack.c.b16 %v2125, %v2124
    %v2135 = vpack.c.b16 %v2127, %v2126
    %2144 = vmatprep.subr.bf16.mxu0 0
    %2145 = vmatpush1.bf16.msra.mxu0 %v2128
    %2146 = vmatprep.subr.bf16.mxu0 0
    %2147 = vmatpush1.bf16.msra.mxu0 %v2129
    %2148 = vmatprep.subr.bf16.mxu0 0
    %2149 = vmatpush1.bf16.msra.mxu0 %v2130
    %2150 = vmatprep.subr.bf16.mxu0 0
    %2151 = vmatpush1.bf16.msra.mxu0 %v2131
    %2152 = vmatprep.subr.bf16.mxu0 0
    %2153 = vmatpush1.bf16.msra.mxu0 %v2132
    %2154 = vmatprep.subr.bf16.mxu0 0
    %2155 = vmatpush1.bf16.msra.mxu0 %v2133
    %2156 = vmatprep.subr.bf16.mxu0 0
    %2157 = vmatpush1.bf16.msra.mxu0 %v2134
    %2158 = vmatprep.subr.bf16.mxu0 0
    %2159 = vmatpush1.bf16.msra.mxu0 %v2135
    %2160 = vmatprep.subr.bf16.mxu0 0
    %2161 = vmatpush1.bf16.msra.mxu0 0
    %2162 = vmatprep.subr.bf16.mxu0 0
    %2163 = vmatpush1.bf16.msra.mxu0 0
    %2164 = vmatprep.subr.bf16.mxu0 0
    %2165 = vmatpush1.bf16.msra.mxu0 0
    %2166 = vmatprep.subr.bf16.mxu0 0
    %2167 = vmatpush1.bf16.msra.mxu0 0
    %2168 = vmatprep.subr.bf16.mxu0 0
    %2169 = vmatpush1.bf16.msra.mxu0 0
    %2170 = vmatprep.subr.bf16.mxu0 0
    %2171 = vmatpush1.bf16.msra.mxu0 0
    %2172 = vmatprep.subr.bf16.mxu0 0
    %2173 = vmatpush1.bf16.msra.mxu0 0
    %2174 = vmatprep.subr.bf16.mxu0 0
    %2175 = vmatpush1.bf16.msra.mxu0 0
    %2176 = vmatprep.mubr.bf16.mxu0 0
    %2177 = vmatmul.mubr.bf16.gmra.mrb[0].mxu0 %v2070
    %v2178 = vpop.f32.mrb[0].mxu0
    %v2179 = vadd.f32 %v2095, %v2178
    %v2180 = vpop.f32.mrb[0].mxu0
    %v2181 = vpop.f32.mrb[0].mxu0
    %v2182 = vadd.f32 %v2095, %v2181
    %v2183 = vpop.f32.mrb[0].mxu0
    %2184 = vmatprep.mubr.bf16.mxu0 0
    %2185 = vmatmul.mubr.bf16.gmra.mrb[0].mxu0 %v2071
    %v2186 = vpop.f32.mrb[0].mxu0
    %v2187 = vadd.f32 %v2095, %v2186
    %v2188 = vpop.f32.mrb[0].mxu0
    %v2189 = vpop.f32.mrb[0].mxu0
    %v2190 = vadd.f32 %v2095, %v2189
    %v2191 = vpop.f32.mrb[0].mxu0
    %2192 = vmatprep.mubr.bf16.mxu0 0
    %2193 = vmatmul.mubr.bf16.gmra.mrb[0].mxu0 %v2072
    %v2194 = vpop.f32.mrb[0].mxu0
    %v2195 = vadd.f32 %v2095, %v2194
    %v2196 = vpop.f32.mrb[0].mxu0
    %v2197 = vpop.f32.mrb[0].mxu0
    %v2198 = vadd.f32 %v2095, %v2197
    %v2199 = vpop.f32.mrb[0].mxu0
    %2200 = vmatprep.mubr.bf16.mxu0 0
    %2201 = vmatmul.mubr.bf16.gmra.mrb[0].mxu0 %v2073
    %v2202 = vpop.f32.mrb[0].mxu0
    %v2203 = vadd.f32 %v2095, %v2202
    %v2204 = vpop.f32.mrb[0].mxu0
    %v2205 = vpop.f32.mrb[0].mxu0
    %v2206 = vadd.f32 %v2095, %v2205
    %v2207 = vpop.f32.mrb[0].mxu0
    %2208 = vdwg.mxu0
    %v2209 = vpack.c.bf16 %v2182, %v2179
    %v2210 = vpack.c.bf16 %v2190, %v2187
    %v2211 = vpack.c.bf16 %v2198, %v2195
    %v2212 = vpack.c.bf16 %v2206, %v2203
    %s2213 = scalar_lea.vmem %s1, 640
    %v2214 = vld [vmem:[%s2213] sm:$0xf]
    %v2215 = vld [vmem:[%s2213 + $0x4] sm:$0xf]
    %v2216 = vld [vmem:[%s2213 + $0x8] sm:$0xf]
    %v2217 = vld [vmem:[%s2213 + $0xc] sm:$0xf]
    %v2218 = vld [vmem:[%s2213 + $0x10] sm:$0xf]
    %v2219 = vld [vmem:[%s2213 + $0x14] sm:$0xf]
    %v2220 = vld [vmem:[%s2213 + $0x18] sm:$0xf]
    %v2221 = vld [vmem:[%s2213 + $0x1c] sm:$0xf]
    %v2222 = vld [vmem:[%s2213 + $0x20] sm:$0xf]
    %v2223 = vld [vmem:[%s2213 + $0x24] sm:$0xf]
    %v2224 = vld [vmem:[%s2213 + $0x28] sm:$0xf]
    %v2225 = vld [vmem:[%s2213 + $0x2c] sm:$0xf]
    %v2226 = vld [vmem:[%s2213 + $0x30] sm:$0xf]
    %v2227 = vld [vmem:[%s2213 + $0x34] sm:$0xf]
    %v2228 = vld [vmem:[%s2213 + $0x38] sm:$0xf]
    %v2229 = vld [vmem:[%s2213 + $0x3c] sm:$0xf]
    %v2246 = vunpack.c.l.b16 %v2214
    %v2247 = vunpack.c.l.b16 %v2215
    %v2248 = vunpack.c.l.b16 %v2216
    %v2249 = vunpack.c.l.b16 %v2217
    %v2250 = vunpack.c.l.b16 %v2218
    %v2251 = vunpack.c.l.b16 %v2219
    %v2252 = vunpack.c.l.b16 %v2220
    %v2253 = vunpack.c.l.b16 %v2221
    %v2254 = vunpack.c.l.b16 %v2222
    %v2255 = vunpack.c.l.b16 %v2223
    %v2256 = vunpack.c.l.b16 %v2224
    %v2257 = vunpack.c.l.b16 %v2225
    %v2258 = vunpack.c.l.b16 %v2226
    %v2259 = vunpack.c.l.b16 %v2227
    %v2260 = vunpack.c.l.b16 %v2228
    %v2261 = vunpack.c.l.b16 %v2229
    %v2262 = vpack.c.b16 %v2247, %v2246
    %v2263 = vpack.c.b16 %v2249, %v2248
    %v2264 = vpack.c.b16 %v2251, %v2250
    %v2265 = vpack.c.b16 %v2253, %v2252
    %v2266 = vpack.c.b16 %v2255, %v2254
    %v2267 = vpack.c.b16 %v2257, %v2256
    %v2268 = vpack.c.b16 %v2259, %v2258
    %v2269 = vpack.c.b16 %v2261, %v2260
    %2278 = vmatprep.subr.bf16.mxu0 0
    %2279 = vmatpush1.bf16.msra.mxu0 %v2262
    %2280 = vmatprep.subr.bf16.mxu0 0
    %2281 = vmatpush1.bf16.msra.mxu0 %v2263
    %2282 = vmatprep.subr.bf16.mxu0 0
    %2283 = vmatpush1.bf16.msra.mxu0 %v2264
    %2284 = vmatprep.subr.bf16.mxu0 0
    %2285 = vmatpush1.bf16.msra.mxu0 %v2265
    %2286 = vmatprep.subr.bf16.mxu0 0
    %2287 = vmatpush1.bf16.msra.mxu0 %v2266
    %2288 = vmatprep.subr.bf16.mxu0 0
    %2289 = vmatpush1.bf16.msra.mxu0 %v2267
    %2290 = vmatprep.subr.bf16.mxu0 0
    %2291 = vmatpush1.bf16.msra.mxu0 %v2268
    %2292 = vmatprep.subr.bf16.mxu0 0
    %2293 = vmatpush1.bf16.msra.mxu0 %v2269
    %2294 = vmatprep.subr.bf16.mxu0 0
    %2295 = vmatpush1.bf16.msra.mxu0 0
    %2296 = vmatprep.subr.bf16.mxu0 0
    %2297 = vmatpush1.bf16.msra.mxu0 0
    %2298 = vmatprep.subr.bf16.mxu0 0
    %2299 = vmatpush1.bf16.msra.mxu0 0
    %2300 = vmatprep.subr.bf16.mxu0 0
    %2301 = vmatpush1.bf16.msra.mxu0 0
    %2302 = vmatprep.subr.bf16.mxu0 0
    %2303 = vmatpush1.bf16.msra.mxu0 0
    %2304 = vmatprep.subr.bf16.mxu0 0
    %2305 = vmatpush1.bf16.msra.mxu0 0
    %2306 = vmatprep.subr.bf16.mxu0 0
    %2307 = vmatpush1.bf16.msra.mxu0 0
    %2308 = vmatprep.subr.bf16.mxu0 0
    %2309 = vmatpush1.bf16.msra.mxu0 0
    %2310 = vmatprep.mubr.bf16.mxu0 0
    %2311 = vmatmul.mubr.bf16.gmra.mrb[0].mxu0 %v2209
    %v2312 = vpop.f32.mrb[0].mxu0
    %v2313 = vadd.f32 0.0, %v2312
    %v2314 = vpop.f32.mrb[0].mxu0
    %v2315 = vpop.f32.mrb[0].mxu0
    %v2316 = vadd.f32 0.0, %v2315
    %v2317 = vpop.f32.mrb[0].mxu0
    %2318 = vmatprep.mubr.bf16.mxu0 0
    %2319 = vmatmul.mubr.bf16.gmra.mrb[0].mxu0 %v2210
    %v2320 = vpop.f32.mrb[0].mxu0
    %v2321 = vadd.f32 0.0, %v2320
    %v2322 = vpop.f32.mrb[0].mxu0
    %v2323 = vpop.f32.mrb[0].mxu0
    %v2324 = vadd.f32 0.0, %v2323
    %v2325 = vpop.f32.mrb[0].mxu0
    %2326 = vmatprep.mubr.bf16.mxu0 0
    %2327 = vmatmul.mubr.bf16.gmra.mrb[0].mxu0 %v2211
    %v2328 = vpop.f32.mrb[0].mxu0
    %v2329 = vadd.f32 0.0, %v2328
    %v2330 = vpop.f32.mrb[0].mxu0
    %v2331 = vpop.f32.mrb[0].mxu0
    %v2332 = vadd.f32 0.0, %v2331
    %v2333 = vpop.f32.mrb[0].mxu0
    %2334 = vmatprep.mubr.bf16.mxu0 0
    %2335 = vmatmul.mubr.bf16.gmra.mrb[0].mxu0 %v2212
    %v2336 = vpop.f32.mrb[0].mxu0
    %v2337 = vadd.f32 0.0, %v2336
    %v2338 = vpop.f32.mrb[0].mxu0
    %v2339 = vpop.f32.mrb[0].mxu0
    %v2340 = vadd.f32 0.0, %v2339
    %v2341 = vpop.f32.mrb[0].mxu0
    %2342 = vdwg.mxu0
    %v2343 = vtanh.pop %v2313
    %v2344 = vtanh.pop %v2316
    %v2345 = vtanh.pop %v2321
    %v2346 = vtanh.pop %v2324
    %v2347 = vtanh.pop %v2329
    %v2348 = vtanh.pop %v2332
    %v2349 = vtanh.pop %v2337
    %v2350 = vtanh.pop %v2340
    %v2351 = vpack.c.bf16 %v2344, %v2343
    %v2352 = vpack.c.bf16 %v2346, %v2345
    %v2353 = vpack.c.bf16 %v2348, %v2347
    %v2354 = vpack.c.bf16 %v2350, %v2349
    %v2355 = vld [vmem:[%s4] sm:$0xf]
    %v2356 = vld [vmem:[%s4 + $0x4] sm:$0xf]
    %v2357 = vld [vmem:[%s4 + $0x8] sm:$0xf]
    %v2358 = vld [vmem:[%s4 + $0xc] sm:$0xf]
    %v2359 = vld [vmem:[%s4 + $0x10] sm:$0xf]
    %v2360 = vld [vmem:[%s4 + $0x14] sm:$0xf]
    %v2361 = vld [vmem:[%s4 + $0x18] sm:$0xf]
    %v2362 = vld [vmem:[%s4 + $0x1c] sm:$0xf]
    %v2363 = vld [vmem:[%s4 + $0x20] sm:$0xf]
    %v2364 = vld [vmem:[%s4 + $0x24] sm:$0xf]
    %v2365 = vld [vmem:[%s4 + $0x28] sm:$0xf]
    %v2366 = vld [vmem:[%s4 + $0x2c] sm:$0xf]
    %v2367 = vld [vmem:[%s4 + $0x30] sm:$0xf]
    %v2368 = vld [vmem:[%s4 + $0x34] sm:$0xf]
    %v2369 = vld [vmem:[%s4 + $0x38] sm:$0xf]
    %v2370 = vld [vmem:[%s4 + $0x3c] sm:$0xf]
    %v2387 = vunpack.c.l.b16 %v2355
    %v2388 = vunpack.c.l.b16 %v2356
    %v2389 = vunpack.c.l.b16 %v2357
    %v2390 = vunpack.c.l.b16 %v2358
    %v2391 = vunpack.c.l.b16 %v2359
    %v2392 = vunpack.c.l.b16 %v2360
    %v2393 = vunpack.c.l.b16 %v2361
    %v2394 = vunpack.c.l.b16 %v2362
    %v2395 = vunpack.c.l.b16 %v2363
    %v2396 = vunpack.c.l.b16 %v2364
    %v2397 = vunpack.c.l.b16 %v2365
    %v2398 = vunpack.c.l.b16 %v2366
    %v2399 = vunpack.c.l.b16 %v2367
    %v2400 = vunpack.c.l.b16 %v2368
    %v2401 = vunpack.c.l.b16 %v2369
    %v2402 = vunpack.c.l.b16 %v2370
    %v2403 = vpack.c.b16 %v2388, %v2387
    %v2404 = vpack.c.b16 %v2390, %v2389
    %v2405 = vpack.c.b16 %v2392, %v2391
    %v2406 = vpack.c.b16 %v2394, %v2393
    %v2407 = vpack.c.b16 %v2396, %v2395
    %v2408 = vpack.c.b16 %v2398, %v2397
    %v2409 = vpack.c.b16 %v2400, %v2399
    %v2410 = vpack.c.b16 %v2402, %v2401
    %2419 = vmatprep.subr.bf16.mxu0 0
    %2420 = vmatpush1.bf16.msra.mxu0 %v2403
    %2421 = vmatprep.subr.bf16.mxu0 0
    %2422 = vmatpush1.bf16.msra.mxu0 %v2404
    %2423 = vmatprep.subr.bf16.mxu0 0
    %2424 = vmatpush1.bf16.msra.mxu0 %v2405
    %2425 = vmatprep.subr.bf16.mxu0 0
    %2426 = vmatpush1.bf16.msra.mxu0 %v2406
    %2427 = vmatprep.subr.bf16.mxu0 0
    %2428 = vmatpush1.bf16.msra.mxu0 %v2407
    %2429 = vmatprep.subr.bf16.mxu0 0
    %2430 = vmatpush1.bf16.msra.mxu0 %v2408
    %2431 = vmatprep.subr.bf16.mxu0 0
    %2432 = vmatpush1.bf16.msra.mxu0 %v2409
    %2433 = vmatprep.subr.bf16.mxu0 0
    %2434 = vmatpush1.bf16.msra.mxu0 %v2410
    %2435 = vmatprep.subr.bf16.mxu0 0
    %2436 = vmatpush1.bf16.msra.mxu0 0
    %2437 = vmatprep.subr.bf16.mxu0 0
    %2438 = vmatpush1.bf16.msra.mxu0 0
    %2439 = vmatprep.subr.bf16.mxu0 0
    %2440 = vmatpush1.bf16.msra.mxu0 0
    %2441 = vmatprep.subr.bf16.mxu0 0
    %2442 = vmatpush1.bf16.msra.mxu0 0
    %2443 = vmatprep.subr.bf16.mxu0 0
    %2444 = vmatpush1.bf16.msra.mxu0 0
    %2445 = vmatprep.subr.bf16.mxu0 0
    %2446 = vmatpush1.bf16.msra.mxu0 0
    %2447 = vmatprep.subr.bf16.mxu0 0
    %2448 = vmatpush1.bf16.msra.mxu0 0
    %2449 = vmatprep.subr.bf16.mxu0 0
    %2450 = vmatpush1.bf16.msra.mxu0 0
    %2451 = vmatprep.mubr.bf16.mxu0 0
    %2452 = vmatmul.mubr.bf16.gmra.mrb[0].mxu0 %v2351
    %v2453 = vpop.f32.mrb[0].mxu0
    %v2454 = vadd.f32 0.0, %v2453
    %v2455 = vpop.f32.mrb[0].mxu0
    %v2456 = vpop.f32.mrb[0].mxu0
    %v2457 = vadd.f32 0.0, %v2456
    %v2458 = vpop.f32.mrb[0].mxu0
    %2459 = vmatprep.mubr.bf16.mxu0 0
    %2460 = vmatmul.mubr.bf16.gmra.mrb[0].mxu0 %v2352
    %v2461 = vpop.f32.mrb[0].mxu0
    %v2462 = vpop.f32.mrb[0].mxu0
    %v2463 = vpop.f32.mrb[0].mxu0
    %v2464 = vpop.f32.mrb[0].mxu0
    %2465 = vmatprep.mubr.bf16.mxu0 0
    %2466 = vmatmul.mubr.bf16.gmra.mrb[0].mxu0 %v2353
    %v2467 = vpop.f32.mrb[0].mxu0
    %v2468 = vadd.f32 0.0, %v2467
    %v2469 = vpop.f32.mrb[0].mxu0
    %v2470 = vpop.f32.mrb[0].mxu0
    %v2471 = vadd.f32 0.0, %v2470
    %v2472 = vpop.f32.mrb[0].mxu0
    %2473 = vmatprep.mubr.bf16.mxu0 0
    %2474 = vmatmul.mubr.bf16.gmra.mrb[0].mxu0 %v2354
    %v2475 = vpop.f32.mrb[0].mxu0
    %v2476 = vpop.f32.mrb[0].mxu0
    %v2477 = vpop.f32.mrb[0].mxu0
    %v2478 = vpop.f32.mrb[0].mxu0
    %2479 = vdwg.mxu0
    %2480 = vxpose.xlu0.b32.start [1/16] %v2454, 128
    %2481 = vxpose.xlu0.b32.cont [2/16] %v2457, 128
    %2482 = vxpose.xlu0.b32.cont [3/16] 0.0, 128
    %2483 = vxpose.xlu0.b32.cont [4/16] 0.0, 128
    %2484 = vxpose.xlu0.b32.cont [5/16] 0.0, 128
    %2485 = vxpose.xlu0.b32.cont [6/16] 0.0, 128
    %2486 = vxpose.xlu0.b32.cont [7/16] 0.0, 128
    %2487 = vxpose.xlu0.b32.cont [8/16] 0.0, 128
    %2488 = vxpose.xlu0.b32.cont [9/16] 0.0, 128
    %2489 = vxpose.xlu0.b32.cont [10/16] 0.0, 128
    %2490 = vxpose.xlu0.b32.cont [11/16] 0.0, 128
    %2491 = vxpose.xlu0.b32.cont [12/16] 0.0, 128
    %2492 = vxpose.xlu0.b32.cont [13/16] 0.0, 128
    %2493 = vxpose.xlu0.b32.cont [14/16] 0.0, 128
    %2494 = vxpose.xlu0.b32.cont [15/16] 0.0, 128
    %2495 = vxpose.xlu0.b32.end [16/16] 0.0, 128
    %v2496 = vpop.trf.xlu0
    %v2497 = vpop.trf.xlu0
    %v2498 = vpop.trf.xlu0
    %v2499 = vpop.trf.xlu0
    %v2500 = vpop.trf.xlu0
    %v2501 = vpop.trf.xlu0
    %v2502 = vpop.trf.xlu0
    %v2503 = vpop.trf.xlu0
    %v2504 = vpop.trf.xlu0
    %v2505 = vpop.trf.xlu0
    %v2506 = vpop.trf.xlu0
    %v2507 = vpop.trf.xlu0
    %v2508 = vpop.trf.xlu0
    %v2509 = vpop.trf.xlu0
    %v2510 = vpop.trf.xlu0
    %v2511 = vpop.trf.xlu0
    %2512 = vxpose.xlu0.b32.start [1/16] %v2468, 128
    %2513 = vxpose.xlu0.b32.cont [2/16] %v2471, 128
    %2514 = vxpose.xlu0.b32.cont [3/16] 0.0, 128
    %2515 = vxpose.xlu0.b32.cont [4/16] 0.0, 128
    %2516 = vxpose.xlu0.b32.cont [5/16] 0.0, 128
    %2517 = vxpose.xlu0.b32.cont [6/16] 0.0, 128
    %2518 = vxpose.xlu0.b32.cont [7/16] 0.0, 128
    %2519 = vxpose.xlu0.b32.cont [8/16] 0.0, 128
    %2520 = vxpose.xlu0.b32.cont [9/16] 0.0, 128
    %2521 = vxpose.xlu0.b32.cont [10/16] 0.0, 128
    %2522 = vxpose.xlu0.b32.cont [11/16] 0.0, 128
    %2523 = vxpose.xlu0.b32.cont [12/16] 0.0, 128
    %2524 = vxpose.xlu0.b32.cont [13/16] 0.0, 128
    %2525 = vxpose.xlu0.b32.cont [14/16] 0.0, 128
    %2526 = vxpose.xlu0.b32.cont [15/16] 0.0, 128
    %2527 = vxpose.xlu0.b32.end [16/16] 0.0, 128
    %v2528 = vpop.trf.xlu0
    %v2529 = vpop.trf.xlu0
    %v2530 = vpop.trf.xlu0
    %v2531 = vpop.trf.xlu0
    %v2532 = vpop.trf.xlu0
    %v2533 = vpop.trf.xlu0
    %v2534 = vpop.trf.xlu0
    %v2535 = vpop.trf.xlu0
    %v2536 = vpop.trf.xlu0
    %v2537 = vpop.trf.xlu0
    %v2538 = vpop.trf.xlu0
    %v2539 = vpop.trf.xlu0
    %v2540 = vpop.trf.xlu0
    %v2541 = vpop.trf.xlu0
    %v2542 = vpop.trf.xlu0
    %v2543 = vpop.trf.xlu0
    %vm2544 = vcmask 110592
    %v2545 = vsel %vm2544, %v2496, -inf
    %2546 = vmax.xlane.f32.xlu0 %v2545
    %v2547 = vpop.xlane.xlu0 %2546
    %v2548 = vsel %vm2544, %v2528, -inf
    %2549 = vmax.xlane.f32.xlu0 %v2548
    %v2550 = vpop.xlane.xlu0 %2549
    %v2551 = vsub.f32 %v2496, %v2547
    %v2552 = vsub.f32 %v2528, %v2550
    %v2553 = vmul.f32 %v2551, 1.442695
    %v2554 = vpow.pop %v2553
    %v2555 = vmul.f32 %v2552, 1.442695
    %v2556 = vpow.pop %v2555
    %v2557 = vsel %vm2544, %v2554, 0.0
    %2558 = vadd.xlane.f32.xlu0 %v2557
    %v2559 = vpop.xlane.xlu0 %2558
    %v2560 = vsel %vm2544, %v2556, 0.0
    %2561 = vadd.xlane.f32.xlu0 %v2560
    %v2562 = vpop.xlane.xlu0 %2561
    %v2563 = vrcp.pop %v2559
    %v2564 = vmul.f32 %v2554, %v2563
    %v2565 = vrcp.pop %v2562
    %v2566 = vmul.f32 %v2556, %v2565
    %2567 = vst.msk [vmem:[%s7] sm:$0x1f] %vm2544, %v2564
    %2568 = vst.msk [vmem:[%s7 + $0x8] sm:$0x1f] %vm2544, %v2566
    %vm2569 = vcmask 113664
    %v2571 = vsel %vm2569, %v2564, 0
    %vm2573 = vcmask 1045504
    %v2575 = vsel %vm2573, %v2182, 0
    %2577 = vmatprep.subr.mxu0 0.0
    %2578 = vmatpush1.msra.mxu0 %v2179
    %2579 = vmatprep.subr.mxu0 0.0
    %2580 = vmatpush1.msra.mxu0 %v2575
    %2581 = vmatprep.subr.mxu0 0.0
    %2582 = vmatpush1.msra.mxu0 0.0
    %2583 = vmatprep.subr.mxu0 0.0
    %2584 = vmatpush1.msra.mxu0 0.0
    %2585 = vmatprep.subr.mxu0 0.0
    %2586 = vmatpush1.msra.mxu0 0.0
    %2587 = vmatprep.subr.mxu0 0.0
    %2588 = vmatpush1.msra.mxu0 0.0
    %2589 = vmatprep.subr.mxu0 0.0
    %2590 = vmatpush1.msra.mxu0 0.0
    %2591 = vmatprep.subr.mxu0 0.0
    %2592 = vmatpush1.msra.mxu0 0.0
    %2593 = vmatprep.subr.mxu0 0.0
    %2594 = vmatpush1.msra.mxu0 0.0
    %2595 = vmatprep.subr.mxu0 0.0
    %2596 = vmatpush1.msra.mxu0 0.0
    %2597 = vmatprep.subr.mxu0 0.0
    %2598 = vmatpush1.msra.mxu0 0.0
    %2599 = vmatprep.subr.mxu0 0.0
    %2600 = vmatpush1.msra.mxu0 0.0
    %2601 = vmatprep.subr.mxu0 0.0
    %2602 = vmatpush1.msra.mxu0 0.0
    %2603 = vmatprep.subr.mxu0 0.0
    %2604 = vmatpush1.msra.mxu0 0.0
    %2605 = vmatprep.subr.mxu0 0.0
    %2606 = vmatpush1.msra.mxu0 0.0
    %2607 = vmatprep.subr.mxu0 0.0
    %2608 = vmatpush1.msra.mxu0 0.0
    %2609 = vmatprep.subr.mxu0 0.0
    %2610 = vmatpush1.msra.mxu0 0.0
    %2611 = vmatprep.subr.mxu0 0.0
    %2612 = vmatpush1.msra.mxu0 0.0
    %2613 = vmatprep.subr.mxu0 0.0
    %2614 = vmatpush1.msra.mxu0 0.0
    %2615 = vmatprep.subr.mxu0 0.0
    %2616 = vmatpush1.msra.mxu0 0.0
    %2617 = vmatprep.subr.mxu0 0.0
    %2618 = vmatpush1.msra.mxu0 0.0
    %2619 = vmatprep.subr.mxu0 0.0
    %2620 = vmatpush1.msra.mxu0 0.0
    %2621 = vmatprep.subr.mxu0 0.0
    %2622 = vmatpush1.msra.mxu0 0.0
    %2623 = vmatprep.subr.mxu0 0.0
    %2624 = vmatpush1.msra.mxu0 0.0
    %2625 = vmatprep.subr.mxu0 0.0
    %2626 = vmatpush1.msra.mxu0 0.0
    %2627 = vmatprep.subr.mxu0 0.0
    %2628 = vmatpush1.msra.mxu0 0.0
    %2629 = vmatprep.subr.mxu0 0.0
    %2630 = vmatpush1.msra.mxu0 0.0
    %2631 = vmatprep.subr.mxu0 0.0
    %2632 = vmatpush1.msra.mxu0 0.0
    %2633 = vmatprep.subr.mxu0 0.0
    %2634 = vmatpush1.msra.mxu0 0.0
    %2635 = vmatprep.subr.mxu0 0.0
    %2636 = vmatpush1.msra.mxu0 0.0
    %2637 = vmatprep.subr.mxu0 0.0
    %2638 = vmatpush1.msra.mxu0 0.0
    %2639 = vmatprep.subr.mxu0 0.0
    %2640 = vmatpush1.msra.mxu0 0.0
    %2641 = vmatprep.mubr.f32.mxu0 0.0
    %2642 = vmatmul.mubr.f32.gmra.mrb[0].mxu0 %v2571
    %v2643 = vpop.f32.mrb[0].mxu0
    %v2644 = vadd.f32 0.0, %v2643
    %v2645 = vpop.f32.mrb[0].mxu0
    %2646 = vdwg.mxu0
    %v2648 = vsel %vm2569, %v2566, 0
    %v2651 = vsel %vm2573, %v2198, 0
    %2653 = vmatprep.subr.mxu0 0.0
    %2654 = vmatpush1.msra.mxu0 %v2195
    %2655 = vmatprep.subr.mxu0 0.0
    %2656 = vmatpush1.msra.mxu0 %v2651
    %2657 = vmatprep.subr.mxu0 0.0
    %2658 = vmatpush1.msra.mxu0 0.0
    %2659 = vmatprep.subr.mxu0 0.0
    %2660 = vmatpush1.msra.mxu0 0.0
    %2661 = vmatprep.subr.mxu0 0.0
    %2662 = vmatpush1.msra.mxu0 0.0
    %2663 = vmatprep.subr.mxu0 0.0
    %2664 = vmatpush1.msra.mxu0 0.0
    %2665 = vmatprep.subr.mxu0 0.0
    %2666 = vmatpush1.msra.mxu0 0.0
    %2667 = vmatprep.subr.mxu0 0.0
    %2668 = vmatpush1.msra.mxu0 0.0
    %2669 = vmatprep.subr.mxu0 0.0
    %2670 = vmatpush1.msra.mxu0 0.0
    %2671 = vmatprep.subr.mxu0 0.0
    %2672 = vmatpush1.msra.mxu0 0.0
    %2673 = vmatprep.subr.mxu0 0.0
    %2674 = vmatpush1.msra.mxu0 0.0
    %2675 = vmatprep.subr.mxu0 0.0
    %2676 = vmatpush1.msra.mxu0 0.0
    %2677 = vmatprep.subr.mxu0 0.0
    %2678 = vmatpush1.msra.mxu0 0.0
    %2679 = vmatprep.subr.mxu0 0.0
    %2680 = vmatpush1.msra.mxu0 0.0
    %2681 = vmatprep.subr.mxu0 0.0
    %2682 = vmatpush1.msra.mxu0 0.0
    %2683 = vmatprep.subr.mxu0 0.0
    %2684 = vmatpush1.msra.mxu0 0.0
    %2685 = vmatprep.subr.mxu0 0.0
    %2686 = vmatpush1.msra.mxu0 0.0
    %2687 = vmatprep.subr.mxu0 0.0
    %2688 = vmatpush1.msra.mxu0 0.0
    %2689 = vmatprep.subr.mxu0 0.0
    %2690 = vmatpush1.msra.mxu0 0.0
    %2691 = vmatprep.subr.mxu0 0.0
    %2692 = vmatpush1.msra.mxu0 0.0
    %2693 = vmatprep.subr.mxu0 0.0
    %2694 = vmatpush1.msra.mxu0 0.0
    %2695 = vmatprep.subr.mxu0 0.0
    %2696 = vmatpush1.msra.mxu0 0.0
    %2697 = vmatprep.subr.mxu0 0.0
    %2698 = vmatpush1.msra.mxu0 0.0
    %2699 = vmatprep.subr.mxu0 0.0
    %2700 = vmatpush1.msra.mxu0 0.0
    %2701 = vmatprep.subr.mxu0 0.0
    %2702 = vmatpush1.msra.mxu0 0.0
    %2703 = vmatprep.subr.mxu0 0.0
    %2704 = vmatpush1.msra.mxu0 0.0
    %2705 = vmatprep.subr.mxu0 0.0
    %2706 = vmatpush1.msra.mxu0 0.0
    %2707 = vmatprep.subr.mxu0 0.0
    %2708 = vmatpush1.msra.mxu0 0.0
    %2709 = vmatprep.subr.mxu0 0.0
    %2710 = vmatpush1.msra.mxu0 0.0
    %2711 = vmatprep.subr.mxu0 0.0
    %2712 = vmatpush1.msra.mxu0 0.0
    %2713 = vmatprep.subr.mxu0 0.0
    %2714 = vmatpush1.msra.mxu0 0.0
    %2715 = vmatprep.subr.mxu0 0.0
    %2716 = vmatpush1.msra.mxu0 0.0
    %2717 = vmatprep.mubr.f32.mxu0 0.0
    %2718 = vmatmul.mubr.f32.gmra.mrb[0].mxu0 %v2648
    %v2719 = vpop.f32.mrb[0].mxu0
    %v2720 = vadd.f32 0.0, %v2719
    %v2721 = vpop.f32.mrb[0].mxu0
    %2722 = vdwg.mxu0
    %v2723 = vpack.c.bf16 %v2644, %v2644
    %v2724 = vpack.c.bf16 %v2720, %v2720
    %v2725 = vld [vmem:[%s3 + $0xd] sm:$0x1]
    %v2726 = vld [vmem:[%s5] sm:$0xf]
    %v2727 = vld [vmem:[%s5 + $0x4] sm:$0xf]
    %v2728 = vld [vmem:[%s5 + $0x8] sm:$0xf]
    %v2729 = vld [vmem:[%s5 + $0xc] sm:$0xf]
    %v2730 = vld [vmem:[%s5 + $0x10] sm:$0xf]
    %v2731 = vld [vmem:[%s5 + $0x14] sm:$0xf]
    %v2732 = vld [vmem:[%s5 + $0x18] sm:$0xf]
    %v2733 = vld [vmem:[%s5 + $0x1c] sm:$0xf]
    %v2734 = vld [vmem:[%s5 + $0x20] sm:$0xf]
    %v2735 = vld [vmem:[%s5 + $0x24] sm:$0xf]
    %v2736 = vld [vmem:[%s5 + $0x28] sm:$0xf]
    %v2737 = vld [vmem:[%s5 + $0x2c] sm:$0xf]
    %v2738 = vld [vmem:[%s5 + $0x30] sm:$0xf]
    %v2739 = vld [vmem:[%s5 + $0x34] sm:$0xf]
    %v2740 = vld [vmem:[%s5 + $0x38] sm:$0xf]
    %v2741 = vld [vmem:[%s5 + $0x3c] sm:$0xf]
    %v2744 = vunpack.c.l.b16 %v2723
    %v2745 = vunpack.c.l.b16 %v2724
    %v2746 = vrot.slane %v2745, 7
    %vm2747 = vcmask 1041409
    %v2748 = vsel %vm2747, %v2746, %v2744
    %v2749 = vpack.c.b16 %v2748, %v2748
    %v2767 = vunpack.c.l.b16 %v2726
    %v2768 = vunpack.c.l.b16 %v2727
    %v2769 = vunpack.c.l.b16 %v2728
    %v2770 = vunpack.c.l.b16 %v2729
    %v2771 = vunpack.c.l.b16 %v2730
    %v2772 = vunpack.c.l.b16 %v2731
    %v2773 = vunpack.c.l.b16 %v2732
    %v2774 = vunpack.c.l.b16 %v2733
    %v2775 = vunpack.c.l.b16 %v2734
    %v2776 = vunpack.c.l.b16 %v2735
    %v2777 = vunpack.c.l.b16 %v2736
    %v2778 = vunpack.c.l.b16 %v2737
    %v2779 = vunpack.c.l.b16 %v2738
    %v2780 = vunpack.c.l.b16 %v2739
    %v2781 = vunpack.c.l.b16 %v2740
    %v2782 = vunpack.c.l.b16 %v2741
    %v2783 = vpack.c.b16 %v2768, %v2767
    %v2784 = vpack.c.b16 %v2770, %v2769
    %v2785 = vpack.c.b16 %v2772, %v2771
    %v2786 = vpack.c.b16 %v2774, %v2773
    %v2787 = vpack.c.b16 %v2776, %v2775
    %v2788 = vpack.c.b16 %v2778, %v2777
    %v2789 = vpack.c.b16 %v2780, %v2779
    %v2790 = vpack.c.b16 %v2782, %v2781
    %2799 = vmatprep.subr.bf16.mxu0 0
    %2800 = vmatpush1.bf16.msra.mxu0 %v2783
    %2801 = vmatprep.subr.bf16.mxu0 0
    %2802 = vmatpush1.bf16.msra.mxu0 %v2784
    %2803 = vmatprep.subr.bf16.mxu0 0
    %2804 = vmatpush1.bf16.msra.mxu0 %v2785
    %2805 = vmatprep.subr.bf16.mxu0 0
    %2806 = vmatpush1.bf16.msra.mxu0 %v2786
    %2807 = vmatprep.subr.bf16.mxu0 0
    %2808 = vmatpush1.bf16.msra.mxu0 %v2787
    %2809 = vmatprep.subr.bf16.mxu0 0
    %2810 = vmatpush1.bf16.msra.mxu0 %v2788
    %2811 = vmatprep.subr.bf16.mxu0 0
    %2812 = vmatpush1.bf16.msra.mxu0 %v2789
    %2813 = vmatprep.subr.bf16.mxu0 0
    %2814 = vmatpush1.bf16.msra.mxu0 %v2790
    %2815 = vmatprep.subr.bf16.mxu0 0
    %2816 = vmatpush1.bf16.msra.mxu0 0
    %2817 = vmatprep.subr.bf16.mxu0 0
    %2818 = vmatpush1.bf16.msra.mxu0 0
    %2819 = vmatprep.subr.bf16.mxu0 0
    %2820 = vmatpush1.bf16.msra.mxu0 0
    %2821 = vmatprep.subr.bf16.mxu0 0
    %2822 = vmatpush1.bf16.msra.mxu0 0
    %2823 = vmatprep.subr.bf16.mxu0 0
    %2824 = vmatpush1.bf16.msra.mxu0 0
    %2825 = vmatprep.subr.bf16.mxu0 0
    %2826 = vmatpush1.bf16.msra.mxu0 0
    %2827 = vmatprep.subr.bf16.mxu0 0
    %2828 = vmatpush1.bf16.msra.mxu0 0
    %2829 = vmatprep.subr.bf16.mxu0 0
    %2830 = vmatpush1.bf16.msra.mxu0 0
    %2831 = vmatprep.mubr.bf16.mxu0 0
    %2832 = vmatmul.mubr.bf16.gmra.mrb[0].mxu0 %v2749
    %v2833 = vpop.f32.mrb[0].mxu0
    %v2834 = vadd.f32 0.0, %v2833
    %v2835 = vpop.f32.mrb[0].mxu0
    %v2836 = vpop.f32.mrb[0].mxu0
    %v2837 = vpop.f32.mrb[0].mxu0
    %2838 = vdwg.mxu0
    %v2839 = vlaneseq
    %v2840 = vshrl.u32 %v2839, 7
    %v2841 = vsub.s32 0, %v2840
    %v2842 = vrot.slane %v2725, %v2841
    %v2843 = vadd.f32 %v2842, %v2834
    %s2844 = scalar_lea.vmem %s5, 64
    %v2845 = vld [vmem:[%s2844] sm:$0xf]
    %v2846 = vld [vmem:[%s2844 + $0x4] sm:$0xf]
    %v2847 = vld [vmem:[%s2844 + $0x8] sm:$0xf]
    %v2848 = vld [vmem:[%s2844 + $0xc] sm:$0xf]
    %v2849 = vld [vmem:[%s2844 + $0x10] sm:$0xf]
    %v2850 = vld [vmem:[%s2844 + $0x14] sm:$0xf]
    %v2851 = vld [vmem:[%s2844 + $0x18] sm:$0xf]
    %v2852 = vld [vmem:[%s2844 + $0x1c] sm:$0xf]
    %v2853 = vld [vmem:[%s2844 + $0x20] sm:$0xf]
    %v2854 = vld [vmem:[%s2844 + $0x24] sm:$0xf]
    %v2855 = vld [vmem:[%s2844 + $0x28] sm:$0xf]
    %v2856 = vld [vmem:[%s2844 + $0x2c] sm:$0xf]
    %v2857 = vld [vmem:[%s2844 + $0x30] sm:$0xf]
    %v2858 = vld [vmem:[%s2844 + $0x34] sm:$0xf]
    %v2859 = vld [vmem:[%s2844 + $0x38] sm:$0xf]
    %v2860 = vld [vmem:[%s2844 + $0x3c] sm:$0xf]
    %v2861 = vrot.slane %v2744, 1
    %v2862 = vsel %vm2747, %v2745, %v2861
    %v2863 = vpack.c.b16 %v2862, %v2862
    %v2881 = vunpack.c.l.b16 %v2845
    %v2882 = vunpack.c.l.b16 %v2846
    %v2883 = vunpack.c.l.b16 %v2847
    %v2884 = vunpack.c.l.b16 %v2848
    %v2885 = vunpack.c.l.b16 %v2849
    %v2886 = vunpack.c.l.b16 %v2850
    %v2887 = vunpack.c.l.b16 %v2851
    %v2888 = vunpack.c.l.b16 %v2852
    %v2889 = vunpack.c.l.b16 %v2853
    %v2890 = vunpack.c.l.b16 %v2854
    %v2891 = vunpack.c.l.b16 %v2855
    %v2892 = vunpack.c.l.b16 %v2856
    %v2893 = vunpack.c.l.b16 %v2857
    %v2894 = vunpack.c.l.b16 %v2858
    %v2895 = vunpack.c.l.b16 %v2859
    %v2896 = vunpack.c.l.b16 %v2860
    %v2897 = vpack.c.b16 %v2882, %v2881
    %v2898 = vpack.c.b16 %v2884, %v2883
    %v2899 = vpack.c.b16 %v2886, %v2885
    %v2900 = vpack.c.b16 %v2888, %v2887
    %v2901 = vpack.c.b16 %v2890, %v2889
    %v2902 = vpack.c.b16 %v2892, %v2891
    %v2903 = vpack.c.b16 %v2894, %v2893
    %v2904 = vpack.c.b16 %v2896, %v2895
    %2913 = vmatprep.subr.bf16.mxu0 0
    %2914 = vmatpush1.bf16.msra.mxu0 %v2897
    %2915 = vmatprep.subr.bf16.mxu0 0
    %2916 = vmatpush1.bf16.msra.mxu0 %v2898
    %2917 = vmatprep.subr.bf16.mxu0 0
    %2918 = vmatpush1.bf16.msra.mxu0 %v2899
    %2919 = vmatprep.subr.bf16.mxu0 0
    %2920 = vmatpush1.bf16.msra.mxu0 %v2900
    %2921 = vmatprep.subr.bf16.mxu0 0
    %2922 = vmatpush1.bf16.msra.mxu0 %v2901
    %2923 = vmatprep.subr.bf16.mxu0 0
    %2924 = vmatpush1.bf16.msra.mxu0 %v2902
    %2925 = vmatprep.subr.bf16.mxu0 0
    %2926 = vmatpush1.bf16.msra.mxu0 %v2903
    %2927 = vmatprep.subr.bf16.mxu0 0
    %2928 = vmatpush1.bf16.msra.mxu0 %v2904
    %2929 = vmatprep.subr.bf16.mxu0 0
    %2930 = vmatpush1.bf16.msra.mxu0 0
    %2931 = vmatprep.subr.bf16.mxu0 0
    %2932 = vmatpush1.bf16.msra.mxu0 0
    %2933 = vmatprep.subr.bf16.mxu0 0
    %2934 = vmatpush1.bf16.msra.mxu0 0
    %2935 = vmatprep.subr.bf16.mxu0 0
    %2936 = vmatpush1.bf16.msra.mxu0 0
    %2937 = vmatprep.subr.bf16.mxu0 0
    %2938 = vmatpush1.bf16.msra.mxu0 0
    %2939 = vmatprep.subr.bf16.mxu0 0
    %2940 = vmatpush1.bf16.msra.mxu0 0
    %2941 = vmatprep.subr.bf16.mxu0 0
    %2942 = vmatpush1.bf16.msra.mxu0 0
    %2943 = vmatprep.subr.bf16.mxu0 0
    %2944 = vmatpush1.bf16.msra.mxu0 0
    %2945 = vmatprep.mubr.bf16.mxu0 0
    %2946 = vmatmul.mubr.bf16.gmra.mrb[0].mxu0 %v2863
    %v2947 = vpop.f32.mrb[0].mxu0
    %v2948 = vadd.f32 0.0, %v2947
    %v2949 = vpop.f32.mrb[0].mxu0
    %v2950 = vpop.f32.mrb[0].mxu0
    %v2951 = vpop.f32.mrb[0].mxu0
    %2952 = vdwg.mxu0
    %v2953 = vadd.f32 %v2843, %v2948
    %s2954 = scalar_lea.vmem %s5, 128
    %v2955 = vld [vmem:[%s2954] sm:$0xf]
    %v2956 = vld [vmem:[%s2954 + $0x4] sm:$0xf]
    %v2957 = vld [vmem:[%s2954 + $0x8] sm:$0xf]
    %v2958 = vld [vmem:[%s2954 + $0xc] sm:$0xf]
    %v2959 = vld [vmem:[%s2954 + $0x10] sm:$0xf]
    %v2960 = vld [vmem:[%s2954 + $0x14] sm:$0xf]
    %v2961 = vld [vmem:[%s2954 + $0x18] sm:$0xf]
    %v2962 = vld [vmem:[%s2954 + $0x1c] sm:$0xf]
    %v2963 = vld [vmem:[%s2954 + $0x20] sm:$0xf]
    %v2964 = vld [vmem:[%s2954 + $0x24] sm:$0xf]
    %v2965 = vld [vmem:[%s2954 + $0x28] sm:$0xf]
    %v2966 = vld [vmem:[%s2954 + $0x2c] sm:$0xf]
    %v2967 = vld [vmem:[%s2954 + $0x30] sm:$0xf]
    %v2968 = vld [vmem:[%s2954 + $0x34] sm:$0xf]
    %v2969 = vld [vmem:[%s2954 + $0x38] sm:$0xf]
    %v2970 = vld [vmem:[%s2954 + $0x3c] sm:$0xf]
    %v2971 = vrot.slane %v2744, 2
    %v2972 = vrot.slane %v2745, 1
    %v2973 = vsel %vm2747, %v2972, %v2971
    %v2974 = vpack.c.b16 %v2973, %v2973
    %v2992 = vunpack.c.l.b16 %v2955
    %v2993 = vunpack.c.l.b16 %v2956
    %v2994 = vunpack.c.l.b16 %v2957
    %v2995 = vunpack.c.l.b16 %v2958
    %v2996 = vunpack.c.l.b16 %v2959
    %v2997 = vunpack.c.l.b16 %v2960
    %v2998 = vunpack.c.l.b16 %v2961
    %v2999 = vunpack.c.l.b16 %v2962
    %v3000 = vunpack.c.l.b16 %v2963
    %v3001 = vunpack.c.l.b16 %v2964
    %v3002 = vunpack.c.l.b16 %v2965
    %v3003 = vunpack.c.l.b16 %v2966
    %v3004 = vunpack.c.l.b16 %v2967
    %v3005 = vunpack.c.l.b16 %v2968
    %v3006 = vunpack.c.l.b16 %v2969
    %v3007 = vunpack.c.l.b16 %v2970
    %v3008 = vpack.c.b16 %v2993, %v2992
    %v3009 = vpack.c.b16 %v2995, %v2994
    %v3010 = vpack.c.b16 %v2997, %v2996
    %v3011 = vpack.c.b16 %v2999, %v2998
    %v3012 = vpack.c.b16 %v3001, %v3000
    %v3013 = vpack.c.b16 %v3003, %v3002
    %v3014 = vpack.c.b16 %v3005, %v3004
    %v3015 = vpack.c.b16 %v3007, %v3006
    %3024 = vmatprep.subr.bf16.mxu0 0
    %3025 = vmatpush1.bf16.msra.mxu0 %v3008
    %3026 = vmatprep.subr.bf16.mxu0 0
    %3027 = vmatpush1.bf16.msra.mxu0 %v3009
    %3028 = vmatprep.subr.bf16.mxu0 0
    %3029 = vmatpush1.bf16.msra.mxu0 %v3010
    %3030 = vmatprep.subr.bf16.mxu0 0
    %3031 = vmatpush1.bf16.msra.mxu0 %v3011
    %3032 = vmatprep.subr.bf16.mxu0 0
    %3033 = vmatpush1.bf16.msra.mxu0 %v3012
    %3034 = vmatprep.subr.bf16.mxu0 0
    %3035 = vmatpush1.bf16.msra.mxu0 %v3013
    %3036 = vmatprep.subr.bf16.mxu0 0
    %3037 = vmatpush1.bf16.msra.mxu0 %v3014
    %3038 = vmatprep.subr.bf16.mxu0 0
    %3039 = vmatpush1.bf16.msra.mxu0 %v3015
    %3040 = vmatprep.subr.bf16.mxu0 0
    %3041 = vmatpush1.bf16.msra.mxu0 0
    %3042 = vmatprep.subr.bf16.mxu0 0
    %3043 = vmatpush1.bf16.msra.mxu0 0
    %3044 = vmatprep.subr.bf16.mxu0 0
    %3045 = vmatpush1.bf16.msra.mxu0 0
    %3046 = vmatprep.subr.bf16.mxu0 0
    %3047 = vmatpush1.bf16.msra.mxu0 0
    %3048 = vmatprep.subr.bf16.mxu0 0
    %3049 = vmatpush1.bf16.msra.mxu0 0
    %3050 = vmatprep.subr.bf16.mxu0 0
    %3051 = vmatpush1.bf16.msra.mxu0 0
    %3052 = vmatprep.subr.bf16.mxu0 0
    %3053 = vmatpush1.bf16.msra.mxu0 0
    %3054 = vmatprep.subr.bf16.mxu0 0
    %3055 = vmatpush1.bf16.msra.mxu0 0
    %3056 = vmatprep.mubr.bf16.mxu0 0
    %3057 = vmatmul.mubr.bf16.gmra.mrb[0].mxu0 %v2974
    %v3058 = vpop.f32.mrb[0].mxu0
    %v3059 = vadd.f32 0.0, %v3058
    %v3060 = vpop.f32.mrb[0].mxu0
    %v3061 = vpop.f32.mrb[0].mxu0
    %v3062 = vpop.f32.mrb[0].mxu0
    %3063 = vdwg.mxu0
    %v3064 = vadd.f32 %v2953, %v3059
    %s3065 = scalar_lea.vmem %s5, 192
    %v3066 = vld [vmem:[%s3065] sm:$0xf]
    %v3067 = vld [vmem:[%s3065 + $0x4] sm:$0xf]
    %v3068 = vld [vmem:[%s3065 + $0x8] sm:$0xf]
    %v3069 = vld [vmem:[%s3065 + $0xc] sm:$0xf]
    %v3070 = vld [vmem:[%s3065 + $0x10] sm:$0xf]
    %v3071 = vld [vmem:[%s3065 + $0x14] sm:$0xf]
    %v3072 = vld [vmem:[%s3065 + $0x18] sm:$0xf]
    %v3073 = vld [vmem:[%s3065 + $0x1c] sm:$0xf]
    %v3074 = vld [vmem:[%s3065 + $0x20] sm:$0xf]
    %v3075 = vld [vmem:[%s3065 + $0x24] sm:$0xf]
    %v3076 = vld [vmem:[%s3065 + $0x28] sm:$0xf]
    %v3077 = vld [vmem:[%s3065 + $0x2c] sm:$0xf]
    %v3078 = vld [vmem:[%s3065 + $0x30] sm:$0xf]
    %v3079 = vld [vmem:[%s3065 + $0x34] sm:$0xf]
    %v3080 = vld [vmem:[%s3065 + $0x38] sm:$0xf]
    %v3081 = vld [vmem:[%s3065 + $0x3c] sm:$0xf]
    %v3082 = vrot.slane %v2744, 3
    %v3083 = vrot.slane %v2745, 2
    %v3084 = vsel %vm2747, %v3083, %v3082
    %v3085 = vpack.c.b16 %v3084, %v3084
    %v3103 = vunpack.c.l.b16 %v3066
    %v3104 = vunpack.c.l.b16 %v3067
    %v3105 = vunpack.c.l.b16 %v3068
    %v3106 = vunpack.c.l.b16 %v3069
    %v3107 = vunpack.c.l.b16 %v3070
    %v3108 = vunpack.c.l.b16 %v3071
    %v3109 = vunpack.c.l.b16 %v3072
    %v3110 = vunpack.c.l.b16 %v3073
    %v3111 = vunpack.c.l.b16 %v3074
    %v3112 = vunpack.c.l.b16 %v3075
    %v3113 = vunpack.c.l.b16 %v3076
    %v3114 = vunpack.c.l.b16 %v3077
    %v3115 = vunpack.c.l.b16 %v3078
    %v3116 = vunpack.c.l.b16 %v3079
    %v3117 = vunpack.c.l.b16 %v3080
    %v3118 = vunpack.c.l.b16 %v3081
    %v3119 = vpack.c.b16 %v3104, %v3103
    %v3120 = vpack.c.b16 %v3106, %v3105
    %v3121 = vpack.c.b16 %v3108, %v3107
    %v3122 = vpack.c.b16 %v3110, %v3109
    %v3123 = vpack.c.b16 %v3112, %v3111
    %v3124 = vpack.c.b16 %v3114, %v3113
    %v3125 = vpack.c.b16 %v3116, %v3115
    %v3126 = vpack.c.b16 %v3118, %v3117
    %3135 = vmatprep.subr.bf16.mxu0 0
    %3136 = vmatpush1.bf16.msra.mxu0 %v3119
    %3137 = vmatprep.subr.bf16.mxu0 0
    %3138 = vmatpush1.bf16.msra.mxu0 %v3120
    %3139 = vmatprep.subr.bf16.mxu0 0
    %3140 = vmatpush1.bf16.msra.mxu0 %v3121
    %3141 = vmatprep.subr.bf16.mxu0 0
    %3142 = vmatpush1.bf16.msra.mxu0 %v3122
    %3143 = vmatprep.subr.bf16.mxu0 0
    %3144 = vmatpush1.bf16.msra.mxu0 %v3123
    %3145 = vmatprep.subr.bf16.mxu0 0
    %3146 = vmatpush1.bf16.msra.mxu0 %v3124
    %3147 = vmatprep.subr.bf16.mxu0 0
    %3148 = vmatpush1.bf16.msra.mxu0 %v3125
    %3149 = vmatprep.subr.bf16.mxu0 0
    %3150 = vmatpush1.bf16.msra.mxu0 %v3126
    %3151 = vmatprep.subr.bf16.mxu0 0
    %3152 = vmatpush1.bf16.msra.mxu0 0
    %3153 = vmatprep.subr.bf16.mxu0 0
    %3154 = vmatpush1.bf16.msra.mxu0 0
    %3155 = vmatprep.subr.bf16.mxu0 0
    %3156 = vmatpush1.bf16.msra.mxu0 0
    %3157 = vmatprep.subr.bf16.mxu0 0
    %3158 = vmatpush1.bf16.msra.mxu0 0
    %3159 = vmatprep.subr.bf16.mxu0 0
    %3160 = vmatpush1.bf16.msra.mxu0 0
    %3161 = vmatprep.subr.bf16.mxu0 0
    %3162 = vmatpush1.bf16.msra.mxu0 0
    %3163 = vmatprep.subr.bf16.mxu0 0
    %3164 = vmatpush1.bf16.msra.mxu0 0
    %3165 = vmatprep.subr.bf16.mxu0 0
    %3166 = vmatpush1.bf16.msra.mxu0 0
    %3167 = vmatprep.mubr.bf16.mxu0 0
    %3168 = vmatmul.mubr.bf16.gmra.mrb[0].mxu0 %v3085
    %v3169 = vpop.f32.mrb[0].mxu0
    %v3170 = vadd.f32 0.0, %v3169
    %v3171 = vpop.f32.mrb[0].mxu0
    %v3172 = vpop.f32.mrb[0].mxu0
    %v3173 = vpop.f32.mrb[0].mxu0
    %3174 = vdwg.mxu0
    %v3175 = vadd.f32 %v3064, %v3170
    %s3176 = scalar_lea.vmem %s5, 256
    %v3177 = vld [vmem:[%s3176] sm:$0xf]
    %v3178 = vld [vmem:[%s3176 + $0x4] sm:$0xf]
    %v3179 = vld [vmem:[%s3176 + $0x8] sm:$0xf]
    %v3180 = vld [vmem:[%s3176 + $0xc] sm:$0xf]
    %v3181 = vld [vmem:[%s3176 + $0x10] sm:$0xf]
    %v3182 = vld [vmem:[%s3176 + $0x14] sm:$0xf]
    %v3183 = vld [vmem:[%s3176 + $0x18] sm:$0xf]
    %v3184 = vld [vmem:[%s3176 + $0x1c] sm:$0xf]
    %v3185 = vld [vmem:[%s3176 + $0x20] sm:$0xf]
    %v3186 = vld [vmem:[%s3176 + $0x24] sm:$0xf]
    %v3187 = vld [vmem:[%s3176 + $0x28] sm:$0xf]
    %v3188 = vld [vmem:[%s3176 + $0x2c] sm:$0xf]
    %v3189 = vld [vmem:[%s3176 + $0x30] sm:$0xf]
    %v3190 = vld [vmem:[%s3176 + $0x34] sm:$0xf]
    %v3191 = vld [vmem:[%s3176 + $0x38] sm:$0xf]
    %v3192 = vld [vmem:[%s3176 + $0x3c] sm:$0xf]
    %v3193 = vrot.slane %v2744, 4
    %v3194 = vrot.slane %v2745, 3
    %v3195 = vsel %vm2747, %v3194, %v3193
    %v3196 = vpack.c.b16 %v3195, %v3195
    %v3214 = vunpack.c.l.b16 %v3177
    %v3215 = vunpack.c.l.b16 %v3178
    %v3216 = vunpack.c.l.b16 %v3179
    %v3217 = vunpack.c.l.b16 %v3180
    %v3218 = vunpack.c.l.b16 %v3181
    %v3219 = vunpack.c.l.b16 %v3182
    %v3220 = vunpack.c.l.b16 %v3183
    %v3221 = vunpack.c.l.b16 %v3184
    %v3222 = vunpack.c.l.b16 %v3185
    %v3223 = vunpack.c.l.b16 %v3186
    %v3224 = vunpack.c.l.b16 %v3187
    %v3225 = vunpack.c.l.b16 %v3188
    %v3226 = vunpack.c.l.b16 %v3189
    %v3227 = vunpack.c.l.b16 %v3190
    %v3228 = vunpack.c.l.b16 %v3191
    %v3229 = vunpack.c.l.b16 %v3192
    %v3230 = vpack.c.b16 %v3215, %v3214
    %v3231 = vpack.c.b16 %v3217, %v3216
    %v3232 = vpack.c.b16 %v3219, %v3218
    %v3233 = vpack.c.b16 %v3221, %v3220
    %v3234 = vpack.c.b16 %v3223, %v3222
    %v3235 = vpack.c.b16 %v3225, %v3224
    %v3236 = vpack.c.b16 %v3227, %v3226
    %v3237 = vpack.c.b16 %v3229, %v3228
    %3246 = vmatprep.subr.bf16.mxu0 0
    %3247 = vmatpush1.bf16.msra.mxu0 %v3230
    %3248 = vmatprep.subr.bf16.mxu0 0
    %3249 = vmatpush1.bf16.msra.mxu0 %v3231
    %3250 = vmatprep.subr.bf16.mxu0 0
    %3251 = vmatpush1.bf16.msra.mxu0 %v3232
    %3252 = vmatprep.subr.bf16.mxu0 0
    %3253 = vmatpush1.bf16.msra.mxu0 %v3233
    %3254 = vmatprep.subr.bf16.mxu0 0
    %3255 = vmatpush1.bf16.msra.mxu0 %v3234
    %3256 = vmatprep.subr.bf16.mxu0 0
    %3257 = vmatpush1.bf16.msra.mxu0 %v3235
    %3258 = vmatprep.subr.bf16.mxu0 0
    %3259 = vmatpush1.bf16.msra.mxu0 %v3236
    %3260 = vmatprep.subr.bf16.mxu0 0
    %3261 = vmatpush1.bf16.msra.mxu0 %v3237
    %3262 = vmatprep.subr.bf16.mxu0 0
    %3263 = vmatpush1.bf16.msra.mxu0 0
    %3264 = vmatprep.subr.bf16.mxu0 0
    %3265 = vmatpush1.bf16.msra.mxu0 0
    %3266 = vmatprep.subr.bf16.mxu0 0
    %3267 = vmatpush1.bf16.msra.mxu0 0
    %3268 = vmatprep.subr.bf16.mxu0 0
    %3269 = vmatpush1.bf16.msra.mxu0 0
    %3270 = vmatprep.subr.bf16.mxu0 0
    %3271 = vmatpush1.bf16.msra.mxu0 0
    %3272 = vmatprep.subr.bf16.mxu0 0
    %3273 = vmatpush1.bf16.msra.mxu0 0
    %3274 = vmatprep.subr.bf16.mxu0 0
    %3275 = vmatpush1.bf16.msra.mxu0 0
    %3276 = vmatprep.subr.bf16.mxu0 0
    %3277 = vmatpush1.bf16.msra.mxu0 0
    %3278 = vmatprep.mubr.bf16.mxu0 0
    %3279 = vmatmul.mubr.bf16.gmra.mrb[0].mxu0 %v3196
    %v3280 = vpop.f32.mrb[0].mxu0
    %v3281 = vadd.f32 0.0, %v3280
    %v3282 = vpop.f32.mrb[0].mxu0
    %v3283 = vpop.f32.mrb[0].mxu0
    %v3284 = vpop.f32.mrb[0].mxu0
    %3285 = vdwg.mxu0
    %v3286 = vadd.f32 %v3175, %v3281
    %v3287 = vmax.f32 %v3286, 0.0
    %3288 = vst [vmem:[#allocation2] sm:$0x3] %v3287
    // Predicated region
    $region26: #{time_sync_forward.1} parent=1 // pred_check
      _
    $region27: #{time_sync_forward.1} parent=1 // pred_check_branch
      %3290 = sbr.rel (0) target = $region29
    $region28: #{time_sync_forward.1} parent=1 // pred_region
      %s3292 = ssub.s32 32, 32
      %3293 = vsyncadd [#allocation3], %s3292
      %s3295 = sshll.u32 [#allocation2], 4
      %s3296 = int_to_ptr.vmem [resolvable:$true] %s3295
      %3298 = dma.vmem_to_hbm [thread:$0]  %s3296, 32, %s6, [#allocation3]
    $region29: #{time_sync_forward.1} parent=1 // pred_fallthru
      _
    // Predicated region
    $region30: #{time_sync_forward.1} parent=1 // pred_check
      _
    $region31: #{time_sync_forward.1} parent=1 // pred_check_branch
      %3300 = sbr.rel (0) target = $region33
    $region32: #{time_sync_forward.1} parent=1 // pred_region
      _
    $region33: #{time_sync_forward.1} parent=1 // pred_fallthru
      _
    // Predicated region
    $region34: #{time_sync_forward.1} parent=1 // pred_check
      _
    $region35: #{time_sync_forward.1} parent=1 // pred_check_branch
      %3302 = sbr.rel (0) target = $region37
    $region36: #{time_sync_forward.1} parent=1 // pred_region
      %3303 = dma.done [#allocation3], 32
    $region37: #{time_sync_forward.1} parent=1 // pred_fallthru
      _
    // Predicated region
    $region38: #{time_sync_forward.1} parent=1 // pred_check
      _
    $region39: #{time_sync_forward.1} parent=1 // pred_check_branch
      %3305 = sbr.rel (0) target = $region41
    $region40: #{time_sync_forward.1} parent=1 // pred_region
      _
    $region41: #{time_sync_forward.1} parent=1 // pred_fallthru
      _
    %3306 = vsyncpa [#allocation3], 1

</llo_original>
